<compile_context>
chip_gen: v5e
topology: v5e:2x2
jax: 0.10.0
libtpu: 0.0.40
codegen_flags: <defaults>
</compile_context>

<pallas_src>
import math

import jax
import jax.numpy as jnp
from jax.experimental import pallas as pl
from jax.experimental.pallas import tpu as pltpu


def _round_up(x, m):
    return ((x + m - 1) // m) * m


# ----------------------------- Pallas kernels -----------------------------

def _conv_pool_kernel(w_ref, b_ref, p_ref, o_ref):
    """Fused conv-as-GEMM + bias + ReLU + 2x2 max-pool, single MXU stream.

    w_ref: (Op, Kp)    bf16  packed conv weight (O padded to x16, K to x128)
    b_ref: (Op, 1)     f32   bias (broadcast along lanes)
    p_ref: (Kp, 4*Mp)  bf16  im2col patches of the 4 pool-window corners laid
                             side-by-side along lanes (each Mp is a x128)
    o_ref: (Op, Mp)    bf16  pooled activation, Mp = round_up(N*Hp*Wp, 128)
    """
    mp = o_ref.shape[1]
    # One continuous vmatmul stream over all 4 corners (weight stays resident).
    y = jnp.dot(w_ref[...], p_ref[...], preferred_element_type=jnp.float32)
    # 2x2 max-pool == elementwise max of the 4 lane-aligned corner slices
    # (static 128-multiple boundaries -> no relayout; VPU slot has slack).
    m = jnp.maximum(jnp.maximum(y[:, 0 * mp:1 * mp], y[:, 1 * mp:2 * mp]),
                    jnp.maximum(y[:, 2 * mp:3 * mp], y[:, 3 * mp:4 * mp]))
    # relu(max_c(y_c) + b) == max_c(relu(y_c + b)) since b is corner-invariant.
    o_ref[...] = jnp.maximum(m + b_ref[...], 0.0).astype(o_ref.dtype)


def _fc_chain_kernel(x_ref, w1_ref, b1_ref, w2_ref, b2_ref, w3_ref, b3_ref,
                     o_ref):
    """fc1 -> relu -> fc2 -> relu -> fc3 in one kernel; intermediates never
    leave vregs/VMEM.  All widths are zero-padded to 128 lanes."""
    h = jnp.dot(x_ref[...], w1_ref[...], preferred_element_type=jnp.float32)
    h = jnp.maximum(h + b1_ref[...], 0.0).astype(jnp.bfloat16)
    h = jnp.dot(h, w2_ref[...], preferred_element_type=jnp.float32)
    h = jnp.maximum(h + b2_ref[...], 0.0).astype(jnp.bfloat16)
    y = jnp.dot(h, w3_ref[...], preferred_element_type=jnp.float32)
    o_ref[...] = (y + b3_ref[...]).astype(o_ref.dtype)


_VMEM = pl.BlockSpec(memory_space=pltpu.MemorySpace.VMEM)


# ------------------------------- JAX glue ----------------------------------

def _build_pool_patches(act, k, k_pad, m_pad):
    """act: (C, N, H, W) -> (k_pad, 4*m_pad) bf16: the im2col patch matrices of
    the four 2x2 pool-window corners, concatenated along lanes.  Patch-row
    order is (c, di, dj), matching weight.reshape(O, C*k*k); rows >= C*k*k and
    lanes >= M inside each corner block are zero padding.

    # TODO(synk): patch extraction stays in (jit-fused) XLA glue; building it
    # in-kernel would need stride-2 lane gathers with no clean Mosaic lowering.
    """
    C, N, H, W = act.shape
    Ho, Wo = H - k + 1, W - k + 1
    Hp, Wp = Ho // 2, Wo // 2
    M = N * Hp * Wp
    corners = []
    for ci in range(2):
        for cj in range(2):
            rows = []
            for di in range(k):
                for dj in range(k):
                    rows.append(act[:, :,
                                    ci + di: ci + di + 2 * Hp: 2,
                                    cj + dj: cj + dj + 2 * Wp: 2])
            p = jnp.stack(rows, axis=1)            # (C, k*k, N, Hp, Wp)
            corners.append(p.reshape(C * k * k, M))
    p4 = jnp.stack(corners, axis=0)                # (4, C*k*k, M)
    p4 = jnp.pad(p4, ((0, 0), (0, k_pad - C * k * k), (0, m_pad - M)))
    p4 = jnp.transpose(p4, (1, 0, 2)).reshape(k_pad, 4 * m_pad)
    return p4.astype(jnp.bfloat16)


def conv_relu_pool(act, w_packed, b_packed, k):
    """act: (C, N, H, W) -> pooled (Op, N, Hp, Wp) bf16 (channel-major)."""
    C, N, H, W = act.shape
    Ho, Wo = H - k + 1, W - k + 1
    assert Ho % 2 == 0 and Wo % 2 == 0, "maxpool 2x2 needs even conv output"
    Hp, Wp = Ho // 2, Wo // 2
    Op, Kp = w_packed.shape
    M = N * Hp * Wp
    Mp = _round_up(M, 128)                         # lane-dense output
    patches = _build_pool_patches(act, k, Kp, Mp)  # (Kp, 4*Mp) bf16
    # TODO(synk): gridless on purpose -- at batch 8 the GEMMs are far below one
    # grid step's ~0.35us overhead.  If the batch grows, add a ("parallel",)
    # 1-D grid over 128-multiple blocks of Mp (megacore split on v7x,
    # BlockSpec double-buffering of the ~1.7 MB conv1 patch tensor on v5e).
    out = pl.pallas_call(
        _conv_pool_kernel,
        out_shape=jax.ShapeDtypeStruct((Op, Mp), jnp.bfloat16),
        in_specs=[_VMEM, _VMEM, _VMEM],
        out_specs=_VMEM,
    )(w_packed, b_packed, patches)
    return out[:, :M].reshape(Op, N, Hp, Wp)


def fc_chain(x, pp):
    """x: (R, 400) -> (R, 3) f32 via the fused fc1/fc2/fc3 kernel."""
    R, K = x.shape
    Rp = _round_up(R, 16)                          # bf16 packs 16 sublanes/vreg
    Kp = pp["fc1_w"].shape[0]                      # 512: lane-dense fc1 input
    xp = jnp.pad(x.astype(jnp.bfloat16), ((0, Rp - R), (0, Kp - K)))
    out = pl.pallas_call(
        _fc_chain_kernel,
        out_shape=jax.ShapeDtypeStruct((Rp, 128), jnp.float32),
        in_specs=[_VMEM] * 7,
        out_specs=_VMEM,
    )(xp, pp["fc1_w"], pp["fc1_b"], pp["fc2_w"], pp["fc2_b"],
      pp["fc3_w"], pp["fc3_b"])
    return out[:R, :3]


# ----------------------------- parameters ----------------------------------

def init_params(key):
    """PyTorch-shaped parameters, uniform +/- 1/sqrt(fan_in) like nn.Conv2d /
    nn.Linear defaults."""
    def u(k, shape, bound):
        return jax.random.uniform(k, shape, jnp.float32, -bound, bound)

    ks = jax.random.split(key, 10)
    p = {}
    b = 1.0 / math.sqrt(3 * 5 * 5)
    p["conv1_w"] = u(ks[0], (6, 3, 5, 5), b)
    p["conv1_b"] = u(ks[1], (6,), b)
    b = 1.0 / math.sqrt(6 * 5 * 5)
    p["conv2_w"] = u(ks[2], (166, 6, 5, 5), b)
    p["conv2_b"] = u(ks[3], (166,), b)
    b = 1.0 / math.sqrt(16 * 5 * 5)
    p["fc1_w"] = u(ks[4], (120, 16 * 5 * 5), b)
    p["fc1_b"] = u(ks[5], (120,), b)
    b = 1.0 / math.sqrt(120)
    p["fc2_w"] = u(ks[6], (84, 120), b)
    p["fc2_b"] = u(ks[7], (84,), b)
    b = 1.0 / math.sqrt(84)
    p["fc3_w"] = u(ks[8], (3, 84), b)
    p["fc3_b"] = u(ks[9], (3,), b)
    return p


def pack_params(p):
    """One-time packing to bf16-native tiles: sublane dims padded to x16, lane
    dims to x128; fc weights pre-transposed to (in, out); weights cast to bf16,
    biases kept f32.  All padding is zeros so the math is exact."""
    f32, bf16 = jnp.float32, jnp.bfloat16
    # conv1: (6,3,5,5) -> (16, 128) bf16; bias (16,1) f32.
    w = p["conv1_w"].reshape(6, 75)
    c1w = jnp.pad(w, ((0, 10), (0, 53))).astype(bf16)
    c1b = jnp.pad(p["conv1_b"], (0, 10)).reshape(16, 1).astype(f32)
    # conv2: input channels padded 6->8 (stage-1 output channels 6..7 are
    # identically zero) -> (176, 256) bf16; bias (176,1) f32.
    w = jnp.pad(p["conv2_w"], ((0, 0), (0, 2), (0, 0), (0, 0))).reshape(166, 200)
    c2w = jnp.pad(w, ((0, 10), (0, 56))).astype(bf16)
    c2b = jnp.pad(p["conv2_b"], (0, 10)).reshape(176, 1).astype(f32)

    def fc(wt, bias, k_pad, n_pad):
        w_t = wt.T                                   # (in, out)
        kin, nout = w_t.shape
        w_t = jnp.pad(w_t, ((0, k_pad - kin), (0, n_pad - nout))).astype(bf16)
        b_t = jnp.pad(bias, (0, n_pad - nout)).reshape(1, n_pad).astype(f32)
        return w_t, b_t

    f1w, f1b = fc(p["fc1_w"], p["fc1_b"], 512, 128)  # (512,128)
    f2w, f2b = fc(p["fc2_w"], p["fc2_b"], 128, 128)  # (128,128)
    f3w, f3b = fc(p["fc3_w"], p["fc3_b"], 128, 128)  # (128,128)
    return dict(conv1_w=c1w, conv1_b=c1b, conv2_w=c2w, conv2_b=c2b,
                fc1_w=f1w, fc1_b=f1b, fc2_w=f2w, fc2_b=f2b,
                fc3_w=f3w, fc3_b=f3b)


# ------------------------------- forward -----------------------------------

def forward(pp, x):
    N = x.shape[0]
    # x.view(-1, 16*5*5) on a (N,166,5,5) tensor only divides evenly if N%8==0.
    assert N % 8 == 0, "batch must be a multiple of 8 for view(-1, 400)"
    act = jnp.transpose(x, (1, 0, 2, 3))                       # (3, N, 32, 32)
    # pool(relu(conv1(x))) -> (16, N, 14, 14); channels 6..15 are exactly zero.
    act = conv_relu_pool(act, pp["conv1_w"], pp["conv1_b"], 5)
    # pool(relu(conv2(x))) -> (176, N, 5, 5); conv2 weight expects 8 in-chans.
    act = conv_relu_pool(act[:8], pp["conv2_w"], pp["conv2_b"], 5)
    # (PyTorch prints x.shape here; omitted to keep stdout clean.)
    # x.view(-1, 16*5*5): flatten in NCHW order into rows of 400.
    # TODO(synk): this small (C,N)->(N,C) transpose stays in jit-fused XLA
    # glue; folding it into the conv2 kernel would force a 25-wide (non-128)
    # output last dim and reintroduce the masked stores the padding removed.
    act = jnp.transpose(act[:166], (1, 0, 2, 3))               # (N, 166, 5, 5)
    flat = act.reshape(-1, 16 * 5 * 5)                         # (N*166*25/400, 400)
    return fc_chain(flat, pp)                                  # (., 3) f32


if __name__ == "__main__":
    key = jax.random.PRNGKey(0)
    pkey, xkey = jax.random.split(key)
    params = init_params(pkey)
    packed = pack_params(params)
    # batch=8 is the smallest batch for which the module's view(-1, 400) works.
    x = jax.random.normal(xkey, (8, 3, 32, 32), jnp.float32)
    fwd = jax.jit(forward)
    out = jax.block_until_ready(fwd(packed, x))
    assert out.shape == (83, 3) and out.dtype == jnp.float32
    assert bool(jnp.all(jnp.isfinite(out)))
    print("KERNEL_OK")
</pallas_src>

<mosaic_0001>
module attributes {stable_mosaic.version = 11 : i64} {
  func.func @_conv_pool_kernel(%arg0: memref<16x128xbf16, #tpu.memory_space<vmem>>, %arg1: memref<16x1xf32, #tpu.memory_space<vmem>>, %arg2: memref<128x6656xbf16, #tpu.memory_space<vmem>>, %arg3: memref<16x1664xbf16, #tpu.memory_space<vmem>>) attributes {dimension_semantics = [], scalar_prefetch = 0 : i64, scratch_operands = 0 : i64, tpu.core_type = #tpu.core_type<tc>} {
    %c0 = arith.constant 0 : index
    %c0_0 = arith.constant 0 : index
    %0 = vector.load %arg0[%c0, %c0_0] : memref<16x128xbf16, #tpu.memory_space<vmem>>, vector<16x128xbf16>
    %c0_1 = arith.constant 0 : index
    %c0_2 = arith.constant 0 : index
    %1 = vector.load %arg2[%c0_1, %c0_2] : memref<128x6656xbf16, #tpu.memory_space<vmem>>, vector<128x6656xbf16>
    %cst = arith.constant dense<0.000000e+00> : vector<16x6656xf32>
    %2 = tpu.matmul %0, %1, %cst {dimension_numbers = #tpu.dot_dimension_numbers<[1], [0], [0], [1], [0, 0, 1, 1], [], []>} : vector<16x128xbf16>, vector<128x6656xbf16>, vector<16x6656xf32> -> vector<16x6656xf32>
    %3 = vector.extract_strided_slice %2 {offsets = [0, 0], sizes = [16, 1664], strides = [1, 1]} : vector<16x6656xf32> to vector<16x1664xf32>
    %4 = vector.extract_strided_slice %2 {offsets = [0, 1664], sizes = [16, 1664], strides = [1, 1]} : vector<16x6656xf32> to vector<16x1664xf32>
    %5 = arith.maximumf %3, %4 : vector<16x1664xf32>
    %6 = vector.extract_strided_slice %2 {offsets = [0, 3328], sizes = [16, 1664], strides = [1, 1]} : vector<16x6656xf32> to vector<16x1664xf32>
    %7 = vector.extract_strided_slice %2 {offsets = [0, 4992], sizes = [16, 1664], strides = [1, 1]} : vector<16x6656xf32> to vector<16x1664xf32>
    %8 = arith.maximumf %6, %7 : vector<16x1664xf32>
    %9 = arith.maximumf %5, %8 : vector<16x1664xf32>
    %c0_3 = arith.constant 0 : index
    %c0_4 = arith.constant 0 : index
    %10 = vector.load %arg1[%c0_3, %c0_4] : memref<16x1xf32, #tpu.memory_space<vmem>>, vector<16x1xf32>
    %11 = vector.broadcast %10 : vector<16x1xf32> to vector<16x1664xf32>
    %12 = arith.addf %9, %11 : vector<16x1664xf32>
    %cst_5 = arith.constant 0.000000e+00 : f32
    %13 = vector.broadcast %cst_5 : f32 to vector<16x1664xf32>
    %14 = arith.maximumf %12, %13 : vector<16x1664xf32>
    %15 = arith.truncf %14 : vector<16x1664xf32> to vector<16x1664xbf16>
    %c0_6 = arith.constant 0 : index
    %c0_7 = arith.constant 0 : index
    %16 = vector.load %arg3[%c0_6, %c0_7] : memref<16x1664xbf16, #tpu.memory_space<vmem>>, vector<16x1664xbf16>
    tpu.vector_store %arg3[%c0_6, %c0_7], %15 {strides = array<i32>} : memref<16x1664xbf16, #tpu.memory_space<vmem>>, vector<16x1664xbf16>,
    return
  }
}

module attributes {stable_mosaic.version = 11 : i64} {
  func.func @_conv_pool_kernel(%arg0: memref<176x256xbf16, #tpu.memory_space<vmem>>, %arg1: memref<176x1xf32, #tpu.memory_space<vmem>>, %arg2: memref<256x1024xbf16, #tpu.memory_space<vmem>>, %arg3: memref<176x256xbf16, #tpu.memory_space<vmem>>) attributes {dimension_semantics = [], scalar_prefetch = 0 : i64, scratch_operands = 0 : i64, tpu.core_type = #tpu.core_type<tc>} {
    %c0 = arith.constant 0 : index
    %c0_0 = arith.constant 0 : index
    %0 = vector.load %arg0[%c0, %c0_0] : memref<176x256xbf16, #tpu.memory_space<vmem>>, vector<176x256xbf16>
    %c0_1 = arith.constant 0 : index
    %c0_2 = arith.constant 0 : index
    %1 = vector.load %arg2[%c0_1, %c0_2] : memref<256x1024xbf16, #tpu.memory_space<vmem>>, vector<256x1024xbf16>
    %cst = arith.constant dense<0.000000e+00> : vector<176x1024xf32>
    %2 = tpu.matmul %0, %1, %cst {dimension_numbers = #tpu.dot_dimension_numbers<[1], [0], [0], [1], [0, 0, 1, 1], [], []>} : vector<176x256xbf16>, vector<256x1024xbf16>, vector<176x1024xf32> -> vector<176x1024xf32>
    %3 = vector.extract_strided_slice %2 {offsets = [0, 0], sizes = [176, 256], strides = [1, 1]} : vector<176x1024xf32> to vector<176x256xf32>
    %4 = vector.extract_strided_slice %2 {offsets = [0, 256], sizes = [176, 256], strides = [1, 1]} : vector<176x1024xf32> to vector<176x256xf32>
    %5 = arith.maximumf %3, %4 : vector<176x256xf32>
    %6 = vector.extract_strided_slice %2 {offsets = [0, 512], sizes = [176, 256], strides = [1, 1]} : vector<176x1024xf32> to vector<176x256xf32>
    %7 = vector.extract_strided_slice %2 {offsets = [0, 768], sizes = [176, 256], strides = [1, 1]} : vector<176x1024xf32> to vector<176x256xf32>
    %8 = arith.maximumf %6, %7 : vector<176x256xf32>
    %9 = arith.maximumf %5, %8 : vector<176x256xf32>
    %c0_3 = arith.constant 0 : index
    %c0_4 = arith.constant 0 : index
    %10 = vector.load %arg1[%c0_3, %c0_4] : memref<176x1xf32, #tpu.memory_space<vmem>>, vector<176x1xf32>
    %11 = vector.broadcast %10 : vector<176x1xf32> to vector<176x256xf32>
    %12 = arith.addf %9, %11 : vector<176x256xf32>
    %cst_5 = arith.constant 0.000000e+00 : f32
    %13 = vector.broadcast %cst_5 : f32 to vector<176x256xf32>
    %14 = arith.maximumf %12, %13 : vector<176x256xf32>
    %15 = arith.truncf %14 : vector<176x256xf32> to vector<176x256xbf16>
    %c0_6 = arith.constant 0 : index
    %c0_7 = arith.constant 0 : index
    %16 = vector.load %arg3[%c0_6, %c0_7] : memref<176x256xbf16, #tpu.memory_space<vmem>>, vector<176x256xbf16>
    tpu.vector_store %arg3[%c0_6, %c0_7], %15 {strides = array<i32>} : memref<176x256xbf16, #tpu.memory_space<vmem>>, vector<176x256xbf16>,
    return
  }
}

module attributes {stable_mosaic.version = 11 : i64} {
  func.func @_fc_chain_kernel(%arg0: memref<96x512xbf16, #tpu.memory_space<vmem>>, %arg1: memref<512x128xbf16, #tpu.memory_space<vmem>>, %arg2: memref<1x128xf32, #tpu.memory_space<vmem>>, %arg3: memref<128x128xbf16, #tpu.memory_space<vmem>>, %arg4: memref<1x128xf32, #tpu.memory_space<vmem>>, %arg5: memref<128x128xbf16, #tpu.memory_space<vmem>>, %arg6: memref<1x128xf32, #tpu.memory_space<vmem>>, %arg7: memref<96x128xf32, #tpu.memory_space<vmem>>) attributes {dimension_semantics = [], scalar_prefetch = 0 : i64, scratch_operands = 0 : i64, tpu.core_type = #tpu.core_type<tc>} {
    %c0 = arith.constant 0 : index
    %c0_0 = arith.constant 0 : index
    %0 = vector.load %arg0[%c0, %c0_0] : memref<96x512xbf16, #tpu.memory_space<vmem>>, vector<96x512xbf16>
    %c0_1 = arith.constant 0 : index
    %c0_2 = arith.constant 0 : index
    %1 = vector.load %arg1[%c0_1, %c0_2] : memref<512x128xbf16, #tpu.memory_space<vmem>>, vector<512x128xbf16>
    %cst = arith.constant dense<0.000000e+00> : vector<96x128xf32>
    %2 = tpu.matmul %0, %1, %cst {dimension_numbers = #tpu.dot_dimension_numbers<[1], [0], [0], [1], [0, 0, 1, 1], [], []>} : vector<96x512xbf16>, vector<512x128xbf16>, vector<96x128xf32> -> vector<96x128xf32>
    %c0_3 = arith.constant 0 : index
    %c0_4 = arith.constant 0 : index
    %3 = vector.load %arg2[%c0_3, %c0_4] : memref<1x128xf32, #tpu.memory_space<vmem>>, vector<1x128xf32>
    %4 = vector.broadcast %3 : vector<1x128xf32> to vector<96x128xf32>
    %5 = arith.addf %2, %4 : vector<96x128xf32>
    %cst_5 = arith.constant 0.000000e+00 : f32
    %6 = vector.broadcast %cst_5 : f32 to vector<96x128xf32>
    %7 = arith.maximumf %5, %6 : vector<96x128xf32>
    %8 = arith.truncf %7 : vector<96x128xf32> to vector<96x128xbf16>
    %c0_6 = arith.constant 0 : index
    %c0_7 = arith.constant 0 : index
    %9 = vector.load %arg3[%c0_6, %c0_7] : memref<128x128xbf16, #tpu.memory_space<vmem>>, vector<128x128xbf16>
    %cst_8 = arith.constant dense<0.000000e+00> : vector<96x128xf32>
    %10 = tpu.matmul %8, %9, %cst_8 {dimension_numbers = #tpu.dot_dimension_numbers<[1], [0], [0], [1], [0, 0, 1, 1], [], []>} : vector<96x128xbf16>, vector<128x128xbf16>, vector<96x128xf32> -> vector<96x128xf32>
    %c0_9 = arith.constant 0 : index
    %c0_10 = arith.constant 0 : index
    %11 = vector.load %arg4[%c0_9, %c0_10] : memref<1x128xf32, #tpu.memory_space<vmem>>, vector<1x128xf32>
    %12 = vector.broadcast %11 : vector<1x128xf32> to vector<96x128xf32>
    %13 = arith.addf %10, %12 : vector<96x128xf32>
    %cst_11 = arith.constant 0.000000e+00 : f32
    %14 = vector.broadcast %cst_11 : f32 to vector<96x128xf32>
    %15 = arith.maximumf %13, %14 : vector<96x128xf32>
    %16 = arith.truncf %15 : vector<96x128xf32> to vector<96x128xbf16>
    %c0_12 = arith.constant 0 : index
    %c0_13 = arith.constant 0 : index
    %17 = vector.load %arg5[%c0_12, %c0_13] : memref<128x128xbf16, #tpu.memory_space<vmem>>, vector<128x128xbf16>
    %cst_14 = arith.constant dense<0.000000e+00> : vector<96x128xf32>
    %18 = tpu.matmul %16, %17, %cst_14 {dimension_numbers = #tpu.dot_dimension_numbers<[1], [0], [0], [1], [0, 0, 1, 1], [], []>} : vector<96x128xbf16>, vector<128x128xbf16>, vector<96x128xf32> -> vector<96x128xf32>
    %c0_15 = arith.constant 0 : index
    %c0_16 = arith.constant 0 : index
    %19 = vector.load %arg6[%c0_15, %c0_16] : memref<1x128xf32, #tpu.memory_space<vmem>>, vector<1x128xf32>
    %20 = vector.broadcast %19 : vector<1x128xf32> to vector<96x128xf32>
    %21 = arith.addf %18, %20 : vector<96x128xf32>
    %c0_17 = arith.constant 0 : index
    %c0_18 = arith.constant 0 : index
    %22 = vector.load %arg7[%c0_17, %c0_18] : memref<96x128xf32, #tpu.memory_space<vmem>>, vector<96x128xf32>
    tpu.vector_store %arg7[%c0_17, %c0_18], %21 {strides = array<i32>} : memref<96x128xf32, #tpu.memory_space<vmem>>, vector<96x128xf32>,
    return
  }
}

</mosaic_0001>

<llo_original>
// kernel: forward.3
$region0: #{forward.3}
  #allocation0 [shape = 'u32[]', space=smem, size = 0x4, offset = 0x4, fixed_abs, tag = 'smem constant byte address 0x4 - core index']
  #allocation1 [shape = 'u32[72,128]{1,0:T(1,128)}', space=vmem, size = 0x9000, scoped, tag = 'internal scratch']
  %s0 = inlined_call_operand.vmem [shape: bf16[16,128], index: 0, kind: input, shape index: {}]
  %s1 = inlined_call_operand.vmem [shape: f32[16,1], index: 1, kind: input, shape index: {}]
  %s2 = inlined_call_operand.vmem [shape: bf16[128,6656], index: 2, kind: input, shape index: {}]
  %s3 = inlined_call_operand.vmem [shape: bf16[16,1664], index: 3, kind: output, shape index: {}]
  %s4 = sld [smem:[#allocation0]]
  $region22: #{forward.3} parent=0
    _
  %s6 = ssub.s32 1, %s4
  %s7 = scalar_select 0, %s6, %s4
  // Predicated region
  $region2: #{forward.3} parent=0 // pred_check
    _
  $region3: #{forward.3} parent=0 // pred_check_branch
    %9 = sbr.rel (0) target = $region5
  $region4: #{forward.3} parent=0 // pred_region
    _
  $region5: #{forward.3} parent=0 // pred_fallthru
    _
  // Predicated region
  $region6: #{forward.3} parent=0 // pred_check
    _
  $region7: #{forward.3} parent=0 // pred_check_branch
    %11 = sbr.rel (0) target = $region9
  $region8: #{forward.3} parent=0 // pred_region
    _
  $region9: #{forward.3} parent=0 // pred_fallthru
    _
  // Predicated region
  $region10: #{forward.3} parent=0 // pred_check
    _
  $region11: #{forward.3} parent=0 // pred_check_branch
    %13 = sbr.rel (0) target = $region13
  $region12: #{forward.3} parent=0 // pred_region
    _
  $region13: #{forward.3} parent=0 // pred_fallthru
    _
  %v14 = vld [vmem:[%s0] sm:$0xf]
  %v15 = vld [vmem:[%s0 + $0x4] sm:$0xf]
  %v16 = vld [vmem:[%s2] sm:$0xff]
  %v17 = vld [vmem:[%s2 + $0x8] sm:$0xff]
  %v18 = vld [vmem:[%s2 + $0x10] sm:$0xff]
  %v19 = vld [vmem:[%s2 + $0x18] sm:$0xff]
  %v20 = vld [vmem:[%s2 + $0x20] sm:$0xff]
  %v21 = vld [vmem:[%s2 + $0x28] sm:$0xff]
  %v22 = vld [vmem:[%s2 + $0x30] sm:$0xff]
  %v23 = vld [vmem:[%s2 + $0x38] sm:$0xff]
  %v24 = vld [vmem:[%s2 + $0x40] sm:$0xff]
  %v25 = vld [vmem:[%s2 + $0x48] sm:$0xff]
  %v26 = vld [vmem:[%s2 + $0x50] sm:$0xff]
  %v27 = vld [vmem:[%s2 + $0x58] sm:$0xff]
  %v28 = vld [vmem:[%s2 + $0x60] sm:$0xff]
  %v29 = vld [vmem:[%s2 + $0x68] sm:$0xff]
  %v30 = vld [vmem:[%s2 + $0x70] sm:$0xff]
  %v31 = vld [vmem:[%s2 + $0x78] sm:$0xff]
  %v32 = vld [vmem:[%s2 + $0x80] sm:$0xff]
  %v33 = vld [vmem:[%s2 + $0x88] sm:$0xff]
  %v34 = vld [vmem:[%s2 + $0x90] sm:$0xff]
  %v35 = vld [vmem:[%s2 + $0x98] sm:$0xff]
  %v36 = vld [vmem:[%s2 + $0xa0] sm:$0xff]
  %v37 = vld [vmem:[%s2 + $0xa8] sm:$0xff]
  %v38 = vld [vmem:[%s2 + $0xb0] sm:$0xff]
  %v39 = vld [vmem:[%s2 + $0xb8] sm:$0xff]
  %v40 = vld [vmem:[%s2 + $0xc0] sm:$0xff]
  %v41 = vld [vmem:[%s2 + $0xc8] sm:$0xff]
  %v42 = vld [vmem:[%s2 + $0xd0] sm:$0xff]
  %v43 = vld [vmem:[%s2 + $0xd8] sm:$0xff]
  %v44 = vld [vmem:[%s2 + $0xe0] sm:$0xff]
  %v45 = vld [vmem:[%s2 + $0xe8] sm:$0xff]
  %v46 = vld [vmem:[%s2 + $0xf0] sm:$0xff]
  %v47 = vld [vmem:[%s2 + $0xf8] sm:$0xff]
  %v48 = vld [vmem:[%s2 + $0x100] sm:$0xff]
  %v49 = vld [vmem:[%s2 + $0x108] sm:$0xff]
  %v50 = vld [vmem:[%s2 + $0x110] sm:$0xff]
  %v51 = vld [vmem:[%s2 + $0x118] sm:$0xff]
  %v52 = vld [vmem:[%s2 + $0x120] sm:$0xff]
  %v53 = vld [vmem:[%s2 + $0x128] sm:$0xff]
  %v54 = vld [vmem:[%s2 + $0x130] sm:$0xff]
  %v55 = vld [vmem:[%s2 + $0x138] sm:$0xff]
  %v56 = vld [vmem:[%s2 + $0x140] sm:$0xff]
  %v57 = vld [vmem:[%s2 + $0x148] sm:$0xff]
  %v58 = vld [vmem:[%s2 + $0x150] sm:$0xff]
  %v59 = vld [vmem:[%s2 + $0x158] sm:$0xff]
  %v60 = vld [vmem:[%s2 + $0x160] sm:$0xff]
  %v61 = vld [vmem:[%s2 + $0x168] sm:$0xff]
  %v62 = vld [vmem:[%s2 + $0x170] sm:$0xff]
  %v63 = vld [vmem:[%s2 + $0x178] sm:$0xff]
  %v64 = vld [vmem:[%s2 + $0x180] sm:$0xff]
  %v65 = vld [vmem:[%s2 + $0x188] sm:$0xff]
  %v66 = vld [vmem:[%s2 + $0x190] sm:$0xff]
  %v67 = vld [vmem:[%s2 + $0x198] sm:$0xff]
  %v68 = vld [vmem:[%s2 + $0x1a0] sm:$0xff]
  %v69 = vld [vmem:[%s2 + $0x1a8] sm:$0xff]
  %v70 = vld [vmem:[%s2 + $0x1b0] sm:$0xff]
  %v71 = vld [vmem:[%s2 + $0x1b8] sm:$0xff]
  %v72 = vld [vmem:[%s2 + $0x1c0] sm:$0xff]
  %v73 = vld [vmem:[%s2 + $0x1c8] sm:$0xff]
  %v74 = vld [vmem:[%s2 + $0x1d0] sm:$0xff]
  %v75 = vld [vmem:[%s2 + $0x1d8] sm:$0xff]
  %v76 = vld [vmem:[%s2 + $0x1e0] sm:$0xff]
  %v77 = vld [vmem:[%s2 + $0x1e8] sm:$0xff]
  %v78 = vld [vmem:[%s2 + $0x1f0] sm:$0xff]
  %v79 = vld [vmem:[%s2 + $0x1f8] sm:$0xff]
  %v80 = vld [vmem:[%s2 + $0x200] sm:$0xff]
  %v81 = vld [vmem:[%s2 + $0x208] sm:$0xff]
  %v82 = vld [vmem:[%s2 + $0x210] sm:$0xff]
  %v83 = vld [vmem:[%s2 + $0x218] sm:$0xff]
  %v84 = vld [vmem:[%s2 + $0x220] sm:$0xff]
  %v85 = vld [vmem:[%s2 + $0x228] sm:$0xff]
  %v86 = vld [vmem:[%s2 + $0x230] sm:$0xff]
  %v87 = vld [vmem:[%s2 + $0x238] sm:$0xff]
  %v88 = vld [vmem:[%s2 + $0x240] sm:$0xff]
  %v89 = vld [vmem:[%s2 + $0x248] sm:$0xff]
  %v90 = vld [vmem:[%s2 + $0x250] sm:$0xff]
  %v91 = vld [vmem:[%s2 + $0x258] sm:$0xff]
  %v92 = vld [vmem:[%s2 + $0x260] sm:$0xff]
  %v93 = vld [vmem:[%s2 + $0x268] sm:$0xff]
  %v94 = vld [vmem:[%s2 + $0x270] sm:$0xff]
  %v95 = vld [vmem:[%s2 + $0x278] sm:$0xff]
  %v96 = vld [vmem:[%s2 + $0x280] sm:$0xff]
  %v97 = vld [vmem:[%s2 + $0x288] sm:$0xff]
  %v98 = vld [vmem:[%s2 + $0x290] sm:$0xff]
  %v99 = vld [vmem:[%s2 + $0x298] sm:$0xff]
  %v100 = vld [vmem:[%s2 + $0x2a0] sm:$0xff]
  %v101 = vld [vmem:[%s2 + $0x2a8] sm:$0xff]
  %v102 = vld [vmem:[%s2 + $0x2b0] sm:$0xff]
  %v103 = vld [vmem:[%s2 + $0x2b8] sm:$0xff]
  %v104 = vld [vmem:[%s2 + $0x2c0] sm:$0xff]
  %v105 = vld [vmem:[%s2 + $0x2c8] sm:$0xff]
  %v106 = vld [vmem:[%s2 + $0x2d0] sm:$0xff]
  %v107 = vld [vmem:[%s2 + $0x2d8] sm:$0xff]
  %v108 = vld [vmem:[%s2 + $0x2e0] sm:$0xff]
  %v109 = vld [vmem:[%s2 + $0x2e8] sm:$0xff]
  %v110 = vld [vmem:[%s2 + $0x2f0] sm:$0xff]
  %v111 = vld [vmem:[%s2 + $0x2f8] sm:$0xff]
  %v112 = vld [vmem:[%s2 + $0x300] sm:$0xff]
  %v113 = vld [vmem:[%s2 + $0x308] sm:$0xff]
  %v114 = vld [vmem:[%s2 + $0x310] sm:$0xff]
  %v115 = vld [vmem:[%s2 + $0x318] sm:$0xff]
  %v116 = vld [vmem:[%s2 + $0x320] sm:$0xff]
  %v117 = vld [vmem:[%s2 + $0x328] sm:$0xff]
  %v118 = vld [vmem:[%s2 + $0x330] sm:$0xff]
  %v119 = vld [vmem:[%s2 + $0x338] sm:$0xff]
  %v120 = vld [vmem:[%s2 + $0x340] sm:$0xff]
  %v121 = vld [vmem:[%s2 + $0x348] sm:$0xff]
  %v122 = vld [vmem:[%s2 + $0x350] sm:$0xff]
  %v123 = vld [vmem:[%s2 + $0x358] sm:$0xff]
  %v124 = vld [vmem:[%s2 + $0x360] sm:$0xff]
  %v125 = vld [vmem:[%s2 + $0x368] sm:$0xff]
  %v126 = vld [vmem:[%s2 + $0x370] sm:$0xff]
  %v127 = vld [vmem:[%s2 + $0x378] sm:$0xff]
  %v128 = vld [vmem:[%s2 + $0x380] sm:$0xff]
  %v129 = vld [vmem:[%s2 + $0x388] sm:$0xff]
  %v130 = vld [vmem:[%s2 + $0x390] sm:$0xff]
  %v131 = vld [vmem:[%s2 + $0x398] sm:$0xff]
  %v132 = vld [vmem:[%s2 + $0x3a0] sm:$0xff]
  %v133 = vld [vmem:[%s2 + $0x3a8] sm:$0xff]
  %v134 = vld [vmem:[%s2 + $0x3b0] sm:$0xff]
  %v135 = vld [vmem:[%s2 + $0x3b8] sm:$0xff]
  %v136 = vld [vmem:[%s2 + $0x3c0] sm:$0xff]
  %v137 = vld [vmem:[%s2 + $0x3c8] sm:$0xff]
  %v138 = vld [vmem:[%s2 + $0x3d0] sm:$0xff]
  %v139 = vld [vmem:[%s2 + $0x3d8] sm:$0xff]
  %v140 = vld [vmem:[%s2 + $0x3e0] sm:$0xff]
  %v141 = vld [vmem:[%s2 + $0x3e8] sm:$0xff]
  %v142 = vld [vmem:[%s2 + $0x3f0] sm:$0xff]
  %v143 = vld [vmem:[%s2 + $0x3f8] sm:$0xff]
  %v144 = vld [vmem:[%s2 + $0x400] sm:$0xff]
  %v145 = vld [vmem:[%s2 + $0x408] sm:$0xff]
  %v146 = vld [vmem:[%s2 + $0x410] sm:$0xff]
  %v147 = vld [vmem:[%s2 + $0x418] sm:$0xff]
  %v148 = vld [vmem:[%s2 + $0x420] sm:$0xff]
  %v149 = vld [vmem:[%s2 + $0x428] sm:$0xff]
  %v150 = vld [vmem:[%s2 + $0x430] sm:$0xff]
  %v151 = vld [vmem:[%s2 + $0x438] sm:$0xff]
  %v152 = vld [vmem:[%s2 + $0x440] sm:$0xff]
  %v153 = vld [vmem:[%s2 + $0x448] sm:$0xff]
  %v154 = vld [vmem:[%s2 + $0x450] sm:$0xff]
  %v155 = vld [vmem:[%s2 + $0x458] sm:$0xff]
  %v156 = vld [vmem:[%s2 + $0x460] sm:$0xff]
  %v157 = vld [vmem:[%s2 + $0x468] sm:$0xff]
  %v158 = vld [vmem:[%s2 + $0x470] sm:$0xff]
  %v159 = vld [vmem:[%s2 + $0x478] sm:$0xff]
  %v160 = vld [vmem:[%s2 + $0x480] sm:$0xff]
  %v161 = vld [vmem:[%s2 + $0x488] sm:$0xff]
  %v162 = vld [vmem:[%s2 + $0x490] sm:$0xff]
  %v163 = vld [vmem:[%s2 + $0x498] sm:$0xff]
  %v164 = vld [vmem:[%s2 + $0x4a0] sm:$0xff]
  %v165 = vld [vmem:[%s2 + $0x4a8] sm:$0xff]
  %v166 = vld [vmem:[%s2 + $0x4b0] sm:$0xff]
  %v167 = vld [vmem:[%s2 + $0x4b8] sm:$0xff]
  %v168 = vld [vmem:[%s2 + $0x4c0] sm:$0xff]
  %v169 = vld [vmem:[%s2 + $0x4c8] sm:$0xff]
  %v170 = vld [vmem:[%s2 + $0x4d0] sm:$0xff]
  %v171 = vld [vmem:[%s2 + $0x4d8] sm:$0xff]
  %v172 = vld [vmem:[%s2 + $0x4e0] sm:$0xff]
  %v173 = vld [vmem:[%s2 + $0x4e8] sm:$0xff]
  %v174 = vld [vmem:[%s2 + $0x4f0] sm:$0xff]
  %v175 = vld [vmem:[%s2 + $0x4f8] sm:$0xff]
  %v176 = vld [vmem:[%s2 + $0x500] sm:$0xff]
  %v177 = vld [vmem:[%s2 + $0x508] sm:$0xff]
  %v178 = vld [vmem:[%s2 + $0x510] sm:$0xff]
  %v179 = vld [vmem:[%s2 + $0x518] sm:$0xff]
  %v180 = vld [vmem:[%s2 + $0x520] sm:$0xff]
  %v181 = vld [vmem:[%s2 + $0x528] sm:$0xff]
  %v182 = vld [vmem:[%s2 + $0x530] sm:$0xff]
  %v183 = vld [vmem:[%s2 + $0x538] sm:$0xff]
  %v184 = vld [vmem:[%s2 + $0x540] sm:$0xff]
  %v185 = vld [vmem:[%s2 + $0x548] sm:$0xff]
  %v186 = vld [vmem:[%s2 + $0x550] sm:$0xff]
  %v187 = vld [vmem:[%s2 + $0x558] sm:$0xff]
  %v188 = vld [vmem:[%s2 + $0x560] sm:$0xff]
  %v189 = vld [vmem:[%s2 + $0x568] sm:$0xff]
  %v190 = vld [vmem:[%s2 + $0x570] sm:$0xff]
  %v191 = vld [vmem:[%s2 + $0x578] sm:$0xff]
  %v192 = vld [vmem:[%s2 + $0x580] sm:$0xff]
  %v193 = vld [vmem:[%s2 + $0x588] sm:$0xff]
  %v194 = vld [vmem:[%s2 + $0x590] sm:$0xff]
  %v195 = vld [vmem:[%s2 + $0x598] sm:$0xff]
  %v196 = vld [vmem:[%s2 + $0x5a0] sm:$0xff]
  %v197 = vld [vmem:[%s2 + $0x5a8] sm:$0xff]
  %v198 = vld [vmem:[%s2 + $0x5b0] sm:$0xff]
  %v199 = vld [vmem:[%s2 + $0x5b8] sm:$0xff]
  %v200 = vld [vmem:[%s2 + $0x5c0] sm:$0xff]
  %v201 = vld [vmem:[%s2 + $0x5c8] sm:$0xff]
  %v202 = vld [vmem:[%s2 + $0x5d0] sm:$0xff]
  %v203 = vld [vmem:[%s2 + $0x5d8] sm:$0xff]
  %v204 = vld [vmem:[%s2 + $0x5e0] sm:$0xff]
  %v205 = vld [vmem:[%s2 + $0x5e8] sm:$0xff]
  %v206 = vld [vmem:[%s2 + $0x5f0] sm:$0xff]
  %v207 = vld [vmem:[%s2 + $0x5f8] sm:$0xff]
  %v208 = vld [vmem:[%s2 + $0x600] sm:$0xff]
  %v209 = vld [vmem:[%s2 + $0x608] sm:$0xff]
  %v210 = vld [vmem:[%s2 + $0x610] sm:$0xff]
  %v211 = vld [vmem:[%s2 + $0x618] sm:$0xff]
  %v212 = vld [vmem:[%s2 + $0x620] sm:$0xff]
  %v213 = vld [vmem:[%s2 + $0x628] sm:$0xff]
  %v214 = vld [vmem:[%s2 + $0x630] sm:$0xff]
  %v215 = vld [vmem:[%s2 + $0x638] sm:$0xff]
  %v216 = vld [vmem:[%s2 + $0x640] sm:$0xff]
  %v217 = vld [vmem:[%s2 + $0x648] sm:$0xff]
  %v218 = vld [vmem:[%s2 + $0x650] sm:$0xff]
  %v219 = vld [vmem:[%s2 + $0x658] sm:$0xff]
  %v220 = vld [vmem:[%s2 + $0x660] sm:$0xff]
  %v221 = vld [vmem:[%s2 + $0x668] sm:$0xff]
  %v222 = vld [vmem:[%s2 + $0x670] sm:$0xff]
  %v223 = vld [vmem:[%s2 + $0x678] sm:$0xff]
  %v224 = vld [vmem:[%s2 + $0x680] sm:$0xff]
  %v225 = vld [vmem:[%s2 + $0x688] sm:$0xff]
  %v226 = vld [vmem:[%s2 + $0x690] sm:$0xff]
  %v227 = vld [vmem:[%s2 + $0x698] sm:$0xff]
  %v228 = vld [vmem:[%s2 + $0x6a0] sm:$0xff]
  %v229 = vld [vmem:[%s2 + $0x6a8] sm:$0xff]
  %v230 = vld [vmem:[%s2 + $0x6b0] sm:$0xff]
  %v231 = vld [vmem:[%s2 + $0x6b8] sm:$0xff]
  %v232 = vld [vmem:[%s2 + $0x6c0] sm:$0xff]
  %v233 = vld [vmem:[%s2 + $0x6c8] sm:$0xff]
  %v234 = vld [vmem:[%s2 + $0x6d0] sm:$0xff]
  %v235 = vld [vmem:[%s2 + $0x6d8] sm:$0xff]
  %v236 = vld [vmem:[%s2 + $0x6e0] sm:$0xff]
  %v237 = vld [vmem:[%s2 + $0x6e8] sm:$0xff]
  %v238 = vld [vmem:[%s2 + $0x6f0] sm:$0xff]
  %v239 = vld [vmem:[%s2 + $0x6f8] sm:$0xff]
  %v240 = vld [vmem:[%s2 + $0x700] sm:$0xff]
  %v241 = vld [vmem:[%s2 + $0x708] sm:$0xff]
  %v242 = vld [vmem:[%s2 + $0x710] sm:$0xff]
  %v243 = vld [vmem:[%s2 + $0x718] sm:$0xff]
  %v244 = vld [vmem:[%s2 + $0x720] sm:$0xff]
  %v245 = vld [vmem:[%s2 + $0x728] sm:$0xff]
  %v246 = vld [vmem:[%s2 + $0x730] sm:$0xff]
  %v247 = vld [vmem:[%s2 + $0x738] sm:$0xff]
  %v248 = vld [vmem:[%s2 + $0x740] sm:$0xff]
  %v249 = vld [vmem:[%s2 + $0x748] sm:$0xff]
  %v250 = vld [vmem:[%s2 + $0x750] sm:$0xff]
  %v251 = vld [vmem:[%s2 + $0x758] sm:$0xff]
  %v252 = vld [vmem:[%s2 + $0x760] sm:$0xff]
  %v253 = vld [vmem:[%s2 + $0x768] sm:$0xff]
  %v254 = vld [vmem:[%s2 + $0x770] sm:$0xff]
  %v255 = vld [vmem:[%s2 + $0x778] sm:$0xff]
  %v256 = vld [vmem:[%s2 + $0x780] sm:$0xff]
  %v257 = vld [vmem:[%s2 + $0x788] sm:$0xff]
  %v258 = vld [vmem:[%s2 + $0x790] sm:$0xff]
  %v259 = vld [vmem:[%s2 + $0x798] sm:$0xff]
  %v260 = vld [vmem:[%s2 + $0x7a0] sm:$0xff]
  %v261 = vld [vmem:[%s2 + $0x7a8] sm:$0xff]
  %v262 = vld [vmem:[%s2 + $0x7b0] sm:$0xff]
  %v263 = vld [vmem:[%s2 + $0x7b8] sm:$0xff]
  %v264 = vld [vmem:[%s2 + $0x7c0] sm:$0xff]
  %v265 = vld [vmem:[%s2 + $0x7c8] sm:$0xff]
  %v266 = vld [vmem:[%s2 + $0x7d0] sm:$0xff]
  %v267 = vld [vmem:[%s2 + $0x7d8] sm:$0xff]
  %v268 = vld [vmem:[%s2 + $0x7e0] sm:$0xff]
  %v269 = vld [vmem:[%s2 + $0x7e8] sm:$0xff]
  %v270 = vld [vmem:[%s2 + $0x7f0] sm:$0xff]
  %v271 = vld [vmem:[%s2 + $0x7f8] sm:$0xff]
  %v272 = vld [vmem:[%s2 + $0x800] sm:$0xff]
  %v273 = vld [vmem:[%s2 + $0x808] sm:$0xff]
  %v274 = vld [vmem:[%s2 + $0x810] sm:$0xff]
  %v275 = vld [vmem:[%s2 + $0x818] sm:$0xff]
  %v276 = vld [vmem:[%s2 + $0x820] sm:$0xff]
  %v277 = vld [vmem:[%s2 + $0x828] sm:$0xff]
  %v278 = vld [vmem:[%s2 + $0x830] sm:$0xff]
  %v279 = vld [vmem:[%s2 + $0x838] sm:$0xff]
  %v280 = vld [vmem:[%s2 + $0x840] sm:$0xff]
  %v281 = vld [vmem:[%s2 + $0x848] sm:$0xff]
  %v282 = vld [vmem:[%s2 + $0x850] sm:$0xff]
  %v283 = vld [vmem:[%s2 + $0x858] sm:$0xff]
  %v284 = vld [vmem:[%s2 + $0x860] sm:$0xff]
  %v285 = vld [vmem:[%s2 + $0x868] sm:$0xff]
  %v286 = vld [vmem:[%s2 + $0x870] sm:$0xff]
  %v287 = vld [vmem:[%s2 + $0x878] sm:$0xff]
  %v288 = vld [vmem:[%s2 + $0x880] sm:$0xff]
  %v289 = vld [vmem:[%s2 + $0x888] sm:$0xff]
  %v290 = vld [vmem:[%s2 + $0x890] sm:$0xff]
  %v291 = vld [vmem:[%s2 + $0x898] sm:$0xff]
  %v292 = vld [vmem:[%s2 + $0x8a0] sm:$0xff]
  %v293 = vld [vmem:[%s2 + $0x8a8] sm:$0xff]
  %v294 = vld [vmem:[%s2 + $0x8b0] sm:$0xff]
  %v295 = vld [vmem:[%s2 + $0x8b8] sm:$0xff]
  %v296 = vld [vmem:[%s2 + $0x8c0] sm:$0xff]
  %v297 = vld [vmem:[%s2 + $0x8c8] sm:$0xff]
  %v298 = vld [vmem:[%s2 + $0x8d0] sm:$0xff]
  %v299 = vld [vmem:[%s2 + $0x8d8] sm:$0xff]
  %v300 = vld [vmem:[%s2 + $0x8e0] sm:$0xff]
  %v301 = vld [vmem:[%s2 + $0x8e8] sm:$0xff]
  %v302 = vld [vmem:[%s2 + $0x8f0] sm:$0xff]
  %v303 = vld [vmem:[%s2 + $0x8f8] sm:$0xff]
  %v304 = vld [vmem:[%s2 + $0x900] sm:$0xff]
  %v305 = vld [vmem:[%s2 + $0x908] sm:$0xff]
  %v306 = vld [vmem:[%s2 + $0x910] sm:$0xff]
  %v307 = vld [vmem:[%s2 + $0x918] sm:$0xff]
  %v308 = vld [vmem:[%s2 + $0x920] sm:$0xff]
  %v309 = vld [vmem:[%s2 + $0x928] sm:$0xff]
  %v310 = vld [vmem:[%s2 + $0x930] sm:$0xff]
  %v311 = vld [vmem:[%s2 + $0x938] sm:$0xff]
  %v312 = vld [vmem:[%s2 + $0x940] sm:$0xff]
  %v313 = vld [vmem:[%s2 + $0x948] sm:$0xff]
  %v314 = vld [vmem:[%s2 + $0x950] sm:$0xff]
  %v315 = vld [vmem:[%s2 + $0x958] sm:$0xff]
  %v316 = vld [vmem:[%s2 + $0x960] sm:$0xff]
  %v317 = vld [vmem:[%s2 + $0x968] sm:$0xff]
  %v318 = vld [vmem:[%s2 + $0x970] sm:$0xff]
  %v319 = vld [vmem:[%s2 + $0x978] sm:$0xff]
  %v320 = vld [vmem:[%s2 + $0x980] sm:$0xff]
  %v321 = vld [vmem:[%s2 + $0x988] sm:$0xff]
  %v322 = vld [vmem:[%s2 + $0x990] sm:$0xff]
  %v323 = vld [vmem:[%s2 + $0x998] sm:$0xff]
  %v324 = vld [vmem:[%s2 + $0x9a0] sm:$0xff]
  %v325 = vld [vmem:[%s2 + $0x9a8] sm:$0xff]
  %v326 = vld [vmem:[%s2 + $0x9b0] sm:$0xff]
  %v327 = vld [vmem:[%s2 + $0x9b8] sm:$0xff]
  %v328 = vld [vmem:[%s2 + $0x9c0] sm:$0xff]
  %v329 = vld [vmem:[%s2 + $0x9c8] sm:$0xff]
  %v330 = vld [vmem:[%s2 + $0x9d0] sm:$0xff]
  %v331 = vld [vmem:[%s2 + $0x9d8] sm:$0xff]
  %v332 = vld [vmem:[%s2 + $0x9e0] sm:$0xff]
  %v333 = vld [vmem:[%s2 + $0x9e8] sm:$0xff]
  %v334 = vld [vmem:[%s2 + $0x9f0] sm:$0xff]
  %v335 = vld [vmem:[%s2 + $0x9f8] sm:$0xff]
  %v336 = vld [vmem:[%s2 + $0xa00] sm:$0xff]
  %v337 = vld [vmem:[%s2 + $0xa08] sm:$0xff]
  %v338 = vld [vmem:[%s2 + $0xa10] sm:$0xff]
  %v339 = vld [vmem:[%s2 + $0xa18] sm:$0xff]
  %v340 = vld [vmem:[%s2 + $0xa20] sm:$0xff]
  %v341 = vld [vmem:[%s2 + $0xa28] sm:$0xff]
  %v342 = vld [vmem:[%s2 + $0xa30] sm:$0xff]
  %v343 = vld [vmem:[%s2 + $0xa38] sm:$0xff]
  %v344 = vld [vmem:[%s2 + $0xa40] sm:$0xff]
  %v345 = vld [vmem:[%s2 + $0xa48] sm:$0xff]
  %v346 = vld [vmem:[%s2 + $0xa50] sm:$0xff]
  %v347 = vld [vmem:[%s2 + $0xa58] sm:$0xff]
  %v348 = vld [vmem:[%s2 + $0xa60] sm:$0xff]
  %v349 = vld [vmem:[%s2 + $0xa68] sm:$0xff]
  %v350 = vld [vmem:[%s2 + $0xa70] sm:$0xff]
  %v351 = vld [vmem:[%s2 + $0xa78] sm:$0xff]
  %v352 = vld [vmem:[%s2 + $0xa80] sm:$0xff]
  %v353 = vld [vmem:[%s2 + $0xa88] sm:$0xff]
  %v354 = vld [vmem:[%s2 + $0xa90] sm:$0xff]
  %v355 = vld [vmem:[%s2 + $0xa98] sm:$0xff]
  %v356 = vld [vmem:[%s2 + $0xaa0] sm:$0xff]
  %v357 = vld [vmem:[%s2 + $0xaa8] sm:$0xff]
  %v358 = vld [vmem:[%s2 + $0xab0] sm:$0xff]
  %v359 = vld [vmem:[%s2 + $0xab8] sm:$0xff]
  %v360 = vld [vmem:[%s2 + $0xac0] sm:$0xff]
  %v361 = vld [vmem:[%s2 + $0xac8] sm:$0xff]
  %v362 = vld [vmem:[%s2 + $0xad0] sm:$0xff]
  %v363 = vld [vmem:[%s2 + $0xad8] sm:$0xff]
  %v364 = vld [vmem:[%s2 + $0xae0] sm:$0xff]
  %v365 = vld [vmem:[%s2 + $0xae8] sm:$0xff]
  %v366 = vld [vmem:[%s2 + $0xaf0] sm:$0xff]
  %v367 = vld [vmem:[%s2 + $0xaf8] sm:$0xff]
  %v368 = vld [vmem:[%s2 + $0xb00] sm:$0xff]
  %v369 = vld [vmem:[%s2 + $0xb08] sm:$0xff]
  %v370 = vld [vmem:[%s2 + $0xb10] sm:$0xff]
  %v371 = vld [vmem:[%s2 + $0xb18] sm:$0xff]
  %v372 = vld [vmem:[%s2 + $0xb20] sm:$0xff]
  %v373 = vld [vmem:[%s2 + $0xb28] sm:$0xff]
  %v374 = vld [vmem:[%s2 + $0xb30] sm:$0xff]
  %v375 = vld [vmem:[%s2 + $0xb38] sm:$0xff]
  %v376 = vld [vmem:[%s2 + $0xb40] sm:$0xff]
  %v377 = vld [vmem:[%s2 + $0xb48] sm:$0xff]
  %v378 = vld [vmem:[%s2 + $0xb50] sm:$0xff]
  %v379 = vld [vmem:[%s2 + $0xb58] sm:$0xff]
  %v380 = vld [vmem:[%s2 + $0xb60] sm:$0xff]
  %v381 = vld [vmem:[%s2 + $0xb68] sm:$0xff]
  %v382 = vld [vmem:[%s2 + $0xb70] sm:$0xff]
  %v383 = vld [vmem:[%s2 + $0xb78] sm:$0xff]
  %v384 = vld [vmem:[%s2 + $0xb80] sm:$0xff]
  %v385 = vld [vmem:[%s2 + $0xb88] sm:$0xff]
  %v386 = vld [vmem:[%s2 + $0xb90] sm:$0xff]
  %v387 = vld [vmem:[%s2 + $0xb98] sm:$0xff]
  %v388 = vld [vmem:[%s2 + $0xba0] sm:$0xff]
  %v389 = vld [vmem:[%s2 + $0xba8] sm:$0xff]
  %v390 = vld [vmem:[%s2 + $0xbb0] sm:$0xff]
  %v391 = vld [vmem:[%s2 + $0xbb8] sm:$0xff]
  %v392 = vld [vmem:[%s2 + $0xbc0] sm:$0xff]
  %v393 = vld [vmem:[%s2 + $0xbc8] sm:$0xff]
  %v394 = vld [vmem:[%s2 + $0xbd0] sm:$0xff]
  %v395 = vld [vmem:[%s2 + $0xbd8] sm:$0xff]
  %v396 = vld [vmem:[%s2 + $0xbe0] sm:$0xff]
  %v397 = vld [vmem:[%s2 + $0xbe8] sm:$0xff]
  %v398 = vld [vmem:[%s2 + $0xbf0] sm:$0xff]
  %v399 = vld [vmem:[%s2 + $0xbf8] sm:$0xff]
  %v400 = vld [vmem:[%s2 + $0xc00] sm:$0xff]
  %v401 = vld [vmem:[%s2 + $0xc08] sm:$0xff]
  %v402 = vld [vmem:[%s2 + $0xc10] sm:$0xff]
  %v403 = vld [vmem:[%s2 + $0xc18] sm:$0xff]
  %v404 = vld [vmem:[%s2 + $0xc20] sm:$0xff]
  %v405 = vld [vmem:[%s2 + $0xc28] sm:$0xff]
  %v406 = vld [vmem:[%s2 + $0xc30] sm:$0xff]
  %v407 = vld [vmem:[%s2 + $0xc38] sm:$0xff]
  %v408 = vld [vmem:[%s2 + $0xc40] sm:$0xff]
  %v409 = vld [vmem:[%s2 + $0xc48] sm:$0xff]
  %v410 = vld [vmem:[%s2 + $0xc50] sm:$0xff]
  %v411 = vld [vmem:[%s2 + $0xc58] sm:$0xff]
  %v412 = vld [vmem:[%s2 + $0xc60] sm:$0xff]
  %v413 = vld [vmem:[%s2 + $0xc68] sm:$0xff]
  %v414 = vld [vmem:[%s2 + $0xc70] sm:$0xff]
  %v415 = vld [vmem:[%s2 + $0xc78] sm:$0xff]
  %v416 = vld [vmem:[%s2 + $0xc80] sm:$0xff]
  %v417 = vld [vmem:[%s2 + $0xc88] sm:$0xff]
  %v418 = vld [vmem:[%s2 + $0xc90] sm:$0xff]
  %v419 = vld [vmem:[%s2 + $0xc98] sm:$0xff]
  %v420 = vld [vmem:[%s2 + $0xca0] sm:$0xff]
  %v421 = vld [vmem:[%s2 + $0xca8] sm:$0xff]
  %v422 = vld [vmem:[%s2 + $0xcb0] sm:$0xff]
  %v423 = vld [vmem:[%s2 + $0xcb8] sm:$0xff]
  %v424 = vld [vmem:[%s2 + $0xcc0] sm:$0xff]
  %v425 = vld [vmem:[%s2 + $0xcc8] sm:$0xff]
  %v426 = vld [vmem:[%s2 + $0xcd0] sm:$0xff]
  %v427 = vld [vmem:[%s2 + $0xcd8] sm:$0xff]
  %v428 = vld [vmem:[%s2 + $0xce0] sm:$0xff]
  %v429 = vld [vmem:[%s2 + $0xce8] sm:$0xff]
  %v430 = vld [vmem:[%s2 + $0xcf0] sm:$0xff]
  %v431 = vld [vmem:[%s2 + $0xcf8] sm:$0xff]
  %v434 = vunpack.c.l.b16 %v14
  %v435 = vunpack.c.l.b16 %v15
  %v436 = vpack.c.b16 %v435, %v434
  %v854 = vunpack.c.l.b16 %v16
  %v855 = vunpack.c.h.b16 %v16
  %v856 = vunpack.c.l.b16 %v17
  %v857 = vunpack.c.h.b16 %v17
  %v858 = vunpack.c.l.b16 %v18
  %v859 = vunpack.c.h.b16 %v18
  %v860 = vunpack.c.l.b16 %v19
  %v861 = vunpack.c.h.b16 %v19
  %v862 = vunpack.c.l.b16 %v20
  %v863 = vunpack.c.h.b16 %v20
  %v864 = vunpack.c.l.b16 %v21
  %v865 = vunpack.c.h.b16 %v21
  %v866 = vunpack.c.l.b16 %v22
  %v867 = vunpack.c.h.b16 %v22
  %v868 = vunpack.c.l.b16 %v23
  %v869 = vunpack.c.h.b16 %v23
  %v870 = vunpack.c.l.b16 %v24
  %v871 = vunpack.c.h.b16 %v24
  %v872 = vunpack.c.l.b16 %v25
  %v873 = vunpack.c.h.b16 %v25
  %v874 = vunpack.c.l.b16 %v26
  %v875 = vunpack.c.h.b16 %v26
  %v876 = vunpack.c.l.b16 %v27
  %v877 = vunpack.c.h.b16 %v27
  %v878 = vunpack.c.l.b16 %v28
  %v879 = vunpack.c.h.b16 %v28
  %v880 = vunpack.c.l.b16 %v29
  %v881 = vunpack.c.h.b16 %v29
  %v882 = vunpack.c.l.b16 %v30
  %v883 = vunpack.c.h.b16 %v30
  %v884 = vunpack.c.l.b16 %v31
  %v885 = vunpack.c.h.b16 %v31
  %v886 = vunpack.c.l.b16 %v32
  %v887 = vunpack.c.h.b16 %v32
  %v888 = vunpack.c.l.b16 %v33
  %v889 = vunpack.c.h.b16 %v33
  %v890 = vunpack.c.l.b16 %v34
  %v891 = vunpack.c.h.b16 %v34
  %v892 = vunpack.c.l.b16 %v35
  %v893 = vunpack.c.h.b16 %v35
  %v894 = vunpack.c.l.b16 %v36
  %v895 = vunpack.c.h.b16 %v36
  %v896 = vunpack.c.l.b16 %v37
  %v897 = vunpack.c.h.b16 %v37
  %v898 = vunpack.c.l.b16 %v38
  %v899 = vunpack.c.h.b16 %v38
  %v900 = vunpack.c.l.b16 %v39
  %v901 = vunpack.c.h.b16 %v39
  %v902 = vunpack.c.l.b16 %v40
  %v903 = vunpack.c.h.b16 %v40
  %v904 = vunpack.c.l.b16 %v41
  %v905 = vunpack.c.h.b16 %v41
  %v906 = vunpack.c.l.b16 %v42
  %v907 = vunpack.c.h.b16 %v42
  %v908 = vunpack.c.l.b16 %v43
  %v909 = vunpack.c.h.b16 %v43
  %v910 = vunpack.c.l.b16 %v44
  %v911 = vunpack.c.h.b16 %v44
  %v912 = vunpack.c.l.b16 %v45
  %v913 = vunpack.c.h.b16 %v45
  %v914 = vunpack.c.l.b16 %v46
  %v915 = vunpack.c.h.b16 %v46
  %v916 = vunpack.c.l.b16 %v47
  %v917 = vunpack.c.h.b16 %v47
  %v918 = vunpack.c.l.b16 %v48
  %v919 = vunpack.c.h.b16 %v48
  %v920 = vunpack.c.l.b16 %v49
  %v921 = vunpack.c.h.b16 %v49
  %v922 = vunpack.c.l.b16 %v50
  %v923 = vunpack.c.h.b16 %v50
  %v924 = vunpack.c.l.b16 %v51
  %v925 = vunpack.c.h.b16 %v51
  %v926 = vunpack.c.l.b16 %v52
  %v927 = vunpack.c.h.b16 %v52
  %v928 = vunpack.c.l.b16 %v53
  %v929 = vunpack.c.h.b16 %v53
  %v930 = vunpack.c.l.b16 %v54
  %v931 = vunpack.c.h.b16 %v54
  %v932 = vunpack.c.l.b16 %v55
  %v933 = vunpack.c.h.b16 %v55
  %v934 = vunpack.c.l.b16 %v56
  %v935 = vunpack.c.h.b16 %v56
  %v936 = vunpack.c.l.b16 %v57
  %v937 = vunpack.c.h.b16 %v57
  %v938 = vunpack.c.l.b16 %v58
  %v939 = vunpack.c.h.b16 %v58
  %v940 = vunpack.c.l.b16 %v59
  %v941 = vunpack.c.h.b16 %v59
  %v942 = vunpack.c.l.b16 %v60
  %v943 = vunpack.c.h.b16 %v60
  %v944 = vunpack.c.l.b16 %v61
  %v945 = vunpack.c.h.b16 %v61
  %v946 = vunpack.c.l.b16 %v62
  %v947 = vunpack.c.h.b16 %v62
  %v948 = vunpack.c.l.b16 %v63
  %v949 = vunpack.c.h.b16 %v63
  %v950 = vunpack.c.l.b16 %v64
  %v951 = vunpack.c.h.b16 %v64
  %v952 = vunpack.c.l.b16 %v65
  %v953 = vunpack.c.h.b16 %v65
  %v954 = vunpack.c.l.b16 %v66
  %v955 = vunpack.c.h.b16 %v66
  %v956 = vunpack.c.l.b16 %v67
  %v957 = vunpack.c.h.b16 %v67
  %v958 = vunpack.c.l.b16 %v68
  %v959 = vunpack.c.h.b16 %v68
  %v960 = vunpack.c.l.b16 %v69
  %v961 = vunpack.c.h.b16 %v69
  %v962 = vunpack.c.l.b16 %v70
  %v963 = vunpack.c.h.b16 %v70
  %v964 = vunpack.c.l.b16 %v71
  %v965 = vunpack.c.h.b16 %v71
  %v966 = vunpack.c.l.b16 %v72
  %v967 = vunpack.c.h.b16 %v72
  %v968 = vunpack.c.l.b16 %v73
  %v969 = vunpack.c.h.b16 %v73
  %v970 = vunpack.c.l.b16 %v74
  %v971 = vunpack.c.h.b16 %v74
  %v972 = vunpack.c.l.b16 %v75
  %v973 = vunpack.c.h.b16 %v75
  %v974 = vunpack.c.l.b16 %v76
  %v975 = vunpack.c.h.b16 %v76
  %v976 = vunpack.c.l.b16 %v77
  %v977 = vunpack.c.h.b16 %v77
  %v978 = vunpack.c.l.b16 %v78
  %v979 = vunpack.c.h.b16 %v78
  %v980 = vunpack.c.l.b16 %v79
  %v981 = vunpack.c.h.b16 %v79
  %v982 = vunpack.c.l.b16 %v80
  %v983 = vunpack.c.h.b16 %v80
  %v984 = vunpack.c.l.b16 %v81
  %v985 = vunpack.c.h.b16 %v81
  %v986 = vunpack.c.l.b16 %v82
  %v987 = vunpack.c.h.b16 %v82
  %v988 = vunpack.c.l.b16 %v83
  %v989 = vunpack.c.h.b16 %v83
  %v990 = vunpack.c.l.b16 %v84
  %v991 = vunpack.c.h.b16 %v84
  %v992 = vunpack.c.l.b16 %v85
  %v993 = vunpack.c.h.b16 %v85
  %v994 = vunpack.c.l.b16 %v86
  %v995 = vunpack.c.h.b16 %v86
  %v996 = vunpack.c.l.b16 %v87
  %v997 = vunpack.c.h.b16 %v87
  %v998 = vunpack.c.l.b16 %v88
  %v999 = vunpack.c.h.b16 %v88
  %v1000 = vunpack.c.l.b16 %v89
  %v1001 = vunpack.c.h.b16 %v89
  %v1002 = vunpack.c.l.b16 %v90
  %v1003 = vunpack.c.h.b16 %v90
  %v1004 = vunpack.c.l.b16 %v91
  %v1005 = vunpack.c.h.b16 %v91
  %v1006 = vunpack.c.l.b16 %v92
  %v1007 = vunpack.c.h.b16 %v92
  %v1008 = vunpack.c.l.b16 %v93
  %v1009 = vunpack.c.h.b16 %v93
  %v1010 = vunpack.c.l.b16 %v94
  %v1011 = vunpack.c.h.b16 %v94
  %v1012 = vunpack.c.l.b16 %v95
  %v1013 = vunpack.c.h.b16 %v95
  %v1014 = vunpack.c.l.b16 %v96
  %v1015 = vunpack.c.h.b16 %v96
  %v1016 = vunpack.c.l.b16 %v97
  %v1017 = vunpack.c.h.b16 %v97
  %v1018 = vunpack.c.l.b16 %v98
  %v1019 = vunpack.c.h.b16 %v98
  %v1020 = vunpack.c.l.b16 %v99
  %v1021 = vunpack.c.h.b16 %v99
  %v1022 = vunpack.c.l.b16 %v100
  %v1023 = vunpack.c.h.b16 %v100
  %v1024 = vunpack.c.l.b16 %v101
  %v1025 = vunpack.c.h.b16 %v101
  %v1026 = vunpack.c.l.b16 %v102
  %v1027 = vunpack.c.h.b16 %v102
  %v1028 = vunpack.c.l.b16 %v103
  %v1029 = vunpack.c.h.b16 %v103
  %v1030 = vunpack.c.l.b16 %v104
  %v1031 = vunpack.c.h.b16 %v104
  %v1032 = vunpack.c.l.b16 %v105
  %v1033 = vunpack.c.h.b16 %v105
  %v1034 = vunpack.c.l.b16 %v106
  %v1035 = vunpack.c.h.b16 %v106
  %v1036 = vunpack.c.l.b16 %v107
  %v1037 = vunpack.c.h.b16 %v107
  %v1038 = vunpack.c.l.b16 %v108
  %v1039 = vunpack.c.h.b16 %v108
  %v1040 = vunpack.c.l.b16 %v109
  %v1041 = vunpack.c.h.b16 %v109
  %v1042 = vunpack.c.l.b16 %v110
  %v1043 = vunpack.c.h.b16 %v110
  %v1044 = vunpack.c.l.b16 %v111
  %v1045 = vunpack.c.h.b16 %v111
  %v1046 = vunpack.c.l.b16 %v112
  %v1047 = vunpack.c.h.b16 %v112
  %v1048 = vunpack.c.l.b16 %v113
  %v1049 = vunpack.c.h.b16 %v113
  %v1050 = vunpack.c.l.b16 %v114
  %v1051 = vunpack.c.h.b16 %v114
  %v1052 = vunpack.c.l.b16 %v115
  %v1053 = vunpack.c.h.b16 %v115
  %v1054 = vunpack.c.l.b16 %v116
  %v1055 = vunpack.c.h.b16 %v116
  %v1056 = vunpack.c.l.b16 %v117
  %v1057 = vunpack.c.h.b16 %v117
  %v1058 = vunpack.c.l.b16 %v118
  %v1059 = vunpack.c.h.b16 %v118
  %v1060 = vunpack.c.l.b16 %v119
  %v1061 = vunpack.c.h.b16 %v119
  %v1062 = vunpack.c.l.b16 %v120
  %v1063 = vunpack.c.h.b16 %v120
  %v1064 = vunpack.c.l.b16 %v121
  %v1065 = vunpack.c.h.b16 %v121
  %v1066 = vunpack.c.l.b16 %v122
  %v1067 = vunpack.c.h.b16 %v122
  %v1068 = vunpack.c.l.b16 %v123
  %v1069 = vunpack.c.h.b16 %v123
  %v1070 = vunpack.c.l.b16 %v124
  %v1071 = vunpack.c.h.b16 %v124
  %v1072 = vunpack.c.l.b16 %v125
  %v1073 = vunpack.c.h.b16 %v125
  %v1074 = vunpack.c.l.b16 %v126
  %v1075 = vunpack.c.h.b16 %v126
  %v1076 = vunpack.c.l.b16 %v127
  %v1077 = vunpack.c.h.b16 %v127
  %v1078 = vunpack.c.l.b16 %v128
  %v1079 = vunpack.c.h.b16 %v128
  %v1080 = vunpack.c.l.b16 %v129
  %v1081 = vunpack.c.h.b16 %v129
  %v1082 = vunpack.c.l.b16 %v130
  %v1083 = vunpack.c.h.b16 %v130
  %v1084 = vunpack.c.l.b16 %v131
  %v1085 = vunpack.c.h.b16 %v131
  %v1086 = vunpack.c.l.b16 %v132
  %v1087 = vunpack.c.h.b16 %v132
  %v1088 = vunpack.c.l.b16 %v133
  %v1089 = vunpack.c.h.b16 %v133
  %v1090 = vunpack.c.l.b16 %v134
  %v1091 = vunpack.c.h.b16 %v134
  %v1092 = vunpack.c.l.b16 %v135
  %v1093 = vunpack.c.h.b16 %v135
  %v1094 = vunpack.c.l.b16 %v136
  %v1095 = vunpack.c.h.b16 %v136
  %v1096 = vunpack.c.l.b16 %v137
  %v1097 = vunpack.c.h.b16 %v137
  %v1098 = vunpack.c.l.b16 %v138
  %v1099 = vunpack.c.h.b16 %v138
  %v1100 = vunpack.c.l.b16 %v139
  %v1101 = vunpack.c.h.b16 %v139
  %v1102 = vunpack.c.l.b16 %v140
  %v1103 = vunpack.c.h.b16 %v140
  %v1104 = vunpack.c.l.b16 %v141
  %v1105 = vunpack.c.h.b16 %v141
  %v1106 = vunpack.c.l.b16 %v142
  %v1107 = vunpack.c.h.b16 %v142
  %v1108 = vunpack.c.l.b16 %v143
  %v1109 = vunpack.c.h.b16 %v143
  %v1110 = vunpack.c.l.b16 %v144
  %v1111 = vunpack.c.h.b16 %v144
  %v1112 = vunpack.c.l.b16 %v145
  %v1113 = vunpack.c.h.b16 %v145
  %v1114 = vunpack.c.l.b16 %v146
  %v1115 = vunpack.c.h.b16 %v146
  %v1116 = vunpack.c.l.b16 %v147
  %v1117 = vunpack.c.h.b16 %v147
  %v1118 = vunpack.c.l.b16 %v148
  %v1119 = vunpack.c.h.b16 %v148
  %v1120 = vunpack.c.l.b16 %v149
  %v1121 = vunpack.c.h.b16 %v149
  %v1122 = vunpack.c.l.b16 %v150
  %v1123 = vunpack.c.h.b16 %v150
  %v1124 = vunpack.c.l.b16 %v151
  %v1125 = vunpack.c.h.b16 %v151
  %v1126 = vunpack.c.l.b16 %v152
  %v1127 = vunpack.c.h.b16 %v152
  %v1128 = vunpack.c.l.b16 %v153
  %v1129 = vunpack.c.h.b16 %v153
  %v1130 = vunpack.c.l.b16 %v154
  %v1131 = vunpack.c.h.b16 %v154
  %v1132 = vunpack.c.l.b16 %v155
  %v1133 = vunpack.c.h.b16 %v155
  %v1134 = vunpack.c.l.b16 %v156
  %v1135 = vunpack.c.h.b16 %v156
  %v1136 = vunpack.c.l.b16 %v157
  %v1137 = vunpack.c.h.b16 %v157
  %v1138 = vunpack.c.l.b16 %v158
  %v1139 = vunpack.c.h.b16 %v158
  %v1140 = vunpack.c.l.b16 %v159
  %v1141 = vunpack.c.h.b16 %v159
  %v1142 = vunpack.c.l.b16 %v160
  %v1143 = vunpack.c.h.b16 %v160
  %v1144 = vunpack.c.l.b16 %v161
  %v1145 = vunpack.c.h.b16 %v161
  %v1146 = vunpack.c.l.b16 %v162
  %v1147 = vunpack.c.h.b16 %v162
  %v1148 = vunpack.c.l.b16 %v163
  %v1149 = vunpack.c.h.b16 %v163
  %v1150 = vunpack.c.l.b16 %v164
  %v1151 = vunpack.c.h.b16 %v164
  %v1152 = vunpack.c.l.b16 %v165
  %v1153 = vunpack.c.h.b16 %v165
  %v1154 = vunpack.c.l.b16 %v166
  %v1155 = vunpack.c.h.b16 %v166
  %v1156 = vunpack.c.l.b16 %v167
  %v1157 = vunpack.c.h.b16 %v167
  %v1158 = vunpack.c.l.b16 %v168
  %v1159 = vunpack.c.h.b16 %v168
  %v1160 = vunpack.c.l.b16 %v169
  %v1161 = vunpack.c.h.b16 %v169
  %v1162 = vunpack.c.l.b16 %v170
  %v1163 = vunpack.c.h.b16 %v170
  %v1164 = vunpack.c.l.b16 %v171
  %v1165 = vunpack.c.h.b16 %v171
  %v1166 = vunpack.c.l.b16 %v172
  %v1167 = vunpack.c.h.b16 %v172
  %v1168 = vunpack.c.l.b16 %v173
  %v1169 = vunpack.c.h.b16 %v173
  %v1170 = vunpack.c.l.b16 %v174
  %v1171 = vunpack.c.h.b16 %v174
  %v1172 = vunpack.c.l.b16 %v175
  %v1173 = vunpack.c.h.b16 %v175
  %v1174 = vunpack.c.l.b16 %v176
  %v1175 = vunpack.c.h.b16 %v176
  %v1176 = vunpack.c.l.b16 %v177
  %v1177 = vunpack.c.h.b16 %v177
  %v1178 = vunpack.c.l.b16 %v178
  %v1179 = vunpack.c.h.b16 %v178
  %v1180 = vunpack.c.l.b16 %v179
  %v1181 = vunpack.c.h.b16 %v179
  %v1182 = vunpack.c.l.b16 %v180
  %v1183 = vunpack.c.h.b16 %v180
  %v1184 = vunpack.c.l.b16 %v181
  %v1185 = vunpack.c.h.b16 %v181
  %v1186 = vunpack.c.l.b16 %v182
  %v1187 = vunpack.c.h.b16 %v182
  %v1188 = vunpack.c.l.b16 %v183
  %v1189 = vunpack.c.h.b16 %v183
  %v1190 = vunpack.c.l.b16 %v184
  %v1191 = vunpack.c.h.b16 %v184
  %v1192 = vunpack.c.l.b16 %v185
  %v1193 = vunpack.c.h.b16 %v185
  %v1194 = vunpack.c.l.b16 %v186
  %v1195 = vunpack.c.h.b16 %v186
  %v1196 = vunpack.c.l.b16 %v187
  %v1197 = vunpack.c.h.b16 %v187
  %v1198 = vunpack.c.l.b16 %v188
  %v1199 = vunpack.c.h.b16 %v188
  %v1200 = vunpack.c.l.b16 %v189
  %v1201 = vunpack.c.h.b16 %v189
  %v1202 = vunpack.c.l.b16 %v190
  %v1203 = vunpack.c.h.b16 %v190
  %v1204 = vunpack.c.l.b16 %v191
  %v1205 = vunpack.c.h.b16 %v191
  %v1206 = vunpack.c.l.b16 %v192
  %v1207 = vunpack.c.h.b16 %v192
  %v1208 = vunpack.c.l.b16 %v193
  %v1209 = vunpack.c.h.b16 %v193
  %v1210 = vunpack.c.l.b16 %v194
  %v1211 = vunpack.c.h.b16 %v194
  %v1212 = vunpack.c.l.b16 %v195
  %v1213 = vunpack.c.h.b16 %v195
  %v1214 = vunpack.c.l.b16 %v196
  %v1215 = vunpack.c.h.b16 %v196
  %v1216 = vunpack.c.l.b16 %v197
  %v1217 = vunpack.c.h.b16 %v197
  %v1218 = vunpack.c.l.b16 %v198
  %v1219 = vunpack.c.h.b16 %v198
  %v1220 = vunpack.c.l.b16 %v199
  %v1221 = vunpack.c.h.b16 %v199
  %v1222 = vunpack.c.l.b16 %v200
  %v1223 = vunpack.c.h.b16 %v200
  %v1224 = vunpack.c.l.b16 %v201
  %v1225 = vunpack.c.h.b16 %v201
  %v1226 = vunpack.c.l.b16 %v202
  %v1227 = vunpack.c.h.b16 %v202
  %v1228 = vunpack.c.l.b16 %v203
  %v1229 = vunpack.c.h.b16 %v203
  %v1230 = vunpack.c.l.b16 %v204
  %v1231 = vunpack.c.h.b16 %v204
  %v1232 = vunpack.c.l.b16 %v205
  %v1233 = vunpack.c.h.b16 %v205
  %v1234 = vunpack.c.l.b16 %v206
  %v1235 = vunpack.c.h.b16 %v206
  %v1236 = vunpack.c.l.b16 %v207
  %v1237 = vunpack.c.h.b16 %v207
  %v1238 = vunpack.c.l.b16 %v208
  %v1239 = vunpack.c.h.b16 %v208
  %v1240 = vunpack.c.l.b16 %v209
  %v1241 = vunpack.c.h.b16 %v209
  %v1242 = vunpack.c.l.b16 %v210
  %v1243 = vunpack.c.h.b16 %v210
  %v1244 = vunpack.c.l.b16 %v211
  %v1245 = vunpack.c.h.b16 %v211
  %v1246 = vunpack.c.l.b16 %v212
  %v1247 = vunpack.c.h.b16 %v212
  %v1248 = vunpack.c.l.b16 %v213
  %v1249 = vunpack.c.h.b16 %v213
  %v1250 = vunpack.c.l.b16 %v214
  %v1251 = vunpack.c.h.b16 %v214
  %v1252 = vunpack.c.l.b16 %v215
  %v1253 = vunpack.c.h.b16 %v215
  %v1254 = vunpack.c.l.b16 %v216
  %v1255 = vunpack.c.h.b16 %v216
  %v1256 = vunpack.c.l.b16 %v217
  %v1257 = vunpack.c.h.b16 %v217
  %v1258 = vunpack.c.l.b16 %v218
  %v1259 = vunpack.c.h.b16 %v218
  %v1260 = vunpack.c.l.b16 %v219
  %v1261 = vunpack.c.h.b16 %v219
  %v1262 = vunpack.c.l.b16 %v220
  %v1263 = vunpack.c.h.b16 %v220
  %v1264 = vunpack.c.l.b16 %v221
  %v1265 = vunpack.c.h.b16 %v221
  %v1266 = vunpack.c.l.b16 %v222
  %v1267 = vunpack.c.h.b16 %v222
  %v1268 = vunpack.c.l.b16 %v223
  %v1269 = vunpack.c.h.b16 %v223
  %v1270 = vunpack.c.l.b16 %v224
  %v1271 = vunpack.c.h.b16 %v224
  %v1272 = vunpack.c.l.b16 %v225
  %v1273 = vunpack.c.h.b16 %v225
  %v1274 = vunpack.c.l.b16 %v226
  %v1275 = vunpack.c.h.b16 %v226
  %v1276 = vunpack.c.l.b16 %v227
  %v1277 = vunpack.c.h.b16 %v227
  %v1278 = vunpack.c.l.b16 %v228
  %v1279 = vunpack.c.h.b16 %v228
  %v1280 = vunpack.c.l.b16 %v229
  %v1281 = vunpack.c.h.b16 %v229
  %v1282 = vunpack.c.l.b16 %v230
  %v1283 = vunpack.c.h.b16 %v230
  %v1284 = vunpack.c.l.b16 %v231
  %v1285 = vunpack.c.h.b16 %v231
  %v1286 = vunpack.c.l.b16 %v232
  %v1287 = vunpack.c.h.b16 %v232
  %v1288 = vunpack.c.l.b16 %v233
  %v1289 = vunpack.c.h.b16 %v233
  %v1290 = vunpack.c.l.b16 %v234
  %v1291 = vunpack.c.h.b16 %v234
  %v1292 = vunpack.c.l.b16 %v235
  %v1293 = vunpack.c.h.b16 %v235
  %v1294 = vunpack.c.l.b16 %v236
  %v1295 = vunpack.c.h.b16 %v236
  %v1296 = vunpack.c.l.b16 %v237
  %v1297 = vunpack.c.h.b16 %v237
  %v1298 = vunpack.c.l.b16 %v238
  %v1299 = vunpack.c.h.b16 %v238
  %v1300 = vunpack.c.l.b16 %v239
  %v1301 = vunpack.c.h.b16 %v239
  %v1302 = vunpack.c.l.b16 %v240
  %v1303 = vunpack.c.h.b16 %v240
  %v1304 = vunpack.c.l.b16 %v241
  %v1305 = vunpack.c.h.b16 %v241
  %v1306 = vunpack.c.l.b16 %v242
  %v1307 = vunpack.c.h.b16 %v242
  %v1308 = vunpack.c.l.b16 %v243
  %v1309 = vunpack.c.h.b16 %v243
  %v1310 = vunpack.c.l.b16 %v244
  %v1311 = vunpack.c.h.b16 %v244
  %v1312 = vunpack.c.l.b16 %v245
  %v1313 = vunpack.c.h.b16 %v245
  %v1314 = vunpack.c.l.b16 %v246
  %v1315 = vunpack.c.h.b16 %v246
  %v1316 = vunpack.c.l.b16 %v247
  %v1317 = vunpack.c.h.b16 %v247
  %v1318 = vunpack.c.l.b16 %v248
  %v1319 = vunpack.c.h.b16 %v248
  %v1320 = vunpack.c.l.b16 %v249
  %v1321 = vunpack.c.h.b16 %v249
  %v1322 = vunpack.c.l.b16 %v250
  %v1323 = vunpack.c.h.b16 %v250
  %v1324 = vunpack.c.l.b16 %v251
  %v1325 = vunpack.c.h.b16 %v251
  %v1326 = vunpack.c.l.b16 %v252
  %v1327 = vunpack.c.h.b16 %v252
  %v1328 = vunpack.c.l.b16 %v253
  %v1329 = vunpack.c.h.b16 %v253
  %v1330 = vunpack.c.l.b16 %v254
  %v1331 = vunpack.c.h.b16 %v254
  %v1332 = vunpack.c.l.b16 %v255
  %v1333 = vunpack.c.h.b16 %v255
  %v1334 = vunpack.c.l.b16 %v256
  %v1335 = vunpack.c.h.b16 %v256
  %v1336 = vunpack.c.l.b16 %v257
  %v1337 = vunpack.c.h.b16 %v257
  %v1338 = vunpack.c.l.b16 %v258
  %v1339 = vunpack.c.h.b16 %v258
  %v1340 = vunpack.c.l.b16 %v259
  %v1341 = vunpack.c.h.b16 %v259
  %v1342 = vunpack.c.l.b16 %v260
  %v1343 = vunpack.c.h.b16 %v260
  %v1344 = vunpack.c.l.b16 %v261
  %v1345 = vunpack.c.h.b16 %v261
  %v1346 = vunpack.c.l.b16 %v262
  %v1347 = vunpack.c.h.b16 %v262
  %v1348 = vunpack.c.l.b16 %v263
  %v1349 = vunpack.c.h.b16 %v263
  %v1350 = vunpack.c.l.b16 %v264
  %v1351 = vunpack.c.h.b16 %v264
  %v1352 = vunpack.c.l.b16 %v265
  %v1353 = vunpack.c.h.b16 %v265
  %v1354 = vunpack.c.l.b16 %v266
  %v1355 = vunpack.c.h.b16 %v266
  %v1356 = vunpack.c.l.b16 %v267
  %v1357 = vunpack.c.h.b16 %v267
  %v1358 = vunpack.c.l.b16 %v268
  %v1359 = vunpack.c.h.b16 %v268
  %v1360 = vunpack.c.l.b16 %v269
  %v1361 = vunpack.c.h.b16 %v269
  %v1362 = vunpack.c.l.b16 %v270
  %v1363 = vunpack.c.h.b16 %v270
  %v1364 = vunpack.c.l.b16 %v271
  %v1365 = vunpack.c.h.b16 %v271
  %v1366 = vunpack.c.l.b16 %v272
  %v1367 = vunpack.c.h.b16 %v272
  %v1368 = vunpack.c.l.b16 %v273
  %v1369 = vunpack.c.h.b16 %v273
  %v1370 = vunpack.c.l.b16 %v274
  %v1371 = vunpack.c.h.b16 %v274
  %v1372 = vunpack.c.l.b16 %v275
  %v1373 = vunpack.c.h.b16 %v275
  %v1374 = vunpack.c.l.b16 %v276
  %v1375 = vunpack.c.h.b16 %v276
  %v1376 = vunpack.c.l.b16 %v277
  %v1377 = vunpack.c.h.b16 %v277
  %v1378 = vunpack.c.l.b16 %v278
  %v1379 = vunpack.c.h.b16 %v278
  %v1380 = vunpack.c.l.b16 %v279
  %v1381 = vunpack.c.h.b16 %v279
  %v1382 = vunpack.c.l.b16 %v280
  %v1383 = vunpack.c.h.b16 %v280
  %v1384 = vunpack.c.l.b16 %v281
  %v1385 = vunpack.c.h.b16 %v281
  %v1386 = vunpack.c.l.b16 %v282
  %v1387 = vunpack.c.h.b16 %v282
  %v1388 = vunpack.c.l.b16 %v283
  %v1389 = vunpack.c.h.b16 %v283
  %v1390 = vunpack.c.l.b16 %v284
  %v1391 = vunpack.c.h.b16 %v284
  %v1392 = vunpack.c.l.b16 %v285
  %v1393 = vunpack.c.h.b16 %v285
  %v1394 = vunpack.c.l.b16 %v286
  %v1395 = vunpack.c.h.b16 %v286
  %v1396 = vunpack.c.l.b16 %v287
  %v1397 = vunpack.c.h.b16 %v287
  %v1398 = vunpack.c.l.b16 %v288
  %v1399 = vunpack.c.h.b16 %v288
  %v1400 = vunpack.c.l.b16 %v289
  %v1401 = vunpack.c.h.b16 %v289
  %v1402 = vunpack.c.l.b16 %v290
  %v1403 = vunpack.c.h.b16 %v290
  %v1404 = vunpack.c.l.b16 %v291
  %v1405 = vunpack.c.h.b16 %v291
  %v1406 = vunpack.c.l.b16 %v292
  %v1407 = vunpack.c.h.b16 %v292
  %v1408 = vunpack.c.l.b16 %v293
  %v1409 = vunpack.c.h.b16 %v293
  %v1410 = vunpack.c.l.b16 %v294
  %v1411 = vunpack.c.h.b16 %v294
  %v1412 = vunpack.c.l.b16 %v295
  %v1413 = vunpack.c.h.b16 %v295
  %v1414 = vunpack.c.l.b16 %v296
  %v1415 = vunpack.c.h.b16 %v296
  %v1416 = vunpack.c.l.b16 %v297
  %v1417 = vunpack.c.h.b16 %v297
  %v1418 = vunpack.c.l.b16 %v298
  %v1419 = vunpack.c.h.b16 %v298
  %v1420 = vunpack.c.l.b16 %v299
  %v1421 = vunpack.c.h.b16 %v299
  %v1422 = vunpack.c.l.b16 %v300
  %v1423 = vunpack.c.h.b16 %v300
  %v1424 = vunpack.c.l.b16 %v301
  %v1425 = vunpack.c.h.b16 %v301
  %v1426 = vunpack.c.l.b16 %v302
  %v1427 = vunpack.c.h.b16 %v302
  %v1428 = vunpack.c.l.b16 %v303
  %v1429 = vunpack.c.h.b16 %v303
  %v1430 = vunpack.c.l.b16 %v304
  %v1431 = vunpack.c.h.b16 %v304
  %v1432 = vunpack.c.l.b16 %v305
  %v1433 = vunpack.c.h.b16 %v305
  %v1434 = vunpack.c.l.b16 %v306
  %v1435 = vunpack.c.h.b16 %v306
  %v1436 = vunpack.c.l.b16 %v307
  %v1437 = vunpack.c.h.b16 %v307
  %v1438 = vunpack.c.l.b16 %v308
  %v1439 = vunpack.c.h.b16 %v308
  %v1440 = vunpack.c.l.b16 %v309
  %v1441 = vunpack.c.h.b16 %v309
  %v1442 = vunpack.c.l.b16 %v310
  %v1443 = vunpack.c.h.b16 %v310
  %v1444 = vunpack.c.l.b16 %v311
  %v1445 = vunpack.c.h.b16 %v311
  %v1446 = vunpack.c.l.b16 %v312
  %v1447 = vunpack.c.h.b16 %v312
  %v1448 = vunpack.c.l.b16 %v313
  %v1449 = vunpack.c.h.b16 %v313
  %v1450 = vunpack.c.l.b16 %v314
  %v1451 = vunpack.c.h.b16 %v314
  %v1452 = vunpack.c.l.b16 %v315
  %v1453 = vunpack.c.h.b16 %v315
  %v1454 = vunpack.c.l.b16 %v316
  %v1455 = vunpack.c.h.b16 %v316
  %v1456 = vunpack.c.l.b16 %v317
  %v1457 = vunpack.c.h.b16 %v317
  %v1458 = vunpack.c.l.b16 %v318
  %v1459 = vunpack.c.h.b16 %v318
  %v1460 = vunpack.c.l.b16 %v319
  %v1461 = vunpack.c.h.b16 %v319
  %v1462 = vunpack.c.l.b16 %v320
  %v1463 = vunpack.c.h.b16 %v320
  %v1464 = vunpack.c.l.b16 %v321
  %v1465 = vunpack.c.h.b16 %v321
  %v1466 = vunpack.c.l.b16 %v322
  %v1467 = vunpack.c.h.b16 %v322
  %v1468 = vunpack.c.l.b16 %v323
  %v1469 = vunpack.c.h.b16 %v323
  %v1470 = vunpack.c.l.b16 %v324
  %v1471 = vunpack.c.h.b16 %v324
  %v1472 = vunpack.c.l.b16 %v325
  %v1473 = vunpack.c.h.b16 %v325
  %v1474 = vunpack.c.l.b16 %v326
  %v1475 = vunpack.c.h.b16 %v326
  %v1476 = vunpack.c.l.b16 %v327
  %v1477 = vunpack.c.h.b16 %v327
  %v1478 = vunpack.c.l.b16 %v328
  %v1479 = vunpack.c.h.b16 %v328
  %v1480 = vunpack.c.l.b16 %v329
  %v1481 = vunpack.c.h.b16 %v329
  %v1482 = vunpack.c.l.b16 %v330
  %v1483 = vunpack.c.h.b16 %v330
  %v1484 = vunpack.c.l.b16 %v331
  %v1485 = vunpack.c.h.b16 %v331
  %v1486 = vunpack.c.l.b16 %v332
  %v1487 = vunpack.c.h.b16 %v332
  %v1488 = vunpack.c.l.b16 %v333
  %v1489 = vunpack.c.h.b16 %v333
  %v1490 = vunpack.c.l.b16 %v334
  %v1491 = vunpack.c.h.b16 %v334
  %v1492 = vunpack.c.l.b16 %v335
  %v1493 = vunpack.c.h.b16 %v335
  %v1494 = vunpack.c.l.b16 %v336
  %v1495 = vunpack.c.h.b16 %v336
  %v1496 = vunpack.c.l.b16 %v337
  %v1497 = vunpack.c.h.b16 %v337
  %v1498 = vunpack.c.l.b16 %v338
  %v1499 = vunpack.c.h.b16 %v338
  %v1500 = vunpack.c.l.b16 %v339
  %v1501 = vunpack.c.h.b16 %v339
  %v1502 = vunpack.c.l.b16 %v340
  %v1503 = vunpack.c.h.b16 %v340
  %v1504 = vunpack.c.l.b16 %v341
  %v1505 = vunpack.c.h.b16 %v341
  %v1506 = vunpack.c.l.b16 %v342
  %v1507 = vunpack.c.h.b16 %v342
  %v1508 = vunpack.c.l.b16 %v343
  %v1509 = vunpack.c.h.b16 %v343
  %v1510 = vunpack.c.l.b16 %v344
  %v1511 = vunpack.c.h.b16 %v344
  %v1512 = vunpack.c.l.b16 %v345
  %v1513 = vunpack.c.h.b16 %v345
  %v1514 = vunpack.c.l.b16 %v346
  %v1515 = vunpack.c.h.b16 %v346
  %v1516 = vunpack.c.l.b16 %v347
  %v1517 = vunpack.c.h.b16 %v347
  %v1518 = vunpack.c.l.b16 %v348
  %v1519 = vunpack.c.h.b16 %v348
  %v1520 = vunpack.c.l.b16 %v349
  %v1521 = vunpack.c.h.b16 %v349
  %v1522 = vunpack.c.l.b16 %v350
  %v1523 = vunpack.c.h.b16 %v350
  %v1524 = vunpack.c.l.b16 %v351
  %v1525 = vunpack.c.h.b16 %v351
  %v1526 = vunpack.c.l.b16 %v352
  %v1527 = vunpack.c.h.b16 %v352
  %v1528 = vunpack.c.l.b16 %v353
  %v1529 = vunpack.c.h.b16 %v353
  %v1530 = vunpack.c.l.b16 %v354
  %v1531 = vunpack.c.h.b16 %v354
  %v1532 = vunpack.c.l.b16 %v355
  %v1533 = vunpack.c.h.b16 %v355
  %v1534 = vunpack.c.l.b16 %v356
  %v1535 = vunpack.c.h.b16 %v356
  %v1536 = vunpack.c.l.b16 %v357
  %v1537 = vunpack.c.h.b16 %v357
  %v1538 = vunpack.c.l.b16 %v358
  %v1539 = vunpack.c.h.b16 %v358
  %v1540 = vunpack.c.l.b16 %v359
  %v1541 = vunpack.c.h.b16 %v359
  %v1542 = vunpack.c.l.b16 %v360
  %v1543 = vunpack.c.h.b16 %v360
  %v1544 = vunpack.c.l.b16 %v361
  %v1545 = vunpack.c.h.b16 %v361
  %v1546 = vunpack.c.l.b16 %v362
  %v1547 = vunpack.c.h.b16 %v362
  %v1548 = vunpack.c.l.b16 %v363
  %v1549 = vunpack.c.h.b16 %v363
  %v1550 = vunpack.c.l.b16 %v364
  %v1551 = vunpack.c.h.b16 %v364
  %v1552 = vunpack.c.l.b16 %v365
  %v1553 = vunpack.c.h.b16 %v365
  %v1554 = vunpack.c.l.b16 %v366
  %v1555 = vunpack.c.h.b16 %v366
  %v1556 = vunpack.c.l.b16 %v367
  %v1557 = vunpack.c.h.b16 %v367
  %v1558 = vunpack.c.l.b16 %v368
  %v1559 = vunpack.c.h.b16 %v368
  %v1560 = vunpack.c.l.b16 %v369
  %v1561 = vunpack.c.h.b16 %v369
  %v1562 = vunpack.c.l.b16 %v370
  %v1563 = vunpack.c.h.b16 %v370
  %v1564 = vunpack.c.l.b16 %v371
  %v1565 = vunpack.c.h.b16 %v371
  %v1566 = vunpack.c.l.b16 %v372
  %v1567 = vunpack.c.h.b16 %v372
  %v1568 = vunpack.c.l.b16 %v373
  %v1569 = vunpack.c.h.b16 %v373
  %v1570 = vunpack.c.l.b16 %v374
  %v1571 = vunpack.c.h.b16 %v374
  %v1572 = vunpack.c.l.b16 %v375
  %v1573 = vunpack.c.h.b16 %v375
  %v1574 = vunpack.c.l.b16 %v376
  %v1575 = vunpack.c.h.b16 %v376
  %v1576 = vunpack.c.l.b16 %v377
  %v1577 = vunpack.c.h.b16 %v377
  %v1578 = vunpack.c.l.b16 %v378
  %v1579 = vunpack.c.h.b16 %v378
  %v1580 = vunpack.c.l.b16 %v379
  %v1581 = vunpack.c.h.b16 %v379
  %v1582 = vunpack.c.l.b16 %v380
  %v1583 = vunpack.c.h.b16 %v380
  %v1584 = vunpack.c.l.b16 %v381
  %v1585 = vunpack.c.h.b16 %v381
  %v1586 = vunpack.c.l.b16 %v382
  %v1587 = vunpack.c.h.b16 %v382
  %v1588 = vunpack.c.l.b16 %v383
  %v1589 = vunpack.c.h.b16 %v383
  %v1590 = vunpack.c.l.b16 %v384
  %v1591 = vunpack.c.h.b16 %v384
  %v1592 = vunpack.c.l.b16 %v385
  %v1593 = vunpack.c.h.b16 %v385
  %v1594 = vunpack.c.l.b16 %v386
  %v1595 = vunpack.c.h.b16 %v386
  %v1596 = vunpack.c.l.b16 %v387
  %v1597 = vunpack.c.h.b16 %v387
  %v1598 = vunpack.c.l.b16 %v388
  %v1599 = vunpack.c.h.b16 %v388
  %v1600 = vunpack.c.l.b16 %v389
  %v1601 = vunpack.c.h.b16 %v389
  %v1602 = vunpack.c.l.b16 %v390
  %v1603 = vunpack.c.h.b16 %v390
  %v1604 = vunpack.c.l.b16 %v391
  %v1605 = vunpack.c.h.b16 %v391
  %v1606 = vunpack.c.l.b16 %v392
  %v1607 = vunpack.c.h.b16 %v392
  %v1608 = vunpack.c.l.b16 %v393
  %v1609 = vunpack.c.h.b16 %v393
  %v1610 = vunpack.c.l.b16 %v394
  %v1611 = vunpack.c.h.b16 %v394
  %v1612 = vunpack.c.l.b16 %v395
  %v1613 = vunpack.c.h.b16 %v395
  %v1614 = vunpack.c.l.b16 %v396
  %v1615 = vunpack.c.h.b16 %v396
  %v1616 = vunpack.c.l.b16 %v397
  %v1617 = vunpack.c.h.b16 %v397
  %v1618 = vunpack.c.l.b16 %v398
  %v1619 = vunpack.c.h.b16 %v398
  %v1620 = vunpack.c.l.b16 %v399
  %v1621 = vunpack.c.h.b16 %v399
  %v1622 = vunpack.c.l.b16 %v400
  %v1623 = vunpack.c.h.b16 %v400
  %v1624 = vunpack.c.l.b16 %v401
  %v1625 = vunpack.c.h.b16 %v401
  %v1626 = vunpack.c.l.b16 %v402
  %v1627 = vunpack.c.h.b16 %v402
  %v1628 = vunpack.c.l.b16 %v403
  %v1629 = vunpack.c.h.b16 %v403
  %v1630 = vunpack.c.l.b16 %v404
  %v1631 = vunpack.c.h.b16 %v404
  %v1632 = vunpack.c.l.b16 %v405
  %v1633 = vunpack.c.h.b16 %v405
  %v1634 = vunpack.c.l.b16 %v406
  %v1635 = vunpack.c.h.b16 %v406
  %v1636 = vunpack.c.l.b16 %v407
  %v1637 = vunpack.c.h.b16 %v407
  %v1638 = vunpack.c.l.b16 %v408
  %v1639 = vunpack.c.h.b16 %v408
  %v1640 = vunpack.c.l.b16 %v409
  %v1641 = vunpack.c.h.b16 %v409
  %v1642 = vunpack.c.l.b16 %v410
  %v1643 = vunpack.c.h.b16 %v410
  %v1644 = vunpack.c.l.b16 %v411
  %v1645 = vunpack.c.h.b16 %v411
  %v1646 = vunpack.c.l.b16 %v412
  %v1647 = vunpack.c.h.b16 %v412
  %v1648 = vunpack.c.l.b16 %v413
  %v1649 = vunpack.c.h.b16 %v413
  %v1650 = vunpack.c.l.b16 %v414
  %v1651 = vunpack.c.h.b16 %v414
  %v1652 = vunpack.c.l.b16 %v415
  %v1653 = vunpack.c.h.b16 %v415
  %v1654 = vunpack.c.l.b16 %v416
  %v1655 = vunpack.c.h.b16 %v416
  %v1656 = vunpack.c.l.b16 %v417
  %v1657 = vunpack.c.h.b16 %v417
  %v1658 = vunpack.c.l.b16 %v418
  %v1659 = vunpack.c.h.b16 %v418
  %v1660 = vunpack.c.l.b16 %v419
  %v1661 = vunpack.c.h.b16 %v419
  %v1662 = vunpack.c.l.b16 %v420
  %v1663 = vunpack.c.h.b16 %v420
  %v1664 = vunpack.c.l.b16 %v421
  %v1665 = vunpack.c.h.b16 %v421
  %v1666 = vunpack.c.l.b16 %v422
  %v1667 = vunpack.c.h.b16 %v422
  %v1668 = vunpack.c.l.b16 %v423
  %v1669 = vunpack.c.h.b16 %v423
  %v1670 = vunpack.c.l.b16 %v424
  %v1671 = vunpack.c.h.b16 %v424
  %v1672 = vunpack.c.l.b16 %v425
  %v1673 = vunpack.c.h.b16 %v425
  %v1674 = vunpack.c.l.b16 %v426
  %v1675 = vunpack.c.h.b16 %v426
  %v1676 = vunpack.c.l.b16 %v427
  %v1677 = vunpack.c.h.b16 %v427
  %v1678 = vunpack.c.l.b16 %v428
  %v1679 = vunpack.c.h.b16 %v428
  %v1680 = vunpack.c.l.b16 %v429
  %v1681 = vunpack.c.h.b16 %v429
  %v1682 = vunpack.c.l.b16 %v430
  %v1683 = vunpack.c.h.b16 %v430
  %v1684 = vunpack.c.l.b16 %v431
  %v1685 = vunpack.c.h.b16 %v431
  %v1686 = vpack.c.b16 %v906, %v854
  %v1687 = vpack.c.b16 %v907, %v855
  %v1688 = vpack.c.b16 %v908, %v856
  %v1689 = vpack.c.b16 %v909, %v857
  %v1690 = vpack.c.b16 %v910, %v858
  %v1691 = vpack.c.b16 %v911, %v859
  %v1692 = vpack.c.b16 %v912, %v860
  %v1693 = vpack.c.b16 %v913, %v861
  %v1694 = vpack.c.b16 %v914, %v862
  %v1695 = vpack.c.b16 %v915, %v863
  %v1696 = vpack.c.b16 %v916, %v864
  %v1697 = vpack.c.b16 %v917, %v865
  %v1698 = vpack.c.b16 %v918, %v866
  %v1699 = vpack.c.b16 %v919, %v867
  %v1700 = vpack.c.b16 %v920, %v868
  %v1701 = vpack.c.b16 %v921, %v869
  %v1702 = vpack.c.b16 %v922, %v870
  %v1703 = vpack.c.b16 %v923, %v871
  %v1704 = vpack.c.b16 %v924, %v872
  %v1705 = vpack.c.b16 %v925, %v873
  %v1706 = vpack.c.b16 %v926, %v874
  %v1707 = vpack.c.b16 %v927, %v875
  %v1708 = vpack.c.b16 %v928, %v876
  %v1709 = vpack.c.b16 %v929, %v877
  %v1710 = vpack.c.b16 %v930, %v878
  %v1711 = vpack.c.b16 %v931, %v879
  %v1712 = vpack.c.b16 %v932, %v880
  %v1713 = vpack.c.b16 %v933, %v881
  %v1714 = vpack.c.b16 %v934, %v882
  %v1715 = vpack.c.b16 %v935, %v883
  %v1716 = vpack.c.b16 %v936, %v884
  %v1717 = vpack.c.b16 %v937, %v885
  %v1718 = vpack.c.b16 %v938, %v886
  %v1719 = vpack.c.b16 %v939, %v887
  %v1720 = vpack.c.b16 %v940, %v888
  %v1721 = vpack.c.b16 %v941, %v889
  %v1722 = vpack.c.b16 %v942, %v890
  %v1723 = vpack.c.b16 %v943, %v891
  %v1724 = vpack.c.b16 %v944, %v892
  %v1725 = vpack.c.b16 %v945, %v893
  %v1726 = vpack.c.b16 %v946, %v894
  %v1727 = vpack.c.b16 %v947, %v895
  %v1728 = vpack.c.b16 %v948, %v896
  %v1729 = vpack.c.b16 %v949, %v897
  %v1730 = vpack.c.b16 %v950, %v898
  %v1731 = vpack.c.b16 %v951, %v899
  %v1732 = vpack.c.b16 %v952, %v900
  %v1733 = vpack.c.b16 %v953, %v901
  %v1734 = vpack.c.b16 %v954, %v902
  %v1735 = vpack.c.b16 %v955, %v903
  %v1736 = vpack.c.b16 %v956, %v904
  %v1737 = vpack.c.b16 %v957, %v905
  %v1738 = vpack.c.b16 %v1010, %v958
  %v1739 = vpack.c.b16 %v1011, %v959
  %v1740 = vpack.c.b16 %v1012, %v960
  %v1741 = vpack.c.b16 %v1013, %v961
  %v1742 = vpack.c.b16 %v1014, %v962
  %v1743 = vpack.c.b16 %v1015, %v963
  %v1744 = vpack.c.b16 %v1016, %v964
  %v1745 = vpack.c.b16 %v1017, %v965
  %v1746 = vpack.c.b16 %v1018, %v966
  %v1747 = vpack.c.b16 %v1019, %v967
  %v1748 = vpack.c.b16 %v1020, %v968
  %v1749 = vpack.c.b16 %v1021, %v969
  %v1750 = vpack.c.b16 %v1022, %v970
  %v1751 = vpack.c.b16 %v1023, %v971
  %v1752 = vpack.c.b16 %v1024, %v972
  %v1753 = vpack.c.b16 %v1025, %v973
  %v1754 = vpack.c.b16 %v1026, %v974
  %v1755 = vpack.c.b16 %v1027, %v975
  %v1756 = vpack.c.b16 %v1028, %v976
  %v1757 = vpack.c.b16 %v1029, %v977
  %v1758 = vpack.c.b16 %v1030, %v978
  %v1759 = vpack.c.b16 %v1031, %v979
  %v1760 = vpack.c.b16 %v1032, %v980
  %v1761 = vpack.c.b16 %v1033, %v981
  %v1762 = vpack.c.b16 %v1034, %v982
  %v1763 = vpack.c.b16 %v1035, %v983
  %v1764 = vpack.c.b16 %v1036, %v984
  %v1765 = vpack.c.b16 %v1037, %v985
  %v1766 = vpack.c.b16 %v1038, %v986
  %v1767 = vpack.c.b16 %v1039, %v987
  %v1768 = vpack.c.b16 %v1040, %v988
  %v1769 = vpack.c.b16 %v1041, %v989
  %v1770 = vpack.c.b16 %v1042, %v990
  %v1771 = vpack.c.b16 %v1043, %v991
  %v1772 = vpack.c.b16 %v1044, %v992
  %v1773 = vpack.c.b16 %v1045, %v993
  %v1774 = vpack.c.b16 %v1046, %v994
  %v1775 = vpack.c.b16 %v1047, %v995
  %v1776 = vpack.c.b16 %v1048, %v996
  %v1777 = vpack.c.b16 %v1049, %v997
  %v1778 = vpack.c.b16 %v1050, %v998
  %v1779 = vpack.c.b16 %v1051, %v999
  %v1780 = vpack.c.b16 %v1052, %v1000
  %v1781 = vpack.c.b16 %v1053, %v1001
  %v1782 = vpack.c.b16 %v1054, %v1002
  %v1783 = vpack.c.b16 %v1055, %v1003
  %v1784 = vpack.c.b16 %v1056, %v1004
  %v1785 = vpack.c.b16 %v1057, %v1005
  %v1786 = vpack.c.b16 %v1058, %v1006
  %v1787 = vpack.c.b16 %v1059, %v1007
  %v1788 = vpack.c.b16 %v1060, %v1008
  %v1789 = vpack.c.b16 %v1061, %v1009
  %v1790 = vpack.c.b16 %v1114, %v1062
  %v1791 = vpack.c.b16 %v1115, %v1063
  %v1792 = vpack.c.b16 %v1116, %v1064
  %v1793 = vpack.c.b16 %v1117, %v1065
  %v1794 = vpack.c.b16 %v1118, %v1066
  %v1795 = vpack.c.b16 %v1119, %v1067
  %v1796 = vpack.c.b16 %v1120, %v1068
  %v1797 = vpack.c.b16 %v1121, %v1069
  %v1798 = vpack.c.b16 %v1122, %v1070
  %v1799 = vpack.c.b16 %v1123, %v1071
  %v1800 = vpack.c.b16 %v1124, %v1072
  %v1801 = vpack.c.b16 %v1125, %v1073
  %v1802 = vpack.c.b16 %v1126, %v1074
  %v1803 = vpack.c.b16 %v1127, %v1075
  %v1804 = vpack.c.b16 %v1128, %v1076
  %v1805 = vpack.c.b16 %v1129, %v1077
  %v1806 = vpack.c.b16 %v1130, %v1078
  %v1807 = vpack.c.b16 %v1131, %v1079
  %v1808 = vpack.c.b16 %v1132, %v1080
  %v1809 = vpack.c.b16 %v1133, %v1081
  %v1810 = vpack.c.b16 %v1134, %v1082
  %v1811 = vpack.c.b16 %v1135, %v1083
  %v1812 = vpack.c.b16 %v1136, %v1084
  %v1813 = vpack.c.b16 %v1137, %v1085
  %v1814 = vpack.c.b16 %v1138, %v1086
  %v1815 = vpack.c.b16 %v1139, %v1087
  %v1816 = vpack.c.b16 %v1140, %v1088
  %v1817 = vpack.c.b16 %v1141, %v1089
  %v1818 = vpack.c.b16 %v1142, %v1090
  %v1819 = vpack.c.b16 %v1143, %v1091
  %v1820 = vpack.c.b16 %v1144, %v1092
  %v1821 = vpack.c.b16 %v1145, %v1093
  %v1822 = vpack.c.b16 %v1146, %v1094
  %v1823 = vpack.c.b16 %v1147, %v1095
  %v1824 = vpack.c.b16 %v1148, %v1096
  %v1825 = vpack.c.b16 %v1149, %v1097
  %v1826 = vpack.c.b16 %v1150, %v1098
  %v1827 = vpack.c.b16 %v1151, %v1099
  %v1828 = vpack.c.b16 %v1152, %v1100
  %v1829 = vpack.c.b16 %v1153, %v1101
  %v1830 = vpack.c.b16 %v1154, %v1102
  %v1831 = vpack.c.b16 %v1155, %v1103
  %v1832 = vpack.c.b16 %v1156, %v1104
  %v1833 = vpack.c.b16 %v1157, %v1105
  %v1834 = vpack.c.b16 %v1158, %v1106
  %v1835 = vpack.c.b16 %v1159, %v1107
  %v1836 = vpack.c.b16 %v1160, %v1108
  %v1837 = vpack.c.b16 %v1161, %v1109
  %v1838 = vpack.c.b16 %v1162, %v1110
  %v1839 = vpack.c.b16 %v1163, %v1111
  %v1840 = vpack.c.b16 %v1164, %v1112
  %v1841 = vpack.c.b16 %v1165, %v1113
  %v1842 = vpack.c.b16 %v1218, %v1166
  %v1843 = vpack.c.b16 %v1219, %v1167
  %v1844 = vpack.c.b16 %v1220, %v1168
  %v1845 = vpack.c.b16 %v1221, %v1169
  %v1846 = vpack.c.b16 %v1222, %v1170
  %v1847 = vpack.c.b16 %v1223, %v1171
  %v1848 = vpack.c.b16 %v1224, %v1172
  %v1849 = vpack.c.b16 %v1225, %v1173
  %v1850 = vpack.c.b16 %v1226, %v1174
  %v1851 = vpack.c.b16 %v1227, %v1175
  %v1852 = vpack.c.b16 %v1228, %v1176
  %v1853 = vpack.c.b16 %v1229, %v1177
  %v1854 = vpack.c.b16 %v1230, %v1178
  %v1855 = vpack.c.b16 %v1231, %v1179
  %v1856 = vpack.c.b16 %v1232, %v1180
  %v1857 = vpack.c.b16 %v1233, %v1181
  %v1858 = vpack.c.b16 %v1234, %v1182
  %v1859 = vpack.c.b16 %v1235, %v1183
  %v1860 = vpack.c.b16 %v1236, %v1184
  %v1861 = vpack.c.b16 %v1237, %v1185
  %v1862 = vpack.c.b16 %v1238, %v1186
  %v1863 = vpack.c.b16 %v1239, %v1187
  %v1864 = vpack.c.b16 %v1240, %v1188
  %v1865 = vpack.c.b16 %v1241, %v1189
  %v1866 = vpack.c.b16 %v1242, %v1190
  %v1867 = vpack.c.b16 %v1243, %v1191
  %v1868 = vpack.c.b16 %v1244, %v1192
  %v1869 = vpack.c.b16 %v1245, %v1193
  %v1870 = vpack.c.b16 %v1246, %v1194
  %v1871 = vpack.c.b16 %v1247, %v1195
  %v1872 = vpack.c.b16 %v1248, %v1196
  %v1873 = vpack.c.b16 %v1249, %v1197
  %v1874 = vpack.c.b16 %v1250, %v1198
  %v1875 = vpack.c.b16 %v1251, %v1199
  %v1876 = vpack.c.b16 %v1252, %v1200
  %v1877 = vpack.c.b16 %v1253, %v1201
  %v1878 = vpack.c.b16 %v1254, %v1202
  %v1879 = vpack.c.b16 %v1255, %v1203
  %v1880 = vpack.c.b16 %v1256, %v1204
  %v1881 = vpack.c.b16 %v1257, %v1205
  %v1882 = vpack.c.b16 %v1258, %v1206
  %v1883 = vpack.c.b16 %v1259, %v1207
  %v1884 = vpack.c.b16 %v1260, %v1208
  %v1885 = vpack.c.b16 %v1261, %v1209
  %v1886 = vpack.c.b16 %v1262, %v1210
  %v1887 = vpack.c.b16 %v1263, %v1211
  %v1888 = vpack.c.b16 %v1264, %v1212
  %v1889 = vpack.c.b16 %v1265, %v1213
  %v1890 = vpack.c.b16 %v1266, %v1214
  %v1891 = vpack.c.b16 %v1267, %v1215
  %v1892 = vpack.c.b16 %v1268, %v1216
  %v1893 = vpack.c.b16 %v1269, %v1217
  %v1894 = vpack.c.b16 %v1322, %v1270
  %v1895 = vpack.c.b16 %v1323, %v1271
  %v1896 = vpack.c.b16 %v1324, %v1272
  %v1897 = vpack.c.b16 %v1325, %v1273
  %v1898 = vpack.c.b16 %v1326, %v1274
  %v1899 = vpack.c.b16 %v1327, %v1275
  %v1900 = vpack.c.b16 %v1328, %v1276
  %v1901 = vpack.c.b16 %v1329, %v1277
  %v1902 = vpack.c.b16 %v1330, %v1278
  %v1903 = vpack.c.b16 %v1331, %v1279
  %v1904 = vpack.c.b16 %v1332, %v1280
  %v1905 = vpack.c.b16 %v1333, %v1281
  %v1906 = vpack.c.b16 %v1334, %v1282
  %v1907 = vpack.c.b16 %v1335, %v1283
  %v1908 = vpack.c.b16 %v1336, %v1284
  %v1909 = vpack.c.b16 %v1337, %v1285
  %v1910 = vpack.c.b16 %v1338, %v1286
  %v1911 = vpack.c.b16 %v1339, %v1287
  %v1912 = vpack.c.b16 %v1340, %v1288
  %v1913 = vpack.c.b16 %v1341, %v1289
  %v1914 = vpack.c.b16 %v1342, %v1290
  %v1915 = vpack.c.b16 %v1343, %v1291
  %v1916 = vpack.c.b16 %v1344, %v1292
  %v1917 = vpack.c.b16 %v1345, %v1293
  %v1918 = vpack.c.b16 %v1346, %v1294
  %v1919 = vpack.c.b16 %v1347, %v1295
  %v1920 = vpack.c.b16 %v1348, %v1296
  %v1921 = vpack.c.b16 %v1349, %v1297
  %v1922 = vpack.c.b16 %v1350, %v1298
  %v1923 = vpack.c.b16 %v1351, %v1299
  %v1924 = vpack.c.b16 %v1352, %v1300
  %v1925 = vpack.c.b16 %v1353, %v1301
  %v1926 = vpack.c.b16 %v1354, %v1302
  %v1927 = vpack.c.b16 %v1355, %v1303
  %v1928 = vpack.c.b16 %v1356, %v1304
  %v1929 = vpack.c.b16 %v1357, %v1305
  %v1930 = vpack.c.b16 %v1358, %v1306
  %v1931 = vpack.c.b16 %v1359, %v1307
  %v1932 = vpack.c.b16 %v1360, %v1308
  %v1933 = vpack.c.b16 %v1361, %v1309
  %v1934 = vpack.c.b16 %v1362, %v1310
  %v1935 = vpack.c.b16 %v1363, %v1311
  %v1936 = vpack.c.b16 %v1364, %v1312
  %v1937 = vpack.c.b16 %v1365, %v1313
  %v1938 = vpack.c.b16 %v1366, %v1314
  %v1939 = vpack.c.b16 %v1367, %v1315
  %v1940 = vpack.c.b16 %v1368, %v1316
  %v1941 = vpack.c.b16 %v1369, %v1317
  %v1942 = vpack.c.b16 %v1370, %v1318
  %v1943 = vpack.c.b16 %v1371, %v1319
  %v1944 = vpack.c.b16 %v1372, %v1320
  %v1945 = vpack.c.b16 %v1373, %v1321
  %v1946 = vpack.c.b16 %v1426, %v1374
  %v1947 = vpack.c.b16 %v1427, %v1375
  %v1948 = vpack.c.b16 %v1428, %v1376
  %v1949 = vpack.c.b16 %v1429, %v1377
  %v1950 = vpack.c.b16 %v1430, %v1378
  %v1951 = vpack.c.b16 %v1431, %v1379
  %v1952 = vpack.c.b16 %v1432, %v1380
  %v1953 = vpack.c.b16 %v1433, %v1381
  %v1954 = vpack.c.b16 %v1434, %v1382
  %v1955 = vpack.c.b16 %v1435, %v1383
  %v1956 = vpack.c.b16 %v1436, %v1384
  %v1957 = vpack.c.b16 %v1437, %v1385
  %v1958 = vpack.c.b16 %v1438, %v1386
  %v1959 = vpack.c.b16 %v1439, %v1387
  %v1960 = vpack.c.b16 %v1440, %v1388
  %v1961 = vpack.c.b16 %v1441, %v1389
  %v1962 = vpack.c.b16 %v1442, %v1390
  %v1963 = vpack.c.b16 %v1443, %v1391
  %v1964 = vpack.c.b16 %v1444, %v1392
  %v1965 = vpack.c.b16 %v1445, %v1393
  %v1966 = vpack.c.b16 %v1446, %v1394
  %v1967 = vpack.c.b16 %v1447, %v1395
  %v1968 = vpack.c.b16 %v1448, %v1396
  %v1969 = vpack.c.b16 %v1449, %v1397
  %v1970 = vpack.c.b16 %v1450, %v1398
  %v1971 = vpack.c.b16 %v1451, %v1399
  %v1972 = vpack.c.b16 %v1452, %v1400
  %v1973 = vpack.c.b16 %v1453, %v1401
  %v1974 = vpack.c.b16 %v1454, %v1402
  %v1975 = vpack.c.b16 %v1455, %v1403
  %v1976 = vpack.c.b16 %v1456, %v1404
  %v1977 = vpack.c.b16 %v1457, %v1405
  %v1978 = vpack.c.b16 %v1458, %v1406
  %v1979 = vpack.c.b16 %v1459, %v1407
  %v1980 = vpack.c.b16 %v1460, %v1408
  %v1981 = vpack.c.b16 %v1461, %v1409
  %v1982 = vpack.c.b16 %v1462, %v1410
  %v1983 = vpack.c.b16 %v1463, %v1411
  %v1984 = vpack.c.b16 %v1464, %v1412
  %v1985 = vpack.c.b16 %v1465, %v1413
  %v1986 = vpack.c.b16 %v1466, %v1414
  %v1987 = vpack.c.b16 %v1467, %v1415
  %v1988 = vpack.c.b16 %v1468, %v1416
  %v1989 = vpack.c.b16 %v1469, %v1417
  %v1990 = vpack.c.b16 %v1470, %v1418
  %v1991 = vpack.c.b16 %v1471, %v1419
  %v1992 = vpack.c.b16 %v1472, %v1420
  %v1993 = vpack.c.b16 %v1473, %v1421
  %v1994 = vpack.c.b16 %v1474, %v1422
  %v1995 = vpack.c.b16 %v1475, %v1423
  %v1996 = vpack.c.b16 %v1476, %v1424
  %v1997 = vpack.c.b16 %v1477, %v1425
  %v1998 = vpack.c.b16 %v1530, %v1478
  %v1999 = vpack.c.b16 %v1531, %v1479
  %v2000 = vpack.c.b16 %v1532, %v1480
  %v2001 = vpack.c.b16 %v1533, %v1481
  %v2002 = vpack.c.b16 %v1534, %v1482
  %v2003 = vpack.c.b16 %v1535, %v1483
  %v2004 = vpack.c.b16 %v1536, %v1484
  %v2005 = vpack.c.b16 %v1537, %v1485
  %v2006 = vpack.c.b16 %v1538, %v1486
  %v2007 = vpack.c.b16 %v1539, %v1487
  %v2008 = vpack.c.b16 %v1540, %v1488
  %v2009 = vpack.c.b16 %v1541, %v1489
  %v2010 = vpack.c.b16 %v1542, %v1490
  %v2011 = vpack.c.b16 %v1543, %v1491
  %v2012 = vpack.c.b16 %v1544, %v1492
  %v2013 = vpack.c.b16 %v1545, %v1493
  %v2014 = vpack.c.b16 %v1546, %v1494
  %v2015 = vpack.c.b16 %v1547, %v1495
  %v2016 = vpack.c.b16 %v1548, %v1496
  %v2017 = vpack.c.b16 %v1549, %v1497
  %v2018 = vpack.c.b16 %v1550, %v1498
  %v2019 = vpack.c.b16 %v1551, %v1499
  %v2020 = vpack.c.b16 %v1552, %v1500
  %v2021 = vpack.c.b16 %v1553, %v1501
  %v2022 = vpack.c.b16 %v1554, %v1502
  %v2023 = vpack.c.b16 %v1555, %v1503
  %v2024 = vpack.c.b16 %v1556, %v1504
  %v2025 = vpack.c.b16 %v1557, %v1505
  %v2026 = vpack.c.b16 %v1558, %v1506
  %v2027 = vpack.c.b16 %v1559, %v1507
  %v2028 = vpack.c.b16 %v1560, %v1508
  %v2029 = vpack.c.b16 %v1561, %v1509
  %v2030 = vpack.c.b16 %v1562, %v1510
  %v2031 = vpack.c.b16 %v1563, %v1511
  %v2032 = vpack.c.b16 %v1564, %v1512
  %v2033 = vpack.c.b16 %v1565, %v1513
  %v2034 = vpack.c.b16 %v1566, %v1514
  %v2035 = vpack.c.b16 %v1567, %v1515
  %v2036 = vpack.c.b16 %v1568, %v1516
  %v2037 = vpack.c.b16 %v1569, %v1517
  %v2038 = vpack.c.b16 %v1570, %v1518
  %v2039 = vpack.c.b16 %v1571, %v1519
  %v2040 = vpack.c.b16 %v1572, %v1520
  %v2041 = vpack.c.b16 %v1573, %v1521
  %v2042 = vpack.c.b16 %v1574, %v1522
  %v2043 = vpack.c.b16 %v1575, %v1523
  %v2044 = vpack.c.b16 %v1576, %v1524
  %v2045 = vpack.c.b16 %v1577, %v1525
  %v2046 = vpack.c.b16 %v1578, %v1526
  %v2047 = vpack.c.b16 %v1579, %v1527
  %v2048 = vpack.c.b16 %v1580, %v1528
  %v2049 = vpack.c.b16 %v1581, %v1529
  %v2050 = vpack.c.b16 %v1634, %v1582
  %v2051 = vpack.c.b16 %v1635, %v1583
  %v2052 = vpack.c.b16 %v1636, %v1584
  %v2053 = vpack.c.b16 %v1637, %v1585
  %v2054 = vpack.c.b16 %v1638, %v1586
  %v2055 = vpack.c.b16 %v1639, %v1587
  %v2056 = vpack.c.b16 %v1640, %v1588
  %v2057 = vpack.c.b16 %v1641, %v1589
  %v2058 = vpack.c.b16 %v1642, %v1590
  %v2059 = vpack.c.b16 %v1643, %v1591
  %v2060 = vpack.c.b16 %v1644, %v1592
  %v2061 = vpack.c.b16 %v1645, %v1593
  %v2062 = vpack.c.b16 %v1646, %v1594
  %v2063 = vpack.c.b16 %v1647, %v1595
  %v2064 = vpack.c.b16 %v1648, %v1596
  %v2065 = vpack.c.b16 %v1649, %v1597
  %v2066 = vpack.c.b16 %v1650, %v1598
  %v2067 = vpack.c.b16 %v1651, %v1599
  %v2068 = vpack.c.b16 %v1652, %v1600
  %v2069 = vpack.c.b16 %v1653, %v1601
  %v2070 = vpack.c.b16 %v1654, %v1602
  %v2071 = vpack.c.b16 %v1655, %v1603
  %v2072 = vpack.c.b16 %v1656, %v1604
  %v2073 = vpack.c.b16 %v1657, %v1605
  %v2074 = vpack.c.b16 %v1658, %v1606
  %v2075 = vpack.c.b16 %v1659, %v1607
  %v2076 = vpack.c.b16 %v1660, %v1608
  %v2077 = vpack.c.b16 %v1661, %v1609
  %v2078 = vpack.c.b16 %v1662, %v1610
  %v2079 = vpack.c.b16 %v1663, %v1611
  %v2080 = vpack.c.b16 %v1664, %v1612
  %v2081 = vpack.c.b16 %v1665, %v1613
  %v2082 = vpack.c.b16 %v1666, %v1614
  %v2083 = vpack.c.b16 %v1667, %v1615
  %v2084 = vpack.c.b16 %v1668, %v1616
  %v2085 = vpack.c.b16 %v1669, %v1617
  %v2086 = vpack.c.b16 %v1670, %v1618
  %v2087 = vpack.c.b16 %v1671, %v1619
  %v2088 = vpack.c.b16 %v1672, %v1620
  %v2089 = vpack.c.b16 %v1673, %v1621
  %v2090 = vpack.c.b16 %v1674, %v1622
  %v2091 = vpack.c.b16 %v1675, %v1623
  %v2092 = vpack.c.b16 %v1676, %v1624
  %v2093 = vpack.c.b16 %v1677, %v1625
  %v2094 = vpack.c.b16 %v1678, %v1626
  %v2095 = vpack.c.b16 %v1679, %v1627
  %v2096 = vpack.c.b16 %v1680, %v1628
  %v2097 = vpack.c.b16 %v1681, %v1629
  %v2098 = vpack.c.b16 %v1682, %v1630
  %v2099 = vpack.c.b16 %v1683, %v1631
  %v2100 = vpack.c.b16 %v1684, %v1632
  %v2101 = vpack.c.b16 %v1685, %v1633
  %2518 = vmatpush.bf16.msra.mxu0 %v2050
  %2519 = vmatpush.bf16.msra.mxu0 %v1998
  %2520 = vmatpush.bf16.msra.mxu0 %v1946
  %2521 = vmatpush.bf16.msra.mxu0 %v1894
  %2522 = vmatpush.bf16.msra.mxu0 %v1842
  %2523 = vmatpush.bf16.msra.mxu0 %v1790
  %2524 = vmatpush.bf16.msra.mxu0 %v1738
  %2525 = vmatpush.bf16.msra.mxu0 %v1686
  %2526 = vmatmul.bf16.gmra.mxu0 %v436
  %v2527 = vpop.f32.mrf.mxu0
  %v2528 = vadd.f32 0.0, %v2527
  %v2529 = vpop.f32.mrf.mxu0
  %v2530 = vadd.f32 0.0, %v2529
  %2531 = vdwg.mxu0
  %2532 = vmatpush.bf16.msra.mxu0 %v2051
  %2533 = vmatpush.bf16.msra.mxu0 %v1999
  %2534 = vmatpush.bf16.msra.mxu0 %v1947
  %2535 = vmatpush.bf16.msra.mxu0 %v1895
  %2536 = vmatpush.bf16.msra.mxu0 %v1843
  %2537 = vmatpush.bf16.msra.mxu0 %v1791
  %2538 = vmatpush.bf16.msra.mxu0 %v1739
  %2539 = vmatpush.bf16.msra.mxu0 %v1687
  %2540 = vmatmul.bf16.gmra.mxu0 %v436
  %v2541 = vpop.f32.mrf.mxu0
  %v2542 = vadd.f32 0.0, %v2541
  %v2543 = vpop.f32.mrf.mxu0
  %v2544 = vadd.f32 0.0, %v2543
  %2545 = vdwg.mxu0
  %2546 = vmatpush.bf16.msra.mxu0 %v2052
  %2547 = vmatpush.bf16.msra.mxu0 %v2000
  %2548 = vmatpush.bf16.msra.mxu0 %v1948
  %2549 = vmatpush.bf16.msra.mxu0 %v1896
  %2550 = vmatpush.bf16.msra.mxu0 %v1844
  %2551 = vmatpush.bf16.msra.mxu0 %v1792
  %2552 = vmatpush.bf16.msra.mxu0 %v1740
  %2553 = vmatpush.bf16.msra.mxu0 %v1688
  %2554 = vmatmul.bf16.gmra.mxu0 %v436
  %v2555 = vpop.f32.mrf.mxu0
  %v2556 = vadd.f32 0.0, %v2555
  %v2557 = vpop.f32.mrf.mxu0
  %v2558 = vadd.f32 0.0, %v2557
  %2559 = vdwg.mxu0
  %2560 = vmatpush.bf16.msra.mxu0 %v2053
  %2561 = vmatpush.bf16.msra.mxu0 %v2001
  %2562 = vmatpush.bf16.msra.mxu0 %v1949
  %2563 = vmatpush.bf16.msra.mxu0 %v1897
  %2564 = vmatpush.bf16.msra.mxu0 %v1845
  %2565 = vmatpush.bf16.msra.mxu0 %v1793
  %2566 = vmatpush.bf16.msra.mxu0 %v1741
  %2567 = vmatpush.bf16.msra.mxu0 %v1689
  %2568 = vmatmul.bf16.gmra.mxu0 %v436
  %v2569 = vpop.f32.mrf.mxu0
  %v2570 = vadd.f32 0.0, %v2569
  %v2571 = vpop.f32.mrf.mxu0
  %v2572 = vadd.f32 0.0, %v2571
  %2573 = vdwg.mxu0
  %2574 = vmatpush.bf16.msra.mxu0 %v2054
  %2575 = vmatpush.bf16.msra.mxu0 %v2002
  %2576 = vmatpush.bf16.msra.mxu0 %v1950
  %2577 = vmatpush.bf16.msra.mxu0 %v1898
  %2578 = vmatpush.bf16.msra.mxu0 %v1846
  %2579 = vmatpush.bf16.msra.mxu0 %v1794
  %2580 = vmatpush.bf16.msra.mxu0 %v1742
  %2581 = vmatpush.bf16.msra.mxu0 %v1690
  %2582 = vmatmul.bf16.gmra.mxu0 %v436
  %v2583 = vpop.f32.mrf.mxu0
  %v2584 = vadd.f32 0.0, %v2583
  %v2585 = vpop.f32.mrf.mxu0
  %v2586 = vadd.f32 0.0, %v2585
  %2587 = vdwg.mxu0
  %2588 = vmatpush.bf16.msra.mxu0 %v2055
  %2589 = vmatpush.bf16.msra.mxu0 %v2003
  %2590 = vmatpush.bf16.msra.mxu0 %v1951
  %2591 = vmatpush.bf16.msra.mxu0 %v1899
  %2592 = vmatpush.bf16.msra.mxu0 %v1847
  %2593 = vmatpush.bf16.msra.mxu0 %v1795
  %2594 = vmatpush.bf16.msra.mxu0 %v1743
  %2595 = vmatpush.bf16.msra.mxu0 %v1691
  %2596 = vmatmul.bf16.gmra.mxu0 %v436
  %v2597 = vpop.f32.mrf.mxu0
  %v2598 = vadd.f32 0.0, %v2597
  %v2599 = vpop.f32.mrf.mxu0
  %v2600 = vadd.f32 0.0, %v2599
  %2601 = vdwg.mxu0
  %2602 = vmatpush.bf16.msra.mxu0 %v2056
  %2603 = vmatpush.bf16.msra.mxu0 %v2004
  %2604 = vmatpush.bf16.msra.mxu0 %v1952
  %2605 = vmatpush.bf16.msra.mxu0 %v1900
  %2606 = vmatpush.bf16.msra.mxu0 %v1848
  %2607 = vmatpush.bf16.msra.mxu0 %v1796
  %2608 = vmatpush.bf16.msra.mxu0 %v1744
  %2609 = vmatpush.bf16.msra.mxu0 %v1692
  %2610 = vmatmul.bf16.gmra.mxu0 %v436
  %v2611 = vpop.f32.mrf.mxu0
  %v2612 = vadd.f32 0.0, %v2611
  %v2613 = vpop.f32.mrf.mxu0
  %v2614 = vadd.f32 0.0, %v2613
  %2615 = vdwg.mxu0
  %2616 = vmatpush.bf16.msra.mxu0 %v2057
  %2617 = vmatpush.bf16.msra.mxu0 %v2005
  %2618 = vmatpush.bf16.msra.mxu0 %v1953
  %2619 = vmatpush.bf16.msra.mxu0 %v1901
  %2620 = vmatpush.bf16.msra.mxu0 %v1849
  %2621 = vmatpush.bf16.msra.mxu0 %v1797
  %2622 = vmatpush.bf16.msra.mxu0 %v1745
  %2623 = vmatpush.bf16.msra.mxu0 %v1693
  %2624 = vmatmul.bf16.gmra.mxu0 %v436
  %v2625 = vpop.f32.mrf.mxu0
  %v2626 = vadd.f32 0.0, %v2625
  %v2627 = vpop.f32.mrf.mxu0
  %v2628 = vadd.f32 0.0, %v2627
  %2629 = vdwg.mxu0
  %2630 = vmatpush.bf16.msra.mxu0 %v2058
  %2631 = vmatpush.bf16.msra.mxu0 %v2006
  %2632 = vmatpush.bf16.msra.mxu0 %v1954
  %2633 = vmatpush.bf16.msra.mxu0 %v1902
  %2634 = vmatpush.bf16.msra.mxu0 %v1850
  %2635 = vmatpush.bf16.msra.mxu0 %v1798
  %2636 = vmatpush.bf16.msra.mxu0 %v1746
  %2637 = vmatpush.bf16.msra.mxu0 %v1694
  %2638 = vmatmul.bf16.gmra.mxu0 %v436
  %v2639 = vpop.f32.mrf.mxu0
  %v2640 = vadd.f32 0.0, %v2639
  %v2641 = vpop.f32.mrf.mxu0
  %v2642 = vadd.f32 0.0, %v2641
  %2643 = vdwg.mxu0
  %2644 = vmatpush.bf16.msra.mxu0 %v2059
  %2645 = vmatpush.bf16.msra.mxu0 %v2007
  %2646 = vmatpush.bf16.msra.mxu0 %v1955
  %2647 = vmatpush.bf16.msra.mxu0 %v1903
  %2648 = vmatpush.bf16.msra.mxu0 %v1851
  %2649 = vmatpush.bf16.msra.mxu0 %v1799
  %2650 = vmatpush.bf16.msra.mxu0 %v1747
  %2651 = vmatpush.bf16.msra.mxu0 %v1695
  %2652 = vmatmul.bf16.gmra.mxu0 %v436
  %v2653 = vpop.f32.mrf.mxu0
  %v2654 = vadd.f32 0.0, %v2653
  %v2655 = vpop.f32.mrf.mxu0
  %v2656 = vadd.f32 0.0, %v2655
  %2657 = vdwg.mxu0
  %2658 = vmatpush.bf16.msra.mxu0 %v2060
  %2659 = vmatpush.bf16.msra.mxu0 %v2008
  %2660 = vmatpush.bf16.msra.mxu0 %v1956
  %2661 = vmatpush.bf16.msra.mxu0 %v1904
  %2662 = vmatpush.bf16.msra.mxu0 %v1852
  %2663 = vmatpush.bf16.msra.mxu0 %v1800
  %2664 = vmatpush.bf16.msra.mxu0 %v1748
  %2665 = vmatpush.bf16.msra.mxu0 %v1696
  %2666 = vmatmul.bf16.gmra.mxu0 %v436
  %v2667 = vpop.f32.mrf.mxu0
  %v2668 = vadd.f32 0.0, %v2667
  %v2669 = vpop.f32.mrf.mxu0
  %v2670 = vadd.f32 0.0, %v2669
  %2671 = vdwg.mxu0
  %2672 = vmatpush.bf16.msra.mxu0 %v2061
  %2673 = vmatpush.bf16.msra.mxu0 %v2009
  %2674 = vmatpush.bf16.msra.mxu0 %v1957
  %2675 = vmatpush.bf16.msra.mxu0 %v1905
  %2676 = vmatpush.bf16.msra.mxu0 %v1853
  %2677 = vmatpush.bf16.msra.mxu0 %v1801
  %2678 = vmatpush.bf16.msra.mxu0 %v1749
  %2679 = vmatpush.bf16.msra.mxu0 %v1697
  %2680 = vmatmul.bf16.gmra.mxu0 %v436
  %v2681 = vpop.f32.mrf.mxu0
  %v2682 = vadd.f32 0.0, %v2681
  %v2683 = vpop.f32.mrf.mxu0
  %v2684 = vadd.f32 0.0, %v2683
  %2685 = vdwg.mxu0
  %2686 = vmatpush.bf16.msra.mxu0 %v2062
  %2687 = vmatpush.bf16.msra.mxu0 %v2010
  %2688 = vmatpush.bf16.msra.mxu0 %v1958
  %2689 = vmatpush.bf16.msra.mxu0 %v1906
  %2690 = vmatpush.bf16.msra.mxu0 %v1854
  %2691 = vmatpush.bf16.msra.mxu0 %v1802
  %2692 = vmatpush.bf16.msra.mxu0 %v1750
  %2693 = vmatpush.bf16.msra.mxu0 %v1698
  %2694 = vmatmul.bf16.gmra.mxu0 %v436
  %v2695 = vpop.f32.mrf.mxu0
  %v2696 = vadd.f32 0.0, %v2695
  %v2697 = vpop.f32.mrf.mxu0
  %v2698 = vadd.f32 0.0, %v2697
  %2699 = vdwg.mxu0
  %2700 = vmatpush.bf16.msra.mxu0 %v2063
  %2701 = vmatpush.bf16.msra.mxu0 %v2011
  %2702 = vmatpush.bf16.msra.mxu0 %v1959
  %2703 = vmatpush.bf16.msra.mxu0 %v1907
  %2704 = vmatpush.bf16.msra.mxu0 %v1855
  %2705 = vmatpush.bf16.msra.mxu0 %v1803
  %2706 = vmatpush.bf16.msra.mxu0 %v1751
  %2707 = vmatpush.bf16.msra.mxu0 %v1699
  %2708 = vmatmul.bf16.gmra.mxu0 %v436
  %v2709 = vpop.f32.mrf.mxu0
  %v2710 = vadd.f32 0.0, %v2709
  %v2711 = vpop.f32.mrf.mxu0
  %v2712 = vadd.f32 0.0, %v2711
  %2713 = vdwg.mxu0
  %2714 = vmatpush.bf16.msra.mxu0 %v2064
  %2715 = vmatpush.bf16.msra.mxu0 %v2012
  %2716 = vmatpush.bf16.msra.mxu0 %v1960
  %2717 = vmatpush.bf16.msra.mxu0 %v1908
  %2718 = vmatpush.bf16.msra.mxu0 %v1856
  %2719 = vmatpush.bf16.msra.mxu0 %v1804
  %2720 = vmatpush.bf16.msra.mxu0 %v1752
  %2721 = vmatpush.bf16.msra.mxu0 %v1700
  %2722 = vmatmul.bf16.gmra.mxu0 %v436
  %v2723 = vpop.f32.mrf.mxu0
  %v2724 = vadd.f32 0.0, %v2723
  %v2725 = vpop.f32.mrf.mxu0
  %v2726 = vadd.f32 0.0, %v2725
  %2727 = vdwg.mxu0
  %2728 = vmatpush.bf16.msra.mxu0 %v2065
  %2729 = vmatpush.bf16.msra.mxu0 %v2013
  %2730 = vmatpush.bf16.msra.mxu0 %v1961
  %2731 = vmatpush.bf16.msra.mxu0 %v1909
  %2732 = vmatpush.bf16.msra.mxu0 %v1857
  %2733 = vmatpush.bf16.msra.mxu0 %v1805
  %2734 = vmatpush.bf16.msra.mxu0 %v1753
  %2735 = vmatpush.bf16.msra.mxu0 %v1701
  %2736 = vmatmul.bf16.gmra.mxu0 %v436
  %v2737 = vpop.f32.mrf.mxu0
  %v2738 = vadd.f32 0.0, %v2737
  %v2739 = vpop.f32.mrf.mxu0
  %v2740 = vadd.f32 0.0, %v2739
  %2741 = vdwg.mxu0
  %2742 = vmatpush.bf16.msra.mxu0 %v2066
  %2743 = vmatpush.bf16.msra.mxu0 %v2014
  %2744 = vmatpush.bf16.msra.mxu0 %v1962
  %2745 = vmatpush.bf16.msra.mxu0 %v1910
  %2746 = vmatpush.bf16.msra.mxu0 %v1858
  %2747 = vmatpush.bf16.msra.mxu0 %v1806
  %2748 = vmatpush.bf16.msra.mxu0 %v1754
  %2749 = vmatpush.bf16.msra.mxu0 %v1702
  %2750 = vmatmul.bf16.gmra.mxu0 %v436
  %v2751 = vpop.f32.mrf.mxu0
  %v2752 = vadd.f32 0.0, %v2751
  %v2753 = vpop.f32.mrf.mxu0
  %v2754 = vadd.f32 0.0, %v2753
  %2755 = vdwg.mxu0
  %2756 = vmatpush.bf16.msra.mxu0 %v2067
  %2757 = vmatpush.bf16.msra.mxu0 %v2015
  %2758 = vmatpush.bf16.msra.mxu0 %v1963
  %2759 = vmatpush.bf16.msra.mxu0 %v1911
  %2760 = vmatpush.bf16.msra.mxu0 %v1859
  %2761 = vmatpush.bf16.msra.mxu0 %v1807
  %2762 = vmatpush.bf16.msra.mxu0 %v1755
  %2763 = vmatpush.bf16.msra.mxu0 %v1703
  %2764 = vmatmul.bf16.gmra.mxu0 %v436
  %v2765 = vpop.f32.mrf.mxu0
  %v2766 = vadd.f32 0.0, %v2765
  %v2767 = vpop.f32.mrf.mxu0
  %v2768 = vadd.f32 0.0, %v2767
  %2769 = vdwg.mxu0
  %2770 = vmatpush.bf16.msra.mxu0 %v2068
  %2771 = vmatpush.bf16.msra.mxu0 %v2016
  %2772 = vmatpush.bf16.msra.mxu0 %v1964
  %2773 = vmatpush.bf16.msra.mxu0 %v1912
  %2774 = vmatpush.bf16.msra.mxu0 %v1860
  %2775 = vmatpush.bf16.msra.mxu0 %v1808
  %2776 = vmatpush.bf16.msra.mxu0 %v1756
  %2777 = vmatpush.bf16.msra.mxu0 %v1704
  %2778 = vmatmul.bf16.gmra.mxu0 %v436
  %v2779 = vpop.f32.mrf.mxu0
  %v2780 = vadd.f32 0.0, %v2779
  %v2781 = vpop.f32.mrf.mxu0
  %v2782 = vadd.f32 0.0, %v2781
  %2783 = vdwg.mxu0
  %2784 = vmatpush.bf16.msra.mxu0 %v2069
  %2785 = vmatpush.bf16.msra.mxu0 %v2017
  %2786 = vmatpush.bf16.msra.mxu0 %v1965
  %2787 = vmatpush.bf16.msra.mxu0 %v1913
  %2788 = vmatpush.bf16.msra.mxu0 %v1861
  %2789 = vmatpush.bf16.msra.mxu0 %v1809
  %2790 = vmatpush.bf16.msra.mxu0 %v1757
  %2791 = vmatpush.bf16.msra.mxu0 %v1705
  %2792 = vmatmul.bf16.gmra.mxu0 %v436
  %v2793 = vpop.f32.mrf.mxu0
  %v2794 = vadd.f32 0.0, %v2793
  %v2795 = vpop.f32.mrf.mxu0
  %v2796 = vadd.f32 0.0, %v2795
  %2797 = vdwg.mxu0
  %2798 = vmatpush.bf16.msra.mxu0 %v2070
  %2799 = vmatpush.bf16.msra.mxu0 %v2018
  %2800 = vmatpush.bf16.msra.mxu0 %v1966
  %2801 = vmatpush.bf16.msra.mxu0 %v1914
  %2802 = vmatpush.bf16.msra.mxu0 %v1862
  %2803 = vmatpush.bf16.msra.mxu0 %v1810
  %2804 = vmatpush.bf16.msra.mxu0 %v1758
  %2805 = vmatpush.bf16.msra.mxu0 %v1706
  %2806 = vmatmul.bf16.gmra.mxu0 %v436
  %v2807 = vpop.f32.mrf.mxu0
  %v2808 = vadd.f32 0.0, %v2807
  %v2809 = vpop.f32.mrf.mxu0
  %v2810 = vadd.f32 0.0, %v2809
  %2811 = vdwg.mxu0
  %2812 = vmatpush.bf16.msra.mxu0 %v2071
  %2813 = vmatpush.bf16.msra.mxu0 %v2019
  %2814 = vmatpush.bf16.msra.mxu0 %v1967
  %2815 = vmatpush.bf16.msra.mxu0 %v1915
  %2816 = vmatpush.bf16.msra.mxu0 %v1863
  %2817 = vmatpush.bf16.msra.mxu0 %v1811
  %2818 = vmatpush.bf16.msra.mxu0 %v1759
  %2819 = vmatpush.bf16.msra.mxu0 %v1707
  %2820 = vmatmul.bf16.gmra.mxu0 %v436
  %v2821 = vpop.f32.mrf.mxu0
  %v2822 = vadd.f32 0.0, %v2821
  %v2823 = vpop.f32.mrf.mxu0
  %v2824 = vadd.f32 0.0, %v2823
  %2825 = vdwg.mxu0
  %2826 = vmatpush.bf16.msra.mxu0 %v2072
  %2827 = vmatpush.bf16.msra.mxu0 %v2020
  %2828 = vmatpush.bf16.msra.mxu0 %v1968
  %2829 = vmatpush.bf16.msra.mxu0 %v1916
  %2830 = vmatpush.bf16.msra.mxu0 %v1864
  %2831 = vmatpush.bf16.msra.mxu0 %v1812
  %2832 = vmatpush.bf16.msra.mxu0 %v1760
  %2833 = vmatpush.bf16.msra.mxu0 %v1708
  %2834 = vmatmul.bf16.gmra.mxu0 %v436
  %v2835 = vpop.f32.mrf.mxu0
  %v2836 = vadd.f32 0.0, %v2835
  %v2837 = vpop.f32.mrf.mxu0
  %v2838 = vadd.f32 0.0, %v2837
  %2839 = vdwg.mxu0
  %2840 = vmatpush.bf16.msra.mxu0 %v2073
  %2841 = vmatpush.bf16.msra.mxu0 %v2021
  %2842 = vmatpush.bf16.msra.mxu0 %v1969
  %2843 = vmatpush.bf16.msra.mxu0 %v1917
  %2844 = vmatpush.bf16.msra.mxu0 %v1865
  %2845 = vmatpush.bf16.msra.mxu0 %v1813
  %2846 = vmatpush.bf16.msra.mxu0 %v1761
  %2847 = vmatpush.bf16.msra.mxu0 %v1709
  %2848 = vmatmul.bf16.gmra.mxu0 %v436
  %v2849 = vpop.f32.mrf.mxu0
  %v2850 = vadd.f32 0.0, %v2849
  %v2851 = vpop.f32.mrf.mxu0
  %v2852 = vadd.f32 0.0, %v2851
  %2853 = vdwg.mxu0
  %2854 = vmatpush.bf16.msra.mxu0 %v2074
  %2855 = vmatpush.bf16.msra.mxu0 %v2022
  %2856 = vmatpush.bf16.msra.mxu0 %v1970
  %2857 = vmatpush.bf16.msra.mxu0 %v1918
  %2858 = vmatpush.bf16.msra.mxu0 %v1866
  %2859 = vmatpush.bf16.msra.mxu0 %v1814
  %2860 = vmatpush.bf16.msra.mxu0 %v1762
  %2861 = vmatpush.bf16.msra.mxu0 %v1710
  %2862 = vmatmul.bf16.gmra.mxu0 %v436
  %v2863 = vpop.f32.mrf.mxu0
  %v2864 = vadd.f32 0.0, %v2863
  %v2865 = vpop.f32.mrf.mxu0
  %v2866 = vadd.f32 0.0, %v2865
  %2867 = vdwg.mxu0
  %2868 = vmatpush.bf16.msra.mxu0 %v2075
  %2869 = vmatpush.bf16.msra.mxu0 %v2023
  %2870 = vmatpush.bf16.msra.mxu0 %v1971
  %2871 = vmatpush.bf16.msra.mxu0 %v1919
  %2872 = vmatpush.bf16.msra.mxu0 %v1867
  %2873 = vmatpush.bf16.msra.mxu0 %v1815
  %2874 = vmatpush.bf16.msra.mxu0 %v1763
  %2875 = vmatpush.bf16.msra.mxu0 %v1711
  %2876 = vmatmul.bf16.gmra.mxu0 %v436
  %v2877 = vpop.f32.mrf.mxu0
  %v2878 = vadd.f32 0.0, %v2877
  %v2879 = vpop.f32.mrf.mxu0
  %v2880 = vadd.f32 0.0, %v2879
  %2881 = vdwg.mxu0
  %2882 = vmatpush.bf16.msra.mxu0 %v2076
  %2883 = vmatpush.bf16.msra.mxu0 %v2024
  %2884 = vmatpush.bf16.msra.mxu0 %v1972
  %2885 = vmatpush.bf16.msra.mxu0 %v1920
  %2886 = vmatpush.bf16.msra.mxu0 %v1868
  %2887 = vmatpush.bf16.msra.mxu0 %v1816
  %2888 = vmatpush.bf16.msra.mxu0 %v1764
  %2889 = vmatpush.bf16.msra.mxu0 %v1712
  %2890 = vmatmul.bf16.gmra.mxu0 %v436
  %v2891 = vpop.f32.mrf.mxu0
  %v2892 = vadd.f32 0.0, %v2891
  %v2893 = vpop.f32.mrf.mxu0
  %v2894 = vadd.f32 0.0, %v2893
  %2895 = vdwg.mxu0
  %2896 = vmatpush.bf16.msra.mxu0 %v2077
  %2897 = vmatpush.bf16.msra.mxu0 %v2025
  %2898 = vmatpush.bf16.msra.mxu0 %v1973
  %2899 = vmatpush.bf16.msra.mxu0 %v1921
  %2900 = vmatpush.bf16.msra.mxu0 %v1869
  %2901 = vmatpush.bf16.msra.mxu0 %v1817
  %2902 = vmatpush.bf16.msra.mxu0 %v1765
  %2903 = vmatpush.bf16.msra.mxu0 %v1713
  %2904 = vmatmul.bf16.gmra.mxu0 %v436
  %v2905 = vpop.f32.mrf.mxu0
  %v2906 = vadd.f32 0.0, %v2905
  %v2907 = vpop.f32.mrf.mxu0
  %v2908 = vadd.f32 0.0, %v2907
  %2909 = vdwg.mxu0
  %2910 = vmatpush.bf16.msra.mxu0 %v2078
  %2911 = vmatpush.bf16.msra.mxu0 %v2026
  %2912 = vmatpush.bf16.msra.mxu0 %v1974
  %2913 = vmatpush.bf16.msra.mxu0 %v1922
  %2914 = vmatpush.bf16.msra.mxu0 %v1870
  %2915 = vmatpush.bf16.msra.mxu0 %v1818
  %2916 = vmatpush.bf16.msra.mxu0 %v1766
  %2917 = vmatpush.bf16.msra.mxu0 %v1714
  %2918 = vmatmul.bf16.gmra.mxu0 %v436
  %v2919 = vpop.f32.mrf.mxu0
  %v2920 = vadd.f32 0.0, %v2919
  %v2921 = vpop.f32.mrf.mxu0
  %v2922 = vadd.f32 0.0, %v2921
  %2923 = vdwg.mxu0
  %2924 = vmatpush.bf16.msra.mxu0 %v2079
  %2925 = vmatpush.bf16.msra.mxu0 %v2027
  %2926 = vmatpush.bf16.msra.mxu0 %v1975
  %2927 = vmatpush.bf16.msra.mxu0 %v1923
  %2928 = vmatpush.bf16.msra.mxu0 %v1871
  %2929 = vmatpush.bf16.msra.mxu0 %v1819
  %2930 = vmatpush.bf16.msra.mxu0 %v1767
  %2931 = vmatpush.bf16.msra.mxu0 %v1715
  %2932 = vmatmul.bf16.gmra.mxu0 %v436
  %v2933 = vpop.f32.mrf.mxu0
  %v2934 = vadd.f32 0.0, %v2933
  %v2935 = vpop.f32.mrf.mxu0
  %v2936 = vadd.f32 0.0, %v2935
  %2937 = vdwg.mxu0
  %2938 = vmatpush.bf16.msra.mxu0 %v2080
  %2939 = vmatpush.bf16.msra.mxu0 %v2028
  %2940 = vmatpush.bf16.msra.mxu0 %v1976
  %2941 = vmatpush.bf16.msra.mxu0 %v1924
  %2942 = vmatpush.bf16.msra.mxu0 %v1872
  %2943 = vmatpush.bf16.msra.mxu0 %v1820
  %2944 = vmatpush.bf16.msra.mxu0 %v1768
  %2945 = vmatpush.bf16.msra.mxu0 %v1716
  %2946 = vmatmul.bf16.gmra.mxu0 %v436
  %v2947 = vpop.f32.mrf.mxu0
  %v2948 = vadd.f32 0.0, %v2947
  %v2949 = vpop.f32.mrf.mxu0
  %v2950 = vadd.f32 0.0, %v2949
  %2951 = vdwg.mxu0
  %2952 = vmatpush.bf16.msra.mxu0 %v2081
  %2953 = vmatpush.bf16.msra.mxu0 %v2029
  %2954 = vmatpush.bf16.msra.mxu0 %v1977
  %2955 = vmatpush.bf16.msra.mxu0 %v1925
  %2956 = vmatpush.bf16.msra.mxu0 %v1873
  %2957 = vmatpush.bf16.msra.mxu0 %v1821
  %2958 = vmatpush.bf16.msra.mxu0 %v1769
  %2959 = vmatpush.bf16.msra.mxu0 %v1717
  %2960 = vmatmul.bf16.gmra.mxu0 %v436
  %v2961 = vpop.f32.mrf.mxu0
  %v2962 = vadd.f32 0.0, %v2961
  %v2963 = vpop.f32.mrf.mxu0
  %v2964 = vadd.f32 0.0, %v2963
  %2965 = vdwg.mxu0
  %2966 = vmatpush.bf16.msra.mxu0 %v2082
  %2967 = vmatpush.bf16.msra.mxu0 %v2030
  %2968 = vmatpush.bf16.msra.mxu0 %v1978
  %2969 = vmatpush.bf16.msra.mxu0 %v1926
  %2970 = vmatpush.bf16.msra.mxu0 %v1874
  %2971 = vmatpush.bf16.msra.mxu0 %v1822
  %2972 = vmatpush.bf16.msra.mxu0 %v1770
  %2973 = vmatpush.bf16.msra.mxu0 %v1718
  %2974 = vmatmul.bf16.gmra.mxu0 %v436
  %v2975 = vpop.f32.mrf.mxu0
  %v2976 = vadd.f32 0.0, %v2975
  %v2977 = vpop.f32.mrf.mxu0
  %v2978 = vadd.f32 0.0, %v2977
  %2979 = vdwg.mxu0
  %2980 = vmatpush.bf16.msra.mxu0 %v2083
  %2981 = vmatpush.bf16.msra.mxu0 %v2031
  %2982 = vmatpush.bf16.msra.mxu0 %v1979
  %2983 = vmatpush.bf16.msra.mxu0 %v1927
  %2984 = vmatpush.bf16.msra.mxu0 %v1875
  %2985 = vmatpush.bf16.msra.mxu0 %v1823
  %2986 = vmatpush.bf16.msra.mxu0 %v1771
  %2987 = vmatpush.bf16.msra.mxu0 %v1719
  %2988 = vmatmul.bf16.gmra.mxu0 %v436
  %v2989 = vpop.f32.mrf.mxu0
  %v2990 = vadd.f32 0.0, %v2989
  %v2991 = vpop.f32.mrf.mxu0
  %v2992 = vadd.f32 0.0, %v2991
  %2993 = vdwg.mxu0
  %2994 = vmatpush.bf16.msra.mxu0 %v2084
  %2995 = vmatpush.bf16.msra.mxu0 %v2032
  %2996 = vmatpush.bf16.msra.mxu0 %v1980
  %2997 = vmatpush.bf16.msra.mxu0 %v1928
  %2998 = vmatpush.bf16.msra.mxu0 %v1876
  %2999 = vmatpush.bf16.msra.mxu0 %v1824
  %3000 = vmatpush.bf16.msra.mxu0 %v1772
  %3001 = vmatpush.bf16.msra.mxu0 %v1720
  %3002 = vmatmul.bf16.gmra.mxu0 %v436
  %v3003 = vpop.f32.mrf.mxu0
  %v3004 = vadd.f32 0.0, %v3003
  %v3005 = vpop.f32.mrf.mxu0
  %v3006 = vadd.f32 0.0, %v3005
  %3007 = vdwg.mxu0
  %3008 = vmatpush.bf16.msra.mxu0 %v2085
  %3009 = vmatpush.bf16.msra.mxu0 %v2033
  %3010 = vmatpush.bf16.msra.mxu0 %v1981
  %3011 = vmatpush.bf16.msra.mxu0 %v1929
  %3012 = vmatpush.bf16.msra.mxu0 %v1877
  %3013 = vmatpush.bf16.msra.mxu0 %v1825
  %3014 = vmatpush.bf16.msra.mxu0 %v1773
  %3015 = vmatpush.bf16.msra.mxu0 %v1721
  %3016 = vmatmul.bf16.gmra.mxu0 %v436
  %v3017 = vpop.f32.mrf.mxu0
  %v3018 = vadd.f32 0.0, %v3017
  %v3019 = vpop.f32.mrf.mxu0
  %v3020 = vadd.f32 0.0, %v3019
  %3021 = vdwg.mxu0
  %3022 = vmatpush.bf16.msra.mxu0 %v2086
  %3023 = vmatpush.bf16.msra.mxu0 %v2034
  %3024 = vmatpush.bf16.msra.mxu0 %v1982
  %3025 = vmatpush.bf16.msra.mxu0 %v1930
  %3026 = vmatpush.bf16.msra.mxu0 %v1878
  %3027 = vmatpush.bf16.msra.mxu0 %v1826
  %3028 = vmatpush.bf16.msra.mxu0 %v1774
  %3029 = vmatpush.bf16.msra.mxu0 %v1722
  %3030 = vmatmul.bf16.gmra.mxu0 %v436
  %v3031 = vpop.f32.mrf.mxu0
  %v3032 = vadd.f32 0.0, %v3031
  %v3033 = vpop.f32.mrf.mxu0
  %v3034 = vadd.f32 0.0, %v3033
  %3035 = vdwg.mxu0
  %3036 = vmatpush.bf16.msra.mxu0 %v2087
  %3037 = vmatpush.bf16.msra.mxu0 %v2035
  %3038 = vmatpush.bf16.msra.mxu0 %v1983
  %3039 = vmatpush.bf16.msra.mxu0 %v1931
  %3040 = vmatpush.bf16.msra.mxu0 %v1879
  %3041 = vmatpush.bf16.msra.mxu0 %v1827
  %3042 = vmatpush.bf16.msra.mxu0 %v1775
  %3043 = vmatpush.bf16.msra.mxu0 %v1723
  %3044 = vmatmul.bf16.gmra.mxu0 %v436
  %v3045 = vpop.f32.mrf.mxu0
  %v3046 = vadd.f32 0.0, %v3045
  %v3047 = vpop.f32.mrf.mxu0
  %v3048 = vadd.f32 0.0, %v3047
  %3049 = vdwg.mxu0
  %3050 = vmatpush.bf16.msra.mxu0 %v2088
  %3051 = vmatpush.bf16.msra.mxu0 %v2036
  %3052 = vmatpush.bf16.msra.mxu0 %v1984
  %3053 = vmatpush.bf16.msra.mxu0 %v1932
  %3054 = vmatpush.bf16.msra.mxu0 %v1880
  %3055 = vmatpush.bf16.msra.mxu0 %v1828
  %3056 = vmatpush.bf16.msra.mxu0 %v1776
  %3057 = vmatpush.bf16.msra.mxu0 %v1724
  %3058 = vmatmul.bf16.gmra.mxu0 %v436
  %v3059 = vpop.f32.mrf.mxu0
  %v3060 = vadd.f32 0.0, %v3059
  %v3061 = vpop.f32.mrf.mxu0
  %v3062 = vadd.f32 0.0, %v3061
  %3063 = vdwg.mxu0
  %3064 = vmatpush.bf16.msra.mxu0 %v2089
  %3065 = vmatpush.bf16.msra.mxu0 %v2037
  %3066 = vmatpush.bf16.msra.mxu0 %v1985
  %3067 = vmatpush.bf16.msra.mxu0 %v1933
  %3068 = vmatpush.bf16.msra.mxu0 %v1881
  %3069 = vmatpush.bf16.msra.mxu0 %v1829
  %3070 = vmatpush.bf16.msra.mxu0 %v1777
  %3071 = vmatpush.bf16.msra.mxu0 %v1725
  %3072 = vmatmul.bf16.gmra.mxu0 %v436
  %v3073 = vpop.f32.mrf.mxu0
  %v3074 = vadd.f32 0.0, %v3073
  %v3075 = vpop.f32.mrf.mxu0
  %v3076 = vadd.f32 0.0, %v3075
  %3077 = vdwg.mxu0
  %3078 = vmatpush.bf16.msra.mxu0 %v2090
  %3079 = vmatpush.bf16.msra.mxu0 %v2038
  %3080 = vmatpush.bf16.msra.mxu0 %v1986
  %3081 = vmatpush.bf16.msra.mxu0 %v1934
  %3082 = vmatpush.bf16.msra.mxu0 %v1882
  %3083 = vmatpush.bf16.msra.mxu0 %v1830
  %3084 = vmatpush.bf16.msra.mxu0 %v1778
  %3085 = vmatpush.bf16.msra.mxu0 %v1726
  %3086 = vmatmul.bf16.gmra.mxu0 %v436
  %v3087 = vpop.f32.mrf.mxu0
  %v3088 = vadd.f32 0.0, %v3087
  %v3089 = vpop.f32.mrf.mxu0
  %v3090 = vadd.f32 0.0, %v3089
  %3091 = vdwg.mxu0
  %3092 = vmatpush.bf16.msra.mxu0 %v2091
  %3093 = vmatpush.bf16.msra.mxu0 %v2039
  %3094 = vmatpush.bf16.msra.mxu0 %v1987
  %3095 = vmatpush.bf16.msra.mxu0 %v1935
  %3096 = vmatpush.bf16.msra.mxu0 %v1883
  %3097 = vmatpush.bf16.msra.mxu0 %v1831
  %3098 = vmatpush.bf16.msra.mxu0 %v1779
  %3099 = vmatpush.bf16.msra.mxu0 %v1727
  %3100 = vmatmul.bf16.gmra.mxu0 %v436
  %v3101 = vpop.f32.mrf.mxu0
  %v3102 = vadd.f32 0.0, %v3101
  %v3103 = vpop.f32.mrf.mxu0
  %v3104 = vadd.f32 0.0, %v3103
  %3105 = vdwg.mxu0
  %3106 = vmatpush.bf16.msra.mxu0 %v2092
  %3107 = vmatpush.bf16.msra.mxu0 %v2040
  %3108 = vmatpush.bf16.msra.mxu0 %v1988
  %3109 = vmatpush.bf16.msra.mxu0 %v1936
  %3110 = vmatpush.bf16.msra.mxu0 %v1884
  %3111 = vmatpush.bf16.msra.mxu0 %v1832
  %3112 = vmatpush.bf16.msra.mxu0 %v1780
  %3113 = vmatpush.bf16.msra.mxu0 %v1728
  %3114 = vmatmul.bf16.gmra.mxu0 %v436
  %v3115 = vpop.f32.mrf.mxu0
  %v3116 = vadd.f32 0.0, %v3115
  %v3117 = vpop.f32.mrf.mxu0
  %v3118 = vadd.f32 0.0, %v3117
  %3119 = vdwg.mxu0
  %3120 = vmatpush.bf16.msra.mxu0 %v2093
  %3121 = vmatpush.bf16.msra.mxu0 %v2041
  %3122 = vmatpush.bf16.msra.mxu0 %v1989
  %3123 = vmatpush.bf16.msra.mxu0 %v1937
  %3124 = vmatpush.bf16.msra.mxu0 %v1885
  %3125 = vmatpush.bf16.msra.mxu0 %v1833
  %3126 = vmatpush.bf16.msra.mxu0 %v1781
  %3127 = vmatpush.bf16.msra.mxu0 %v1729
  %3128 = vmatmul.bf16.gmra.mxu0 %v436
  %v3129 = vpop.f32.mrf.mxu0
  %v3130 = vadd.f32 0.0, %v3129
  %v3131 = vpop.f32.mrf.mxu0
  %v3132 = vadd.f32 0.0, %v3131
  %3133 = vdwg.mxu0
  %3134 = vmatpush.bf16.msra.mxu0 %v2094
  %3135 = vmatpush.bf16.msra.mxu0 %v2042
  %3136 = vmatpush.bf16.msra.mxu0 %v1990
  %3137 = vmatpush.bf16.msra.mxu0 %v1938
  %3138 = vmatpush.bf16.msra.mxu0 %v1886
  %3139 = vmatpush.bf16.msra.mxu0 %v1834
  %3140 = vmatpush.bf16.msra.mxu0 %v1782
  %3141 = vmatpush.bf16.msra.mxu0 %v1730
  %3142 = vmatmul.bf16.gmra.mxu0 %v436
  %v3143 = vpop.f32.mrf.mxu0
  %v3144 = vadd.f32 0.0, %v3143
  %v3145 = vpop.f32.mrf.mxu0
  %v3146 = vadd.f32 0.0, %v3145
  %3147 = vdwg.mxu0
  %3148 = vmatpush.bf16.msra.mxu0 %v2095
  %3149 = vmatpush.bf16.msra.mxu0 %v2043
  %3150 = vmatpush.bf16.msra.mxu0 %v1991
  %3151 = vmatpush.bf16.msra.mxu0 %v1939
  %3152 = vmatpush.bf16.msra.mxu0 %v1887
  %3153 = vmatpush.bf16.msra.mxu0 %v1835
  %3154 = vmatpush.bf16.msra.mxu0 %v1783
  %3155 = vmatpush.bf16.msra.mxu0 %v1731
  %3156 = vmatmul.bf16.gmra.mxu0 %v436
  %v3157 = vpop.f32.mrf.mxu0
  %v3158 = vadd.f32 0.0, %v3157
  %v3159 = vpop.f32.mrf.mxu0
  %v3160 = vadd.f32 0.0, %v3159
  %3161 = vdwg.mxu0
  %3162 = vmatpush.bf16.msra.mxu0 %v2096
  %3163 = vmatpush.bf16.msra.mxu0 %v2044
  %3164 = vmatpush.bf16.msra.mxu0 %v1992
  %3165 = vmatpush.bf16.msra.mxu0 %v1940
  %3166 = vmatpush.bf16.msra.mxu0 %v1888
  %3167 = vmatpush.bf16.msra.mxu0 %v1836
  %3168 = vmatpush.bf16.msra.mxu0 %v1784
  %3169 = vmatpush.bf16.msra.mxu0 %v1732
  %3170 = vmatmul.bf16.gmra.mxu0 %v436
  %v3171 = vpop.f32.mrf.mxu0
  %v3172 = vadd.f32 0.0, %v3171
  %v3173 = vpop.f32.mrf.mxu0
  %v3174 = vadd.f32 0.0, %v3173
  %3175 = vdwg.mxu0
  %3176 = vmatpush.bf16.msra.mxu0 %v2097
  %3177 = vmatpush.bf16.msra.mxu0 %v2045
  %3178 = vmatpush.bf16.msra.mxu0 %v1993
  %3179 = vmatpush.bf16.msra.mxu0 %v1941
  %3180 = vmatpush.bf16.msra.mxu0 %v1889
  %3181 = vmatpush.bf16.msra.mxu0 %v1837
  %3182 = vmatpush.bf16.msra.mxu0 %v1785
  %3183 = vmatpush.bf16.msra.mxu0 %v1733
  %3184 = vmatmul.bf16.gmra.mxu0 %v436
  %v3185 = vpop.f32.mrf.mxu0
  %v3186 = vadd.f32 0.0, %v3185
  %v3187 = vpop.f32.mrf.mxu0
  %v3188 = vadd.f32 0.0, %v3187
  %3189 = vdwg.mxu0
  %3190 = vmatpush.bf16.msra.mxu0 %v2098
  %3191 = vmatpush.bf16.msra.mxu0 %v2046
  %3192 = vmatpush.bf16.msra.mxu0 %v1994
  %3193 = vmatpush.bf16.msra.mxu0 %v1942
  %3194 = vmatpush.bf16.msra.mxu0 %v1890
  %3195 = vmatpush.bf16.msra.mxu0 %v1838
  %3196 = vmatpush.bf16.msra.mxu0 %v1786
  %3197 = vmatpush.bf16.msra.mxu0 %v1734
  %3198 = vmatmul.bf16.gmra.mxu0 %v436
  %v3199 = vpop.f32.mrf.mxu0
  %v3200 = vadd.f32 0.0, %v3199
  %v3201 = vpop.f32.mrf.mxu0
  %v3202 = vadd.f32 0.0, %v3201
  %3203 = vdwg.mxu0
  %3204 = vmatpush.bf16.msra.mxu0 %v2099
  %3205 = vmatpush.bf16.msra.mxu0 %v2047
  %3206 = vmatpush.bf16.msra.mxu0 %v1995
  %3207 = vmatpush.bf16.msra.mxu0 %v1943
  %3208 = vmatpush.bf16.msra.mxu0 %v1891
  %3209 = vmatpush.bf16.msra.mxu0 %v1839
  %3210 = vmatpush.bf16.msra.mxu0 %v1787
  %3211 = vmatpush.bf16.msra.mxu0 %v1735
  %3212 = vmatmul.bf16.gmra.mxu0 %v436
  %v3213 = vpop.f32.mrf.mxu0
  %v3214 = vadd.f32 0.0, %v3213
  %v3215 = vpop.f32.mrf.mxu0
  %v3216 = vadd.f32 0.0, %v3215
  %3217 = vdwg.mxu0
  %3218 = vmatpush.bf16.msra.mxu0 %v2100
  %3219 = vmatpush.bf16.msra.mxu0 %v2048
  %3220 = vmatpush.bf16.msra.mxu0 %v1996
  %3221 = vmatpush.bf16.msra.mxu0 %v1944
  %3222 = vmatpush.bf16.msra.mxu0 %v1892
  %3223 = vmatpush.bf16.msra.mxu0 %v1840
  %3224 = vmatpush.bf16.msra.mxu0 %v1788
  %3225 = vmatpush.bf16.msra.mxu0 %v1736
  %3226 = vmatmul.bf16.gmra.mxu0 %v436
  %v3227 = vpop.f32.mrf.mxu0
  %v3228 = vadd.f32 0.0, %v3227
  %v3229 = vpop.f32.mrf.mxu0
  %v3230 = vadd.f32 0.0, %v3229
  %3231 = vdwg.mxu0
  %3232 = vmatpush.bf16.msra.mxu0 %v2101
  %3233 = vmatpush.bf16.msra.mxu0 %v2049
  %3234 = vmatpush.bf16.msra.mxu0 %v1997
  %3235 = vmatpush.bf16.msra.mxu0 %v1945
  %3236 = vmatpush.bf16.msra.mxu0 %v1893
  %3237 = vmatpush.bf16.msra.mxu0 %v1841
  %3238 = vmatpush.bf16.msra.mxu0 %v1789
  %3239 = vmatpush.bf16.msra.mxu0 %v1737
  %3240 = vmatmul.bf16.gmra.mxu0 %v436
  %v3241 = vpop.f32.mrf.mxu0
  %v3242 = vadd.f32 0.0, %v3241
  %v3243 = vpop.f32.mrf.mxu0
  %v3244 = vadd.f32 0.0, %v3243
  %3245 = vdwg.mxu0
  %v3246 = vmax.f32 %v2528, %v2710
  %v3247 = vmax.f32 %v2542, %v2724
  %v3248 = vmax.f32 %v2556, %v2738
  %v3249 = vmax.f32 %v2570, %v2752
  %v3250 = vmax.f32 %v2584, %v2766
  %v3251 = vmax.f32 %v2598, %v2780
  %v3252 = vmax.f32 %v2612, %v2794
  %v3253 = vmax.f32 %v2626, %v2808
  %v3254 = vmax.f32 %v2640, %v2822
  %v3255 = vmax.f32 %v2654, %v2836
  %v3256 = vmax.f32 %v2668, %v2850
  %v3257 = vmax.f32 %v2682, %v2864
  %v3258 = vmax.f32 %v2696, %v2878
  %v3259 = vmax.f32 %v2530, %v2712
  %v3260 = vmax.f32 %v2544, %v2726
  %v3261 = vmax.f32 %v2558, %v2740
  %v3262 = vmax.f32 %v2572, %v2754
  %v3263 = vmax.f32 %v2586, %v2768
  %v3264 = vmax.f32 %v2600, %v2782
  %v3265 = vmax.f32 %v2614, %v2796
  %v3266 = vmax.f32 %v2628, %v2810
  %v3267 = vmax.f32 %v2642, %v2824
  %v3268 = vmax.f32 %v2656, %v2838
  %v3269 = vmax.f32 %v2670, %v2852
  %v3270 = vmax.f32 %v2684, %v2866
  %v3271 = vmax.f32 %v2698, %v2880
  %v3272 = vmax.f32 %v2892, %v3074
  %v3273 = vmax.f32 %v2906, %v3088
  %v3274 = vmax.f32 %v2920, %v3102
  %v3275 = vmax.f32 %v2934, %v3116
  %v3276 = vmax.f32 %v2948, %v3130
  %v3277 = vmax.f32 %v2962, %v3144
  %v3278 = vmax.f32 %v2976, %v3158
  %v3279 = vmax.f32 %v2990, %v3172
  %v3280 = vmax.f32 %v3004, %v3186
  %v3281 = vmax.f32 %v3018, %v3200
  %v3282 = vmax.f32 %v3032, %v3214
  %v3283 = vmax.f32 %v3046, %v3228
  %v3284 = vmax.f32 %v3060, %v3242
  %v3285 = vmax.f32 %v2894, %v3076
  %v3286 = vmax.f32 %v2908, %v3090
  %v3287 = vmax.f32 %v2922, %v3104
  %v3288 = vmax.f32 %v2936, %v3118
  %v3289 = vmax.f32 %v2950, %v3132
  %v3290 = vmax.f32 %v2964, %v3146
  %v3291 = vmax.f32 %v2978, %v3160
  %v3292 = vmax.f32 %v2992, %v3174
  %v3293 = vmax.f32 %v3006, %v3188
  %v3294 = vmax.f32 %v3020, %v3202
  %v3295 = vmax.f32 %v3034, %v3216
  %v3296 = vmax.f32 %v3048, %v3230
  %v3297 = vmax.f32 %v3062, %v3244
  %v3298 = vmax.f32 %v3246, %v3272
  %v3299 = vmax.f32 %v3247, %v3273
  %v3300 = vmax.f32 %v3248, %v3274
  %v3301 = vmax.f32 %v3249, %v3275
  %v3302 = vmax.f32 %v3250, %v3276
  %v3303 = vmax.f32 %v3251, %v3277
  %v3304 = vmax.f32 %v3252, %v3278
  %v3305 = vmax.f32 %v3253, %v3279
  %v3306 = vmax.f32 %v3254, %v3280
  %v3307 = vmax.f32 %v3255, %v3281
  %v3308 = vmax.f32 %v3256, %v3282
  %v3309 = vmax.f32 %v3257, %v3283
  %v3310 = vmax.f32 %v3258, %v3284
  %v3311 = vmax.f32 %v3259, %v3285
  %v3312 = vmax.f32 %v3260, %v3286
  %v3313 = vmax.f32 %v3261, %v3287
  %v3314 = vmax.f32 %v3262, %v3288
  %v3315 = vmax.f32 %v3263, %v3289
  %v3316 = vmax.f32 %v3264, %v3290
  %v3317 = vmax.f32 %v3265, %v3291
  %v3318 = vmax.f32 %v3266, %v3292
  %v3319 = vmax.f32 %v3267, %v3293
  %v3320 = vmax.f32 %v3268, %v3294
  %v3321 = vmax.f32 %v3269, %v3295
  %v3322 = vmax.f32 %v3270, %v3296
  %v3323 = vmax.f32 %v3271, %v3297
  %v3324 = vld [vmem:[%s1] sm:$0xff]
  %v3325 = vld [vmem:[%s1 + $0x8] sm:$0xff]
  %3327 = vset.pattern.permute.xlu0 0
  %3328 = vperm.xlu0 %3327, %v3324
  %v3329 = vpop.permute.xlu0 %3328
  %3332 = vset.pattern.permute.xlu0 0
  %3333 = vperm.xlu0 %3332, %v3325
  %v3334 = vpop.permute.xlu0 %3333
  %v3336 = vadd.f32 %v3298, %v3329
  %v3337 = vadd.f32 %v3299, %v3329
  %v3338 = vadd.f32 %v3300, %v3329
  %v3339 = vadd.f32 %v3301, %v3329
  %v3340 = vadd.f32 %v3302, %v3329
  %v3341 = vadd.f32 %v3303, %v3329
  %v3342 = vadd.f32 %v3304, %v3329
  %v3343 = vadd.f32 %v3305, %v3329
  %v3344 = vadd.f32 %v3306, %v3329
  %v3345 = vadd.f32 %v3307, %v3329
  %v3346 = vadd.f32 %v3308, %v3329
  %v3347 = vadd.f32 %v3309, %v3329
  %v3348 = vadd.f32 %v3310, %v3329
  %v3349 = vadd.f32 %v3311, %v3334
  %v3350 = vadd.f32 %v3312, %v3334
  %v3351 = vadd.f32 %v3313, %v3334
  %v3352 = vadd.f32 %v3314, %v3334
  %v3353 = vadd.f32 %v3315, %v3334
  %v3354 = vadd.f32 %v3316, %v3334
  %v3355 = vadd.f32 %v3317, %v3334
  %v3356 = vadd.f32 %v3318, %v3334
  %v3357 = vadd.f32 %v3319, %v3334
  %v3358 = vadd.f32 %v3320, %v3334
  %v3359 = vadd.f32 %v3321, %v3334
  %v3360 = vadd.f32 %v3322, %v3334
  %v3361 = vadd.f32 %v3323, %v3334
  %v3362 = vmax.f32 %v3336, 0.0
  %v3363 = vmax.f32 %v3337, 0.0
  %v3364 = vmax.f32 %v3338, 0.0
  %v3365 = vmax.f32 %v3339, 0.0
  %v3366 = vmax.f32 %v3340, 0.0
  %v3367 = vmax.f32 %v3341, 0.0
  %v3368 = vmax.f32 %v3342, 0.0
  %v3369 = vmax.f32 %v3343, 0.0
  %v3370 = vmax.f32 %v3344, 0.0
  %v3371 = vmax.f32 %v3345, 0.0
  %v3372 = vmax.f32 %v3346, 0.0
  %v3373 = vmax.f32 %v3347, 0.0
  %v3374 = vmax.f32 %v3348, 0.0
  %v3375 = vmax.f32 %v3349, 0.0
  %v3376 = vmax.f32 %v3350, 0.0
  %v3377 = vmax.f32 %v3351, 0.0
  %v3378 = vmax.f32 %v3352, 0.0
  %v3379 = vmax.f32 %v3353, 0.0
  %v3380 = vmax.f32 %v3354, 0.0
  %v3381 = vmax.f32 %v3355, 0.0
  %v3382 = vmax.f32 %v3356, 0.0
  %v3383 = vmax.f32 %v3357, 0.0
  %v3384 = vmax.f32 %v3358, 0.0
  %v3385 = vmax.f32 %v3359, 0.0
  %v3386 = vmax.f32 %v3360, 0.0
  %v3387 = vmax.f32 %v3361, 0.0
  %v3388 = vpack.c.bf16 %v3363, %v3362
  %v3389 = vpack.c.bf16 %v3365, %v3364
  %v3390 = vpack.c.bf16 %v3367, %v3366
  %v3391 = vpack.c.bf16 %v3369, %v3368
  %v3392 = vpack.c.bf16 %v3371, %v3370
  %v3393 = vpack.c.bf16 %v3373, %v3372
  %v3394 = vpack.c.bf16 %v3374, %v3374
  %v3395 = vpack.c.bf16 %v3376, %v3375
  %v3396 = vpack.c.bf16 %v3378, %v3377
  %v3397 = vpack.c.bf16 %v3380, %v3379
  %v3398 = vpack.c.bf16 %v3382, %v3381
  %v3399 = vpack.c.bf16 %v3384, %v3383
  %v3400 = vpack.c.bf16 %v3386, %v3385
  %v3401 = vpack.c.bf16 %v3387, %v3387
  %3402 = vst [vmem:[%s3] sm:$0xff] %v3388
  %3403 = vst [vmem:[%s3 + $0x8] sm:$0xff] %v3389
  %3404 = vst [vmem:[%s3 + $0x10] sm:$0xff] %v3390
  %3405 = vst [vmem:[%s3 + $0x18] sm:$0xff] %v3391
  %3406 = vst [vmem:[%s3 + $0x20] sm:$0xff] %v3392
  %3407 = vst [vmem:[%s3 + $0x28] sm:$0xff] %v3393
  %3408 = vst [vmem:[%s3 + $0x30] sm:$0xf] %v3394
  %3409 = vst [vmem:[%s3 + $0x34] sm:$0xff] %v3395
  %3410 = vst [vmem:[%s3 + $0x3c] sm:$0xff] %v3396
  %3411 = vst [vmem:[%s3 + $0x44] sm:$0xff] %v3397
  %3412 = vst [vmem:[%s3 + $0x4c] sm:$0xff] %v3398
  %3413 = vst [vmem:[%s3 + $0x54] sm:$0xff] %v3399
  %3414 = vst [vmem:[%s3 + $0x5c] sm:$0xff] %v3400
  %3415 = vst [vmem:[%s3 + $0x64] sm:$0xf] %v3401
  // Predicated region
  $region14: #{forward.3} parent=0 // pred_check
    _
  $region15: #{forward.3} parent=0 // pred_check_branch
    %3417 = sbr.rel (0) target = $region17
  $region16: #{forward.3} parent=0 // pred_region
    _
  $region17: #{forward.3} parent=0 // pred_fallthru
    _
  // Predicated region
  $region18: #{forward.3} parent=0 // pred_check
    _
  $region19: #{forward.3} parent=0 // pred_check_branch
    %3419 = sbr.rel (0) target = $region21
  $region20: #{forward.3} parent=0 // pred_region
    _
  $region21: #{forward.3} parent=0 // pred_fallthru
    _

// kernel: forward.4
$region0: #{forward.4}
  #allocation0 [shape = 'u32[]', space=smem, size = 0x4, offset = 0x4, fixed_abs, tag = 'smem constant byte address 0x4 - core index']
  #allocation1 [shape = 'u32[72,128]{1,0:T(1,128)}', space=vmem, size = 0x9000, scoped, tag = 'internal scratch']
  %s0 = inlined_call_operand.vmem [shape: bf16[176,256], index: 0, kind: input, shape index: {}]
  %s1 = inlined_call_operand.vmem [shape: f32[176,1], index: 1, kind: input, shape index: {}]
  %s2 = inlined_call_operand.vmem [shape: bf16[256,1024], index: 2, kind: input, shape index: {}]
  %s3 = inlined_call_operand.vmem [shape: bf16[176,256], index: 3, kind: output, shape index: {}]
  %s4 = sld [smem:[#allocation0]]
  $region22: #{forward.4} parent=0
    _
  %s6 = ssub.s32 1, %s4
  %s7 = scalar_select 0, %s6, %s4
  // Predicated region
  $region2: #{forward.4} parent=0 // pred_check
    _
  $region3: #{forward.4} parent=0 // pred_check_branch
    %9 = sbr.rel (0) target = $region5
  $region4: #{forward.4} parent=0 // pred_region
    _
  $region5: #{forward.4} parent=0 // pred_fallthru
    _
  // Predicated region
  $region6: #{forward.4} parent=0 // pred_check
    _
  $region7: #{forward.4} parent=0 // pred_check_branch
    %11 = sbr.rel (0) target = $region9
  $region8: #{forward.4} parent=0 // pred_region
    _
  $region9: #{forward.4} parent=0 // pred_fallthru
    _
  // Predicated region
  $region10: #{forward.4} parent=0 // pred_check
    _
  $region11: #{forward.4} parent=0 // pred_check_branch
    %13 = sbr.rel (0) target = $region13
  $region12: #{forward.4} parent=0 // pred_region
    _
  $region13: #{forward.4} parent=0 // pred_fallthru
    _
  %v14 = vld [vmem:[%s0] sm:$0xff]
  %v15 = vld [vmem:[%s0 + $0x8] sm:$0xff]
  %v16 = vld [vmem:[%s0 + $0x10] sm:$0xff]
  %v17 = vld [vmem:[%s0 + $0x18] sm:$0xff]
  %v18 = vld [vmem:[%s0 + $0x20] sm:$0xff]
  %v19 = vld [vmem:[%s0 + $0x28] sm:$0xff]
  %v20 = vld [vmem:[%s0 + $0x30] sm:$0xff]
  %v21 = vld [vmem:[%s0 + $0x38] sm:$0xff]
  %v22 = vld [vmem:[%s0 + $0x40] sm:$0xff]
  %v23 = vld [vmem:[%s0 + $0x48] sm:$0xff]
  %v24 = vld [vmem:[%s0 + $0x50] sm:$0xff]
  %v25 = vld [vmem:[%s0 + $0x58] sm:$0xff]
  %v26 = vld [vmem:[%s0 + $0x60] sm:$0xff]
  %v27 = vld [vmem:[%s0 + $0x68] sm:$0xff]
  %v28 = vld [vmem:[%s0 + $0x70] sm:$0xff]
  %v29 = vld [vmem:[%s0 + $0x78] sm:$0xff]
  %v30 = vld [vmem:[%s0 + $0x80] sm:$0xff]
  %v31 = vld [vmem:[%s0 + $0x88] sm:$0xff]
  %v32 = vld [vmem:[%s0 + $0x90] sm:$0xff]
  %v33 = vld [vmem:[%s0 + $0x98] sm:$0xff]
  %v34 = vld [vmem:[%s0 + $0xa0] sm:$0xff]
  %v35 = vld [vmem:[%s0 + $0xa8] sm:$0xff]
  %v36 = vld [vmem:[%s2] sm:$0xff]
  %v37 = vld [vmem:[%s2 + $0x8] sm:$0xff]
  %v38 = vld [vmem:[%s2 + $0x10] sm:$0xff]
  %v39 = vld [vmem:[%s2 + $0x18] sm:$0xff]
  %v40 = vld [vmem:[%s2 + $0x20] sm:$0xff]
  %v41 = vld [vmem:[%s2 + $0x28] sm:$0xff]
  %v42 = vld [vmem:[%s2 + $0x30] sm:$0xff]
  %v43 = vld [vmem:[%s2 + $0x38] sm:$0xff]
  %v44 = vld [vmem:[%s2 + $0x40] sm:$0xff]
  %v45 = vld [vmem:[%s2 + $0x48] sm:$0xff]
  %v46 = vld [vmem:[%s2 + $0x50] sm:$0xff]
  %v47 = vld [vmem:[%s2 + $0x58] sm:$0xff]
  %v48 = vld [vmem:[%s2 + $0x60] sm:$0xff]
  %v49 = vld [vmem:[%s2 + $0x68] sm:$0xff]
  %v50 = vld [vmem:[%s2 + $0x70] sm:$0xff]
  %v51 = vld [vmem:[%s2 + $0x78] sm:$0xff]
  %v52 = vld [vmem:[%s2 + $0x80] sm:$0xff]
  %v53 = vld [vmem:[%s2 + $0x88] sm:$0xff]
  %v54 = vld [vmem:[%s2 + $0x90] sm:$0xff]
  %v55 = vld [vmem:[%s2 + $0x98] sm:$0xff]
  %v56 = vld [vmem:[%s2 + $0xa0] sm:$0xff]
  %v57 = vld [vmem:[%s2 + $0xa8] sm:$0xff]
  %v58 = vld [vmem:[%s2 + $0xb0] sm:$0xff]
  %v59 = vld [vmem:[%s2 + $0xb8] sm:$0xff]
  %v60 = vld [vmem:[%s2 + $0xc0] sm:$0xff]
  %v61 = vld [vmem:[%s2 + $0xc8] sm:$0xff]
  %v62 = vld [vmem:[%s2 + $0xd0] sm:$0xff]
  %v63 = vld [vmem:[%s2 + $0xd8] sm:$0xff]
  %v64 = vld [vmem:[%s2 + $0xe0] sm:$0xff]
  %v65 = vld [vmem:[%s2 + $0xe8] sm:$0xff]
  %v66 = vld [vmem:[%s2 + $0xf0] sm:$0xff]
  %v67 = vld [vmem:[%s2 + $0xf8] sm:$0xff]
  %v68 = vld [vmem:[%s2 + $0x100] sm:$0xff]
  %v69 = vld [vmem:[%s2 + $0x108] sm:$0xff]
  %v70 = vld [vmem:[%s2 + $0x110] sm:$0xff]
  %v71 = vld [vmem:[%s2 + $0x118] sm:$0xff]
  %v72 = vld [vmem:[%s2 + $0x120] sm:$0xff]
  %v73 = vld [vmem:[%s2 + $0x128] sm:$0xff]
  %v74 = vld [vmem:[%s2 + $0x130] sm:$0xff]
  %v75 = vld [vmem:[%s2 + $0x138] sm:$0xff]
  %v76 = vld [vmem:[%s2 + $0x140] sm:$0xff]
  %v77 = vld [vmem:[%s2 + $0x148] sm:$0xff]
  %v78 = vld [vmem:[%s2 + $0x150] sm:$0xff]
  %v79 = vld [vmem:[%s2 + $0x158] sm:$0xff]
  %v80 = vld [vmem:[%s2 + $0x160] sm:$0xff]
  %v81 = vld [vmem:[%s2 + $0x168] sm:$0xff]
  %v82 = vld [vmem:[%s2 + $0x170] sm:$0xff]
  %v83 = vld [vmem:[%s2 + $0x178] sm:$0xff]
  %v84 = vld [vmem:[%s2 + $0x180] sm:$0xff]
  %v85 = vld [vmem:[%s2 + $0x188] sm:$0xff]
  %v86 = vld [vmem:[%s2 + $0x190] sm:$0xff]
  %v87 = vld [vmem:[%s2 + $0x198] sm:$0xff]
  %v88 = vld [vmem:[%s2 + $0x1a0] sm:$0xff]
  %v89 = vld [vmem:[%s2 + $0x1a8] sm:$0xff]
  %v90 = vld [vmem:[%s2 + $0x1b0] sm:$0xff]
  %v91 = vld [vmem:[%s2 + $0x1b8] sm:$0xff]
  %v92 = vld [vmem:[%s2 + $0x1c0] sm:$0xff]
  %v93 = vld [vmem:[%s2 + $0x1c8] sm:$0xff]
  %v94 = vld [vmem:[%s2 + $0x1d0] sm:$0xff]
  %v95 = vld [vmem:[%s2 + $0x1d8] sm:$0xff]
  %v96 = vld [vmem:[%s2 + $0x1e0] sm:$0xff]
  %v97 = vld [vmem:[%s2 + $0x1e8] sm:$0xff]
  %v98 = vld [vmem:[%s2 + $0x1f0] sm:$0xff]
  %v99 = vld [vmem:[%s2 + $0x1f8] sm:$0xff]
  %v100 = vld [vmem:[%s2 + $0x200] sm:$0xff]
  %v101 = vld [vmem:[%s2 + $0x208] sm:$0xff]
  %v102 = vld [vmem:[%s2 + $0x210] sm:$0xff]
  %v103 = vld [vmem:[%s2 + $0x218] sm:$0xff]
  %v104 = vld [vmem:[%s2 + $0x220] sm:$0xff]
  %v105 = vld [vmem:[%s2 + $0x228] sm:$0xff]
  %v106 = vld [vmem:[%s2 + $0x230] sm:$0xff]
  %v107 = vld [vmem:[%s2 + $0x238] sm:$0xff]
  %v108 = vld [vmem:[%s2 + $0x240] sm:$0xff]
  %v109 = vld [vmem:[%s2 + $0x248] sm:$0xff]
  %v110 = vld [vmem:[%s2 + $0x250] sm:$0xff]
  %v111 = vld [vmem:[%s2 + $0x258] sm:$0xff]
  %v112 = vld [vmem:[%s2 + $0x260] sm:$0xff]
  %v113 = vld [vmem:[%s2 + $0x268] sm:$0xff]
  %v114 = vld [vmem:[%s2 + $0x270] sm:$0xff]
  %v115 = vld [vmem:[%s2 + $0x278] sm:$0xff]
  %v116 = vld [vmem:[%s2 + $0x280] sm:$0xff]
  %v117 = vld [vmem:[%s2 + $0x288] sm:$0xff]
  %v118 = vld [vmem:[%s2 + $0x290] sm:$0xff]
  %v119 = vld [vmem:[%s2 + $0x298] sm:$0xff]
  %v120 = vld [vmem:[%s2 + $0x2a0] sm:$0xff]
  %v121 = vld [vmem:[%s2 + $0x2a8] sm:$0xff]
  %v122 = vld [vmem:[%s2 + $0x2b0] sm:$0xff]
  %v123 = vld [vmem:[%s2 + $0x2b8] sm:$0xff]
  %v124 = vld [vmem:[%s2 + $0x2c0] sm:$0xff]
  %v125 = vld [vmem:[%s2 + $0x2c8] sm:$0xff]
  %v126 = vld [vmem:[%s2 + $0x2d0] sm:$0xff]
  %v127 = vld [vmem:[%s2 + $0x2d8] sm:$0xff]
  %v128 = vld [vmem:[%s2 + $0x2e0] sm:$0xff]
  %v129 = vld [vmem:[%s2 + $0x2e8] sm:$0xff]
  %v130 = vld [vmem:[%s2 + $0x2f0] sm:$0xff]
  %v131 = vld [vmem:[%s2 + $0x2f8] sm:$0xff]
  %v132 = vld [vmem:[%s2 + $0x300] sm:$0xff]
  %v133 = vld [vmem:[%s2 + $0x308] sm:$0xff]
  %v134 = vld [vmem:[%s2 + $0x310] sm:$0xff]
  %v135 = vld [vmem:[%s2 + $0x318] sm:$0xff]
  %v136 = vld [vmem:[%s2 + $0x320] sm:$0xff]
  %v137 = vld [vmem:[%s2 + $0x328] sm:$0xff]
  %v138 = vld [vmem:[%s2 + $0x330] sm:$0xff]
  %v139 = vld [vmem:[%s2 + $0x338] sm:$0xff]
  %v140 = vld [vmem:[%s2 + $0x340] sm:$0xff]
  %v141 = vld [vmem:[%s2 + $0x348] sm:$0xff]
  %v142 = vld [vmem:[%s2 + $0x350] sm:$0xff]
  %v143 = vld [vmem:[%s2 + $0x358] sm:$0xff]
  %v144 = vld [vmem:[%s2 + $0x360] sm:$0xff]
  %v145 = vld [vmem:[%s2 + $0x368] sm:$0xff]
  %v146 = vld [vmem:[%s2 + $0x370] sm:$0xff]
  %v147 = vld [vmem:[%s2 + $0x378] sm:$0xff]
  %v148 = vld [vmem:[%s2 + $0x380] sm:$0xff]
  %v149 = vld [vmem:[%s2 + $0x388] sm:$0xff]
  %v150 = vld [vmem:[%s2 + $0x390] sm:$0xff]
  %v151 = vld [vmem:[%s2 + $0x398] sm:$0xff]
  %v152 = vld [vmem:[%s2 + $0x3a0] sm:$0xff]
  %v153 = vld [vmem:[%s2 + $0x3a8] sm:$0xff]
  %v154 = vld [vmem:[%s2 + $0x3b0] sm:$0xff]
  %v155 = vld [vmem:[%s2 + $0x3b8] sm:$0xff]
  %v156 = vld [vmem:[%s2 + $0x3c0] sm:$0xff]
  %v157 = vld [vmem:[%s2 + $0x3c8] sm:$0xff]
  %v158 = vld [vmem:[%s2 + $0x3d0] sm:$0xff]
  %v159 = vld [vmem:[%s2 + $0x3d8] sm:$0xff]
  %v160 = vld [vmem:[%s2 + $0x3e0] sm:$0xff]
  %v161 = vld [vmem:[%s2 + $0x3e8] sm:$0xff]
  %v162 = vld [vmem:[%s2 + $0x3f0] sm:$0xff]
  %v163 = vld [vmem:[%s2 + $0x3f8] sm:$0xff]
  %v186 = vunpack.c.l.b16 %v14
  %v187 = vunpack.c.h.b16 %v14
  %v188 = vunpack.c.l.b16 %v15
  %v189 = vunpack.c.h.b16 %v15
  %v190 = vunpack.c.l.b16 %v16
  %v191 = vunpack.c.h.b16 %v16
  %v192 = vunpack.c.l.b16 %v17
  %v193 = vunpack.c.h.b16 %v17
  %v194 = vunpack.c.l.b16 %v18
  %v195 = vunpack.c.h.b16 %v18
  %v196 = vunpack.c.l.b16 %v19
  %v197 = vunpack.c.h.b16 %v19
  %v198 = vunpack.c.l.b16 %v20
  %v199 = vunpack.c.h.b16 %v20
  %v200 = vunpack.c.l.b16 %v21
  %v201 = vunpack.c.h.b16 %v21
  %v202 = vunpack.c.l.b16 %v22
  %v203 = vunpack.c.h.b16 %v22
  %v204 = vunpack.c.l.b16 %v23
  %v205 = vunpack.c.h.b16 %v23
  %v206 = vunpack.c.l.b16 %v24
  %v207 = vunpack.c.h.b16 %v24
  %v208 = vunpack.c.l.b16 %v25
  %v209 = vunpack.c.h.b16 %v25
  %v210 = vunpack.c.l.b16 %v26
  %v211 = vunpack.c.h.b16 %v26
  %v212 = vunpack.c.l.b16 %v27
  %v213 = vunpack.c.h.b16 %v27
  %v214 = vunpack.c.l.b16 %v28
  %v215 = vunpack.c.h.b16 %v28
  %v216 = vunpack.c.l.b16 %v29
  %v217 = vunpack.c.h.b16 %v29
  %v218 = vunpack.c.l.b16 %v30
  %v219 = vunpack.c.h.b16 %v30
  %v220 = vunpack.c.l.b16 %v31
  %v221 = vunpack.c.h.b16 %v31
  %v222 = vunpack.c.l.b16 %v32
  %v223 = vunpack.c.h.b16 %v32
  %v224 = vunpack.c.l.b16 %v33
  %v225 = vunpack.c.h.b16 %v33
  %v226 = vunpack.c.l.b16 %v34
  %v227 = vunpack.c.h.b16 %v34
  %v228 = vunpack.c.l.b16 %v35
  %v229 = vunpack.c.h.b16 %v35
  %v230 = vpack.c.b16 %v188, %v186
  %v231 = vpack.c.b16 %v189, %v187
  %v232 = vpack.c.b16 %v192, %v190
  %v233 = vpack.c.b16 %v193, %v191
  %v234 = vpack.c.b16 %v196, %v194
  %v235 = vpack.c.b16 %v197, %v195
  %v236 = vpack.c.b16 %v200, %v198
  %v237 = vpack.c.b16 %v201, %v199
  %v238 = vpack.c.b16 %v204, %v202
  %v239 = vpack.c.b16 %v205, %v203
  %v240 = vpack.c.b16 %v208, %v206
  %v241 = vpack.c.b16 %v209, %v207
  %v242 = vpack.c.b16 %v212, %v210
  %v243 = vpack.c.b16 %v213, %v211
  %v244 = vpack.c.b16 %v216, %v214
  %v245 = vpack.c.b16 %v217, %v215
  %v246 = vpack.c.b16 %v220, %v218
  %v247 = vpack.c.b16 %v221, %v219
  %v248 = vpack.c.b16 %v224, %v222
  %v249 = vpack.c.b16 %v225, %v223
  %v250 = vpack.c.b16 %v228, %v226
  %v251 = vpack.c.b16 %v229, %v227
  %v402 = vunpack.c.l.b16 %v36
  %v403 = vunpack.c.h.b16 %v36
  %v404 = vunpack.c.l.b16 %v37
  %v405 = vunpack.c.h.b16 %v37
  %v406 = vunpack.c.l.b16 %v38
  %v407 = vunpack.c.h.b16 %v38
  %v408 = vunpack.c.l.b16 %v39
  %v409 = vunpack.c.h.b16 %v39
  %v410 = vunpack.c.l.b16 %v40
  %v411 = vunpack.c.h.b16 %v40
  %v412 = vunpack.c.l.b16 %v41
  %v413 = vunpack.c.h.b16 %v41
  %v414 = vunpack.c.l.b16 %v42
  %v415 = vunpack.c.h.b16 %v42
  %v416 = vunpack.c.l.b16 %v43
  %v417 = vunpack.c.h.b16 %v43
  %v418 = vunpack.c.l.b16 %v44
  %v419 = vunpack.c.h.b16 %v44
  %v420 = vunpack.c.l.b16 %v45
  %v421 = vunpack.c.h.b16 %v45
  %v422 = vunpack.c.l.b16 %v46
  %v423 = vunpack.c.h.b16 %v46
  %v424 = vunpack.c.l.b16 %v47
  %v425 = vunpack.c.h.b16 %v47
  %v426 = vunpack.c.l.b16 %v48
  %v427 = vunpack.c.h.b16 %v48
  %v428 = vunpack.c.l.b16 %v49
  %v429 = vunpack.c.h.b16 %v49
  %v430 = vunpack.c.l.b16 %v50
  %v431 = vunpack.c.h.b16 %v50
  %v432 = vunpack.c.l.b16 %v51
  %v433 = vunpack.c.h.b16 %v51
  %v434 = vunpack.c.l.b16 %v52
  %v435 = vunpack.c.h.b16 %v52
  %v436 = vunpack.c.l.b16 %v53
  %v437 = vunpack.c.h.b16 %v53
  %v438 = vunpack.c.l.b16 %v54
  %v439 = vunpack.c.h.b16 %v54
  %v440 = vunpack.c.l.b16 %v55
  %v441 = vunpack.c.h.b16 %v55
  %v442 = vunpack.c.l.b16 %v56
  %v443 = vunpack.c.h.b16 %v56
  %v444 = vunpack.c.l.b16 %v57
  %v445 = vunpack.c.h.b16 %v57
  %v446 = vunpack.c.l.b16 %v58
  %v447 = vunpack.c.h.b16 %v58
  %v448 = vunpack.c.l.b16 %v59
  %v449 = vunpack.c.h.b16 %v59
  %v450 = vunpack.c.l.b16 %v60
  %v451 = vunpack.c.h.b16 %v60
  %v452 = vunpack.c.l.b16 %v61
  %v453 = vunpack.c.h.b16 %v61
  %v454 = vunpack.c.l.b16 %v62
  %v455 = vunpack.c.h.b16 %v62
  %v456 = vunpack.c.l.b16 %v63
  %v457 = vunpack.c.h.b16 %v63
  %v458 = vunpack.c.l.b16 %v64
  %v459 = vunpack.c.h.b16 %v64
  %v460 = vunpack.c.l.b16 %v65
  %v461 = vunpack.c.h.b16 %v65
  %v462 = vunpack.c.l.b16 %v66
  %v463 = vunpack.c.h.b16 %v66
  %v464 = vunpack.c.l.b16 %v67
  %v465 = vunpack.c.h.b16 %v67
  %v466 = vunpack.c.l.b16 %v68
  %v467 = vunpack.c.h.b16 %v68
  %v468 = vunpack.c.l.b16 %v69
  %v469 = vunpack.c.h.b16 %v69
  %v470 = vunpack.c.l.b16 %v70
  %v471 = vunpack.c.h.b16 %v70
  %v472 = vunpack.c.l.b16 %v71
  %v473 = vunpack.c.h.b16 %v71
  %v474 = vunpack.c.l.b16 %v72
  %v475 = vunpack.c.h.b16 %v72
  %v476 = vunpack.c.l.b16 %v73
  %v477 = vunpack.c.h.b16 %v73
  %v478 = vunpack.c.l.b16 %v74
  %v479 = vunpack.c.h.b16 %v74
  %v480 = vunpack.c.l.b16 %v75
  %v481 = vunpack.c.h.b16 %v75
  %v482 = vunpack.c.l.b16 %v76
  %v483 = vunpack.c.h.b16 %v76
  %v484 = vunpack.c.l.b16 %v77
  %v485 = vunpack.c.h.b16 %v77
  %v486 = vunpack.c.l.b16 %v78
  %v487 = vunpack.c.h.b16 %v78
  %v488 = vunpack.c.l.b16 %v79
  %v489 = vunpack.c.h.b16 %v79
  %v490 = vunpack.c.l.b16 %v80
  %v491 = vunpack.c.h.b16 %v80
  %v492 = vunpack.c.l.b16 %v81
  %v493 = vunpack.c.h.b16 %v81
  %v494 = vunpack.c.l.b16 %v82
  %v495 = vunpack.c.h.b16 %v82
  %v496 = vunpack.c.l.b16 %v83
  %v497 = vunpack.c.h.b16 %v83
  %v498 = vunpack.c.l.b16 %v84
  %v499 = vunpack.c.h.b16 %v84
  %v500 = vunpack.c.l.b16 %v85
  %v501 = vunpack.c.h.b16 %v85
  %v502 = vunpack.c.l.b16 %v86
  %v503 = vunpack.c.h.b16 %v86
  %v504 = vunpack.c.l.b16 %v87
  %v505 = vunpack.c.h.b16 %v87
  %v506 = vunpack.c.l.b16 %v88
  %v507 = vunpack.c.h.b16 %v88
  %v508 = vunpack.c.l.b16 %v89
  %v509 = vunpack.c.h.b16 %v89
  %v510 = vunpack.c.l.b16 %v90
  %v511 = vunpack.c.h.b16 %v90
  %v512 = vunpack.c.l.b16 %v91
  %v513 = vunpack.c.h.b16 %v91
  %v514 = vunpack.c.l.b16 %v92
  %v515 = vunpack.c.h.b16 %v92
  %v516 = vunpack.c.l.b16 %v93
  %v517 = vunpack.c.h.b16 %v93
  %v518 = vunpack.c.l.b16 %v94
  %v519 = vunpack.c.h.b16 %v94
  %v520 = vunpack.c.l.b16 %v95
  %v521 = vunpack.c.h.b16 %v95
  %v522 = vunpack.c.l.b16 %v96
  %v523 = vunpack.c.h.b16 %v96
  %v524 = vunpack.c.l.b16 %v97
  %v525 = vunpack.c.h.b16 %v97
  %v526 = vunpack.c.l.b16 %v98
  %v527 = vunpack.c.h.b16 %v98
  %v528 = vunpack.c.l.b16 %v99
  %v529 = vunpack.c.h.b16 %v99
  %v530 = vunpack.c.l.b16 %v100
  %v531 = vunpack.c.h.b16 %v100
  %v532 = vunpack.c.l.b16 %v101
  %v533 = vunpack.c.h.b16 %v101
  %v534 = vunpack.c.l.b16 %v102
  %v535 = vunpack.c.h.b16 %v102
  %v536 = vunpack.c.l.b16 %v103
  %v537 = vunpack.c.h.b16 %v103
  %v538 = vunpack.c.l.b16 %v104
  %v539 = vunpack.c.h.b16 %v104
  %v540 = vunpack.c.l.b16 %v105
  %v541 = vunpack.c.h.b16 %v105
  %v542 = vunpack.c.l.b16 %v106
  %v543 = vunpack.c.h.b16 %v106
  %v544 = vunpack.c.l.b16 %v107
  %v545 = vunpack.c.h.b16 %v107
  %v546 = vunpack.c.l.b16 %v108
  %v547 = vunpack.c.h.b16 %v108
  %v548 = vunpack.c.l.b16 %v109
  %v549 = vunpack.c.h.b16 %v109
  %v550 = vunpack.c.l.b16 %v110
  %v551 = vunpack.c.h.b16 %v110
  %v552 = vunpack.c.l.b16 %v111
  %v553 = vunpack.c.h.b16 %v111
  %v554 = vunpack.c.l.b16 %v112
  %v555 = vunpack.c.h.b16 %v112
  %v556 = vunpack.c.l.b16 %v113
  %v557 = vunpack.c.h.b16 %v113
  %v558 = vunpack.c.l.b16 %v114
  %v559 = vunpack.c.h.b16 %v114
  %v560 = vunpack.c.l.b16 %v115
  %v561 = vunpack.c.h.b16 %v115
  %v562 = vunpack.c.l.b16 %v116
  %v563 = vunpack.c.h.b16 %v116
  %v564 = vunpack.c.l.b16 %v117
  %v565 = vunpack.c.h.b16 %v117
  %v566 = vunpack.c.l.b16 %v118
  %v567 = vunpack.c.h.b16 %v118
  %v568 = vunpack.c.l.b16 %v119
  %v569 = vunpack.c.h.b16 %v119
  %v570 = vunpack.c.l.b16 %v120
  %v571 = vunpack.c.h.b16 %v120
  %v572 = vunpack.c.l.b16 %v121
  %v573 = vunpack.c.h.b16 %v121
  %v574 = vunpack.c.l.b16 %v122
  %v575 = vunpack.c.h.b16 %v122
  %v576 = vunpack.c.l.b16 %v123
  %v577 = vunpack.c.h.b16 %v123
  %v578 = vunpack.c.l.b16 %v124
  %v579 = vunpack.c.h.b16 %v124
  %v580 = vunpack.c.l.b16 %v125
  %v581 = vunpack.c.h.b16 %v125
  %v582 = vunpack.c.l.b16 %v126
  %v583 = vunpack.c.h.b16 %v126
  %v584 = vunpack.c.l.b16 %v127
  %v585 = vunpack.c.h.b16 %v127
  %v586 = vunpack.c.l.b16 %v128
  %v587 = vunpack.c.h.b16 %v128
  %v588 = vunpack.c.l.b16 %v129
  %v589 = vunpack.c.h.b16 %v129
  %v590 = vunpack.c.l.b16 %v130
  %v591 = vunpack.c.h.b16 %v130
  %v592 = vunpack.c.l.b16 %v131
  %v593 = vunpack.c.h.b16 %v131
  %v594 = vunpack.c.l.b16 %v132
  %v595 = vunpack.c.h.b16 %v132
  %v596 = vunpack.c.l.b16 %v133
  %v597 = vunpack.c.h.b16 %v133
  %v598 = vunpack.c.l.b16 %v134
  %v599 = vunpack.c.h.b16 %v134
  %v600 = vunpack.c.l.b16 %v135
  %v601 = vunpack.c.h.b16 %v135
  %v602 = vunpack.c.l.b16 %v136
  %v603 = vunpack.c.h.b16 %v136
  %v604 = vunpack.c.l.b16 %v137
  %v605 = vunpack.c.h.b16 %v137
  %v606 = vunpack.c.l.b16 %v138
  %v607 = vunpack.c.h.b16 %v138
  %v608 = vunpack.c.l.b16 %v139
  %v609 = vunpack.c.h.b16 %v139
  %v610 = vunpack.c.l.b16 %v140
  %v611 = vunpack.c.h.b16 %v140
  %v612 = vunpack.c.l.b16 %v141
  %v613 = vunpack.c.h.b16 %v141
  %v614 = vunpack.c.l.b16 %v142
  %v615 = vunpack.c.h.b16 %v142
  %v616 = vunpack.c.l.b16 %v143
  %v617 = vunpack.c.h.b16 %v143
  %v618 = vunpack.c.l.b16 %v144
  %v619 = vunpack.c.h.b16 %v144
  %v620 = vunpack.c.l.b16 %v145
  %v621 = vunpack.c.h.b16 %v145
  %v622 = vunpack.c.l.b16 %v146
  %v623 = vunpack.c.h.b16 %v146
  %v624 = vunpack.c.l.b16 %v147
  %v625 = vunpack.c.h.b16 %v147
  %v626 = vunpack.c.l.b16 %v148
  %v627 = vunpack.c.h.b16 %v148
  %v628 = vunpack.c.l.b16 %v149
  %v629 = vunpack.c.h.b16 %v149
  %v630 = vunpack.c.l.b16 %v150
  %v631 = vunpack.c.h.b16 %v150
  %v632 = vunpack.c.l.b16 %v151
  %v633 = vunpack.c.h.b16 %v151
  %v634 = vunpack.c.l.b16 %v152
  %v635 = vunpack.c.h.b16 %v152
  %v636 = vunpack.c.l.b16 %v153
  %v637 = vunpack.c.h.b16 %v153
  %v638 = vunpack.c.l.b16 %v154
  %v639 = vunpack.c.h.b16 %v154
  %v640 = vunpack.c.l.b16 %v155
  %v641 = vunpack.c.h.b16 %v155
  %v642 = vunpack.c.l.b16 %v156
  %v643 = vunpack.c.h.b16 %v156
  %v644 = vunpack.c.l.b16 %v157
  %v645 = vunpack.c.h.b16 %v157
  %v646 = vunpack.c.l.b16 %v158
  %v647 = vunpack.c.h.b16 %v158
  %v648 = vunpack.c.l.b16 %v159
  %v649 = vunpack.c.h.b16 %v159
  %v650 = vunpack.c.l.b16 %v160
  %v651 = vunpack.c.h.b16 %v160
  %v652 = vunpack.c.l.b16 %v161
  %v653 = vunpack.c.h.b16 %v161
  %v654 = vunpack.c.l.b16 %v162
  %v655 = vunpack.c.h.b16 %v162
  %v656 = vunpack.c.l.b16 %v163
  %v657 = vunpack.c.h.b16 %v163
  %v658 = vpack.c.b16 %v410, %v402
  %v659 = vpack.c.b16 %v411, %v403
  %v660 = vpack.c.b16 %v412, %v404
  %v661 = vpack.c.b16 %v413, %v405
  %v662 = vpack.c.b16 %v414, %v406
  %v663 = vpack.c.b16 %v415, %v407
  %v664 = vpack.c.b16 %v416, %v408
  %v665 = vpack.c.b16 %v417, %v409
  %v666 = vpack.c.b16 %v426, %v418
  %v667 = vpack.c.b16 %v427, %v419
  %v668 = vpack.c.b16 %v428, %v420
  %v669 = vpack.c.b16 %v429, %v421
  %v670 = vpack.c.b16 %v430, %v422
  %v671 = vpack.c.b16 %v431, %v423
  %v672 = vpack.c.b16 %v432, %v424
  %v673 = vpack.c.b16 %v433, %v425
  %v674 = vpack.c.b16 %v442, %v434
  %v675 = vpack.c.b16 %v443, %v435
  %v676 = vpack.c.b16 %v444, %v436
  %v677 = vpack.c.b16 %v445, %v437
  %v678 = vpack.c.b16 %v446, %v438
  %v679 = vpack.c.b16 %v447, %v439
  %v680 = vpack.c.b16 %v448, %v440
  %v681 = vpack.c.b16 %v449, %v441
  %v682 = vpack.c.b16 %v458, %v450
  %v683 = vpack.c.b16 %v459, %v451
  %v684 = vpack.c.b16 %v460, %v452
  %v685 = vpack.c.b16 %v461, %v453
  %v686 = vpack.c.b16 %v462, %v454
  %v687 = vpack.c.b16 %v463, %v455
  %v688 = vpack.c.b16 %v464, %v456
  %v689 = vpack.c.b16 %v465, %v457
  %v690 = vpack.c.b16 %v474, %v466
  %v691 = vpack.c.b16 %v475, %v467
  %v692 = vpack.c.b16 %v476, %v468
  %v693 = vpack.c.b16 %v477, %v469
  %v694 = vpack.c.b16 %v478, %v470
  %v695 = vpack.c.b16 %v479, %v471
  %v696 = vpack.c.b16 %v480, %v472
  %v697 = vpack.c.b16 %v481, %v473
  %v698 = vpack.c.b16 %v490, %v482
  %v699 = vpack.c.b16 %v491, %v483
  %v700 = vpack.c.b16 %v492, %v484
  %v701 = vpack.c.b16 %v493, %v485
  %v702 = vpack.c.b16 %v494, %v486
  %v703 = vpack.c.b16 %v495, %v487
  %v704 = vpack.c.b16 %v496, %v488
  %v705 = vpack.c.b16 %v497, %v489
  %v706 = vpack.c.b16 %v506, %v498
  %v707 = vpack.c.b16 %v507, %v499
  %v708 = vpack.c.b16 %v508, %v500
  %v709 = vpack.c.b16 %v509, %v501
  %v710 = vpack.c.b16 %v510, %v502
  %v711 = vpack.c.b16 %v511, %v503
  %v712 = vpack.c.b16 %v512, %v504
  %v713 = vpack.c.b16 %v513, %v505
  %v714 = vpack.c.b16 %v522, %v514
  %v715 = vpack.c.b16 %v523, %v515
  %v716 = vpack.c.b16 %v524, %v516
  %v717 = vpack.c.b16 %v525, %v517
  %v718 = vpack.c.b16 %v526, %v518
  %v719 = vpack.c.b16 %v527, %v519
  %v720 = vpack.c.b16 %v528, %v520
  %v721 = vpack.c.b16 %v529, %v521
  %v722 = vpack.c.b16 %v538, %v530
  %v723 = vpack.c.b16 %v539, %v531
  %v724 = vpack.c.b16 %v540, %v532
  %v725 = vpack.c.b16 %v541, %v533
  %v726 = vpack.c.b16 %v542, %v534
  %v727 = vpack.c.b16 %v543, %v535
  %v728 = vpack.c.b16 %v544, %v536
  %v729 = vpack.c.b16 %v545, %v537
  %v730 = vpack.c.b16 %v554, %v546
  %v731 = vpack.c.b16 %v555, %v547
  %v732 = vpack.c.b16 %v556, %v548
  %v733 = vpack.c.b16 %v557, %v549
  %v734 = vpack.c.b16 %v558, %v550
  %v735 = vpack.c.b16 %v559, %v551
  %v736 = vpack.c.b16 %v560, %v552
  %v737 = vpack.c.b16 %v561, %v553
  %v738 = vpack.c.b16 %v570, %v562
  %v739 = vpack.c.b16 %v571, %v563
  %v740 = vpack.c.b16 %v572, %v564
  %v741 = vpack.c.b16 %v573, %v565
  %v742 = vpack.c.b16 %v574, %v566
  %v743 = vpack.c.b16 %v575, %v567
  %v744 = vpack.c.b16 %v576, %v568
  %v745 = vpack.c.b16 %v577, %v569
  %v746 = vpack.c.b16 %v586, %v578
  %v747 = vpack.c.b16 %v587, %v579
  %v748 = vpack.c.b16 %v588, %v580
  %v749 = vpack.c.b16 %v589, %v581
  %v750 = vpack.c.b16 %v590, %v582
  %v751 = vpack.c.b16 %v591, %v583
  %v752 = vpack.c.b16 %v592, %v584
  %v753 = vpack.c.b16 %v593, %v585
  %v754 = vpack.c.b16 %v602, %v594
  %v755 = vpack.c.b16 %v603, %v595
  %v756 = vpack.c.b16 %v604, %v596
  %v757 = vpack.c.b16 %v605, %v597
  %v758 = vpack.c.b16 %v606, %v598
  %v759 = vpack.c.b16 %v607, %v599
  %v760 = vpack.c.b16 %v608, %v600
  %v761 = vpack.c.b16 %v609, %v601
  %v762 = vpack.c.b16 %v618, %v610
  %v763 = vpack.c.b16 %v619, %v611
  %v764 = vpack.c.b16 %v620, %v612
  %v765 = vpack.c.b16 %v621, %v613
  %v766 = vpack.c.b16 %v622, %v614
  %v767 = vpack.c.b16 %v623, %v615
  %v768 = vpack.c.b16 %v624, %v616
  %v769 = vpack.c.b16 %v625, %v617
  %v770 = vpack.c.b16 %v634, %v626
  %v771 = vpack.c.b16 %v635, %v627
  %v772 = vpack.c.b16 %v636, %v628
  %v773 = vpack.c.b16 %v637, %v629
  %v774 = vpack.c.b16 %v638, %v630
  %v775 = vpack.c.b16 %v639, %v631
  %v776 = vpack.c.b16 %v640, %v632
  %v777 = vpack.c.b16 %v641, %v633
  %v778 = vpack.c.b16 %v650, %v642
  %v779 = vpack.c.b16 %v651, %v643
  %v780 = vpack.c.b16 %v652, %v644
  %v781 = vpack.c.b16 %v653, %v645
  %v782 = vpack.c.b16 %v654, %v646
  %v783 = vpack.c.b16 %v655, %v647
  %v784 = vpack.c.b16 %v656, %v648
  %v785 = vpack.c.b16 %v657, %v649
  %914 = vmatpush.bf16.msra.mxu0 %v714
  %915 = vmatpush.bf16.msra.mxu0 %v706
  %916 = vmatpush.bf16.msra.mxu0 %v698
  %917 = vmatpush.bf16.msra.mxu0 %v690
  %918 = vmatpush.bf16.msra.mxu0 %v682
  %919 = vmatpush.bf16.msra.mxu0 %v674
  %920 = vmatpush.bf16.msra.mxu0 %v666
  %921 = vmatpush.bf16.msra.mxu0 %v658
  %922 = vmatmul.bf16.gmra.mxu0 %v230
  %v923 = vpop.f32.mrf.mxu0
  %v924 = vadd.f32 0.0, %v923
  %v925 = vpop.f32.mrf.mxu0
  %v926 = vadd.f32 0.0, %v925
  %927 = vmatmul.bf16.gmra.mxu0 %v232
  %v928 = vpop.f32.mrf.mxu0
  %v929 = vadd.f32 0.0, %v928
  %v930 = vpop.f32.mrf.mxu0
  %v931 = vadd.f32 0.0, %v930
  %932 = vmatmul.bf16.gmra.mxu0 %v234
  %v933 = vpop.f32.mrf.mxu0
  %v934 = vadd.f32 0.0, %v933
  %v935 = vpop.f32.mrf.mxu0
  %v936 = vadd.f32 0.0, %v935
  %937 = vmatmul.bf16.gmra.mxu0 %v236
  %v938 = vpop.f32.mrf.mxu0
  %v939 = vadd.f32 0.0, %v938
  %v940 = vpop.f32.mrf.mxu0
  %v941 = vadd.f32 0.0, %v940
  %942 = vmatmul.bf16.gmra.mxu0 %v238
  %v943 = vpop.f32.mrf.mxu0
  %v944 = vadd.f32 0.0, %v943
  %v945 = vpop.f32.mrf.mxu0
  %v946 = vadd.f32 0.0, %v945
  %947 = vmatmul.bf16.gmra.mxu0 %v240
  %v948 = vpop.f32.mrf.mxu0
  %v949 = vadd.f32 0.0, %v948
  %v950 = vpop.f32.mrf.mxu0
  %v951 = vadd.f32 0.0, %v950
  %952 = vmatmul.bf16.gmra.mxu0 %v242
  %v953 = vpop.f32.mrf.mxu0
  %v954 = vadd.f32 0.0, %v953
  %v955 = vpop.f32.mrf.mxu0
  %v956 = vadd.f32 0.0, %v955
  %957 = vmatmul.bf16.gmra.mxu0 %v244
  %v958 = vpop.f32.mrf.mxu0
  %v959 = vadd.f32 0.0, %v958
  %v960 = vpop.f32.mrf.mxu0
  %v961 = vadd.f32 0.0, %v960
  %962 = vmatmul.bf16.gmra.mxu0 %v246
  %v963 = vpop.f32.mrf.mxu0
  %v964 = vadd.f32 0.0, %v963
  %v965 = vpop.f32.mrf.mxu0
  %v966 = vadd.f32 0.0, %v965
  %967 = vmatmul.bf16.gmra.mxu0 %v248
  %v968 = vpop.f32.mrf.mxu0
  %v969 = vadd.f32 0.0, %v968
  %v970 = vpop.f32.mrf.mxu0
  %v971 = vadd.f32 0.0, %v970
  %972 = vmatmul.bf16.gmra.mxu0 %v250
  %v973 = vpop.f32.mrf.mxu0
  %v974 = vadd.f32 0.0, %v973
  %v975 = vpop.f32.mrf.mxu0
  %v976 = vadd.f32 0.0, %v975
  %977 = vdwg.mxu0
  %978 = vmatpush.bf16.msra.mxu0 %v778
  %979 = vmatpush.bf16.msra.mxu0 %v770
  %980 = vmatpush.bf16.msra.mxu0 %v762
  %981 = vmatpush.bf16.msra.mxu0 %v754
  %982 = vmatpush.bf16.msra.mxu0 %v746
  %983 = vmatpush.bf16.msra.mxu0 %v738
  %984 = vmatpush.bf16.msra.mxu0 %v730
  %985 = vmatpush.bf16.msra.mxu0 %v722
  %986 = vmatmul.bf16.gmra.mxu0 %v231
  %v987 = vpop.f32.mrf.mxu0
  %v988 = vadd.f32 %v924, %v987
  %v989 = vpop.f32.mrf.mxu0
  %v990 = vadd.f32 %v926, %v989
  %991 = vmatmul.bf16.gmra.mxu0 %v233
  %v992 = vpop.f32.mrf.mxu0
  %v993 = vadd.f32 %v929, %v992
  %v994 = vpop.f32.mrf.mxu0
  %v995 = vadd.f32 %v931, %v994
  %996 = vmatmul.bf16.gmra.mxu0 %v235
  %v997 = vpop.f32.mrf.mxu0
  %v998 = vadd.f32 %v934, %v997
  %v999 = vpop.f32.mrf.mxu0
  %v1000 = vadd.f32 %v936, %v999
  %1001 = vmatmul.bf16.gmra.mxu0 %v237
  %v1002 = vpop.f32.mrf.mxu0
  %v1003 = vadd.f32 %v939, %v1002
  %v1004 = vpop.f32.mrf.mxu0
  %v1005 = vadd.f32 %v941, %v1004
  %1006 = vmatmul.bf16.gmra.mxu0 %v239
  %v1007 = vpop.f32.mrf.mxu0
  %v1008 = vadd.f32 %v944, %v1007
  %v1009 = vpop.f32.mrf.mxu0
  %v1010 = vadd.f32 %v946, %v1009
  %1011 = vmatmul.bf16.gmra.mxu0 %v241
  %v1012 = vpop.f32.mrf.mxu0
  %v1013 = vadd.f32 %v949, %v1012
  %v1014 = vpop.f32.mrf.mxu0
  %v1015 = vadd.f32 %v951, %v1014
  %1016 = vmatmul.bf16.gmra.mxu0 %v243
  %v1017 = vpop.f32.mrf.mxu0
  %v1018 = vadd.f32 %v954, %v1017
  %v1019 = vpop.f32.mrf.mxu0
  %v1020 = vadd.f32 %v956, %v1019
  %1021 = vmatmul.bf16.gmra.mxu0 %v245
  %v1022 = vpop.f32.mrf.mxu0
  %v1023 = vadd.f32 %v959, %v1022
  %v1024 = vpop.f32.mrf.mxu0
  %v1025 = vadd.f32 %v961, %v1024
  %1026 = vmatmul.bf16.gmra.mxu0 %v247
  %v1027 = vpop.f32.mrf.mxu0
  %v1028 = vadd.f32 %v964, %v1027
  %v1029 = vpop.f32.mrf.mxu0
  %v1030 = vadd.f32 %v966, %v1029
  %1031 = vmatmul.bf16.gmra.mxu0 %v249
  %v1032 = vpop.f32.mrf.mxu0
  %v1033 = vadd.f32 %v969, %v1032
  %v1034 = vpop.f32.mrf.mxu0
  %v1035 = vadd.f32 %v971, %v1034
  %1036 = vmatmul.bf16.gmra.mxu0 %v251
  %v1037 = vpop.f32.mrf.mxu0
  %v1038 = vadd.f32 %v974, %v1037
  %v1039 = vpop.f32.mrf.mxu0
  %v1040 = vadd.f32 %v976, %v1039
  %1041 = vdwg.mxu0
  %1042 = vmatpush.bf16.msra.mxu0 %v715
  %1043 = vmatpush.bf16.msra.mxu0 %v707
  %1044 = vmatpush.bf16.msra.mxu0 %v699
  %1045 = vmatpush.bf16.msra.mxu0 %v691
  %1046 = vmatpush.bf16.msra.mxu0 %v683
  %1047 = vmatpush.bf16.msra.mxu0 %v675
  %1048 = vmatpush.bf16.msra.mxu0 %v667
  %1049 = vmatpush.bf16.msra.mxu0 %v659
  %1050 = vmatmul.bf16.gmra.mxu0 %v230
  %v1051 = vpop.f32.mrf.mxu0
  %v1052 = vadd.f32 0.0, %v1051
  %v1053 = vpop.f32.mrf.mxu0
  %v1054 = vadd.f32 0.0, %v1053
  %1055 = vmatmul.bf16.gmra.mxu0 %v232
  %v1056 = vpop.f32.mrf.mxu0
  %v1057 = vadd.f32 0.0, %v1056
  %v1058 = vpop.f32.mrf.mxu0
  %v1059 = vadd.f32 0.0, %v1058
  %1060 = vmatmul.bf16.gmra.mxu0 %v234
  %v1061 = vpop.f32.mrf.mxu0
  %v1062 = vadd.f32 0.0, %v1061
  %v1063 = vpop.f32.mrf.mxu0
  %v1064 = vadd.f32 0.0, %v1063
  %1065 = vmatmul.bf16.gmra.mxu0 %v236
  %v1066 = vpop.f32.mrf.mxu0
  %v1067 = vadd.f32 0.0, %v1066
  %v1068 = vpop.f32.mrf.mxu0
  %v1069 = vadd.f32 0.0, %v1068
  %1070 = vmatmul.bf16.gmra.mxu0 %v238
  %v1071 = vpop.f32.mrf.mxu0
  %v1072 = vadd.f32 0.0, %v1071
  %v1073 = vpop.f32.mrf.mxu0
  %v1074 = vadd.f32 0.0, %v1073
  %1075 = vmatmul.bf16.gmra.mxu0 %v240
  %v1076 = vpop.f32.mrf.mxu0
  %v1077 = vadd.f32 0.0, %v1076
  %v1078 = vpop.f32.mrf.mxu0
  %v1079 = vadd.f32 0.0, %v1078
  %1080 = vmatmul.bf16.gmra.mxu0 %v242
  %v1081 = vpop.f32.mrf.mxu0
  %v1082 = vadd.f32 0.0, %v1081
  %v1083 = vpop.f32.mrf.mxu0
  %v1084 = vadd.f32 0.0, %v1083
  %1085 = vmatmul.bf16.gmra.mxu0 %v244
  %v1086 = vpop.f32.mrf.mxu0
  %v1087 = vadd.f32 0.0, %v1086
  %v1088 = vpop.f32.mrf.mxu0
  %v1089 = vadd.f32 0.0, %v1088
  %1090 = vmatmul.bf16.gmra.mxu0 %v246
  %v1091 = vpop.f32.mrf.mxu0
  %v1092 = vadd.f32 0.0, %v1091
  %v1093 = vpop.f32.mrf.mxu0
  %v1094 = vadd.f32 0.0, %v1093
  %1095 = vmatmul.bf16.gmra.mxu0 %v248
  %v1096 = vpop.f32.mrf.mxu0
  %v1097 = vadd.f32 0.0, %v1096
  %v1098 = vpop.f32.mrf.mxu0
  %v1099 = vadd.f32 0.0, %v1098
  %1100 = vmatmul.bf16.gmra.mxu0 %v250
  %v1101 = vpop.f32.mrf.mxu0
  %v1102 = vadd.f32 0.0, %v1101
  %v1103 = vpop.f32.mrf.mxu0
  %v1104 = vadd.f32 0.0, %v1103
  %1105 = vdwg.mxu0
  %1106 = vmatpush.bf16.msra.mxu0 %v779
  %1107 = vmatpush.bf16.msra.mxu0 %v771
  %1108 = vmatpush.bf16.msra.mxu0 %v763
  %1109 = vmatpush.bf16.msra.mxu0 %v755
  %1110 = vmatpush.bf16.msra.mxu0 %v747
  %1111 = vmatpush.bf16.msra.mxu0 %v739
  %1112 = vmatpush.bf16.msra.mxu0 %v731
  %1113 = vmatpush.bf16.msra.mxu0 %v723
  %1114 = vmatmul.bf16.gmra.mxu0 %v231
  %v1115 = vpop.f32.mrf.mxu0
  %v1116 = vadd.f32 %v1052, %v1115
  %v1117 = vpop.f32.mrf.mxu0
  %v1118 = vadd.f32 %v1054, %v1117
  %1119 = vmatmul.bf16.gmra.mxu0 %v233
  %v1120 = vpop.f32.mrf.mxu0
  %v1121 = vadd.f32 %v1057, %v1120
  %v1122 = vpop.f32.mrf.mxu0
  %v1123 = vadd.f32 %v1059, %v1122
  %1124 = vmatmul.bf16.gmra.mxu0 %v235
  %v1125 = vpop.f32.mrf.mxu0
  %v1126 = vadd.f32 %v1062, %v1125
  %v1127 = vpop.f32.mrf.mxu0
  %v1128 = vadd.f32 %v1064, %v1127
  %1129 = vmatmul.bf16.gmra.mxu0 %v237
  %v1130 = vpop.f32.mrf.mxu0
  %v1131 = vadd.f32 %v1067, %v1130
  %v1132 = vpop.f32.mrf.mxu0
  %v1133 = vadd.f32 %v1069, %v1132
  %1134 = vmatmul.bf16.gmra.mxu0 %v239
  %v1135 = vpop.f32.mrf.mxu0
  %v1136 = vadd.f32 %v1072, %v1135
  %v1137 = vpop.f32.mrf.mxu0
  %v1138 = vadd.f32 %v1074, %v1137
  %1139 = vmatmul.bf16.gmra.mxu0 %v241
  %v1140 = vpop.f32.mrf.mxu0
  %v1141 = vadd.f32 %v1077, %v1140
  %v1142 = vpop.f32.mrf.mxu0
  %v1143 = vadd.f32 %v1079, %v1142
  %1144 = vmatmul.bf16.gmra.mxu0 %v243
  %v1145 = vpop.f32.mrf.mxu0
  %v1146 = vadd.f32 %v1082, %v1145
  %v1147 = vpop.f32.mrf.mxu0
  %v1148 = vadd.f32 %v1084, %v1147
  %1149 = vmatmul.bf16.gmra.mxu0 %v245
  %v1150 = vpop.f32.mrf.mxu0
  %v1151 = vadd.f32 %v1087, %v1150
  %v1152 = vpop.f32.mrf.mxu0
  %v1153 = vadd.f32 %v1089, %v1152
  %1154 = vmatmul.bf16.gmra.mxu0 %v247
  %v1155 = vpop.f32.mrf.mxu0
  %v1156 = vadd.f32 %v1092, %v1155
  %v1157 = vpop.f32.mrf.mxu0
  %v1158 = vadd.f32 %v1094, %v1157
  %1159 = vmatmul.bf16.gmra.mxu0 %v249
  %v1160 = vpop.f32.mrf.mxu0
  %v1161 = vadd.f32 %v1097, %v1160
  %v1162 = vpop.f32.mrf.mxu0
  %v1163 = vadd.f32 %v1099, %v1162
  %1164 = vmatmul.bf16.gmra.mxu0 %v251
  %v1165 = vpop.f32.mrf.mxu0
  %v1166 = vadd.f32 %v1102, %v1165
  %v1167 = vpop.f32.mrf.mxu0
  %v1168 = vadd.f32 %v1104, %v1167
  %1169 = vdwg.mxu0
  %1170 = vmatpush.bf16.msra.mxu0 %v716
  %1171 = vmatpush.bf16.msra.mxu0 %v708
  %1172 = vmatpush.bf16.msra.mxu0 %v700
  %1173 = vmatpush.bf16.msra.mxu0 %v692
  %1174 = vmatpush.bf16.msra.mxu0 %v684
  %1175 = vmatpush.bf16.msra.mxu0 %v676
  %1176 = vmatpush.bf16.msra.mxu0 %v668
  %1177 = vmatpush.bf16.msra.mxu0 %v660
  %1178 = vmatmul.bf16.gmra.mxu0 %v230
  %v1179 = vpop.f32.mrf.mxu0
  %v1180 = vadd.f32 0.0, %v1179
  %v1181 = vpop.f32.mrf.mxu0
  %v1182 = vadd.f32 0.0, %v1181
  %1183 = vmatmul.bf16.gmra.mxu0 %v232
  %v1184 = vpop.f32.mrf.mxu0
  %v1185 = vadd.f32 0.0, %v1184
  %v1186 = vpop.f32.mrf.mxu0
  %v1187 = vadd.f32 0.0, %v1186
  %1188 = vmatmul.bf16.gmra.mxu0 %v234
  %v1189 = vpop.f32.mrf.mxu0
  %v1190 = vadd.f32 0.0, %v1189
  %v1191 = vpop.f32.mrf.mxu0
  %v1192 = vadd.f32 0.0, %v1191
  %1193 = vmatmul.bf16.gmra.mxu0 %v236
  %v1194 = vpop.f32.mrf.mxu0
  %v1195 = vadd.f32 0.0, %v1194
  %v1196 = vpop.f32.mrf.mxu0
  %v1197 = vadd.f32 0.0, %v1196
  %1198 = vmatmul.bf16.gmra.mxu0 %v238
  %v1199 = vpop.f32.mrf.mxu0
  %v1200 = vadd.f32 0.0, %v1199
  %v1201 = vpop.f32.mrf.mxu0
  %v1202 = vadd.f32 0.0, %v1201
  %1203 = vmatmul.bf16.gmra.mxu0 %v240
  %v1204 = vpop.f32.mrf.mxu0
  %v1205 = vadd.f32 0.0, %v1204
  %v1206 = vpop.f32.mrf.mxu0
  %v1207 = vadd.f32 0.0, %v1206
  %1208 = vmatmul.bf16.gmra.mxu0 %v242
  %v1209 = vpop.f32.mrf.mxu0
  %v1210 = vadd.f32 0.0, %v1209
  %v1211 = vpop.f32.mrf.mxu0
  %v1212 = vadd.f32 0.0, %v1211
  %1213 = vmatmul.bf16.gmra.mxu0 %v244
  %v1214 = vpop.f32.mrf.mxu0
  %v1215 = vadd.f32 0.0, %v1214
  %v1216 = vpop.f32.mrf.mxu0
  %v1217 = vadd.f32 0.0, %v1216
  %1218 = vmatmul.bf16.gmra.mxu0 %v246
  %v1219 = vpop.f32.mrf.mxu0
  %v1220 = vadd.f32 0.0, %v1219
  %v1221 = vpop.f32.mrf.mxu0
  %v1222 = vadd.f32 0.0, %v1221
  %1223 = vmatmul.bf16.gmra.mxu0 %v248
  %v1224 = vpop.f32.mrf.mxu0
  %v1225 = vadd.f32 0.0, %v1224
  %v1226 = vpop.f32.mrf.mxu0
  %v1227 = vadd.f32 0.0, %v1226
  %1228 = vmatmul.bf16.gmra.mxu0 %v250
  %v1229 = vpop.f32.mrf.mxu0
  %v1230 = vadd.f32 0.0, %v1229
  %v1231 = vpop.f32.mrf.mxu0
  %v1232 = vadd.f32 0.0, %v1231
  %1233 = vdwg.mxu0
  %1234 = vmatpush.bf16.msra.mxu0 %v780
  %1235 = vmatpush.bf16.msra.mxu0 %v772
  %1236 = vmatpush.bf16.msra.mxu0 %v764
  %1237 = vmatpush.bf16.msra.mxu0 %v756
  %1238 = vmatpush.bf16.msra.mxu0 %v748
  %1239 = vmatpush.bf16.msra.mxu0 %v740
  %1240 = vmatpush.bf16.msra.mxu0 %v732
  %1241 = vmatpush.bf16.msra.mxu0 %v724
  %1242 = vmatmul.bf16.gmra.mxu0 %v231
  %v1243 = vpop.f32.mrf.mxu0
  %v1244 = vadd.f32 %v1180, %v1243
  %v1245 = vpop.f32.mrf.mxu0
  %v1246 = vadd.f32 %v1182, %v1245
  %1247 = vmatmul.bf16.gmra.mxu0 %v233
  %v1248 = vpop.f32.mrf.mxu0
  %v1249 = vadd.f32 %v1185, %v1248
  %v1250 = vpop.f32.mrf.mxu0
  %v1251 = vadd.f32 %v1187, %v1250
  %1252 = vmatmul.bf16.gmra.mxu0 %v235
  %v1253 = vpop.f32.mrf.mxu0
  %v1254 = vadd.f32 %v1190, %v1253
  %v1255 = vpop.f32.mrf.mxu0
  %v1256 = vadd.f32 %v1192, %v1255
  %1257 = vmatmul.bf16.gmra.mxu0 %v237
  %v1258 = vpop.f32.mrf.mxu0
  %v1259 = vadd.f32 %v1195, %v1258
  %v1260 = vpop.f32.mrf.mxu0
  %v1261 = vadd.f32 %v1197, %v1260
  %1262 = vmatmul.bf16.gmra.mxu0 %v239
  %v1263 = vpop.f32.mrf.mxu0
  %v1264 = vadd.f32 %v1200, %v1263
  %v1265 = vpop.f32.mrf.mxu0
  %v1266 = vadd.f32 %v1202, %v1265
  %1267 = vmatmul.bf16.gmra.mxu0 %v241
  %v1268 = vpop.f32.mrf.mxu0
  %v1269 = vadd.f32 %v1205, %v1268
  %v1270 = vpop.f32.mrf.mxu0
  %v1271 = vadd.f32 %v1207, %v1270
  %1272 = vmatmul.bf16.gmra.mxu0 %v243
  %v1273 = vpop.f32.mrf.mxu0
  %v1274 = vadd.f32 %v1210, %v1273
  %v1275 = vpop.f32.mrf.mxu0
  %v1276 = vadd.f32 %v1212, %v1275
  %1277 = vmatmul.bf16.gmra.mxu0 %v245
  %v1278 = vpop.f32.mrf.mxu0
  %v1279 = vadd.f32 %v1215, %v1278
  %v1280 = vpop.f32.mrf.mxu0
  %v1281 = vadd.f32 %v1217, %v1280
  %1282 = vmatmul.bf16.gmra.mxu0 %v247
  %v1283 = vpop.f32.mrf.mxu0
  %v1284 = vadd.f32 %v1220, %v1283
  %v1285 = vpop.f32.mrf.mxu0
  %v1286 = vadd.f32 %v1222, %v1285
  %1287 = vmatmul.bf16.gmra.mxu0 %v249
  %v1288 = vpop.f32.mrf.mxu0
  %v1289 = vadd.f32 %v1225, %v1288
  %v1290 = vpop.f32.mrf.mxu0
  %v1291 = vadd.f32 %v1227, %v1290
  %1292 = vmatmul.bf16.gmra.mxu0 %v251
  %v1293 = vpop.f32.mrf.mxu0
  %v1294 = vadd.f32 %v1230, %v1293
  %v1295 = vpop.f32.mrf.mxu0
  %v1296 = vadd.f32 %v1232, %v1295
  %1297 = vdwg.mxu0
  %1298 = vmatpush.bf16.msra.mxu0 %v717
  %1299 = vmatpush.bf16.msra.mxu0 %v709
  %1300 = vmatpush.bf16.msra.mxu0 %v701
  %1301 = vmatpush.bf16.msra.mxu0 %v693
  %1302 = vmatpush.bf16.msra.mxu0 %v685
  %1303 = vmatpush.bf16.msra.mxu0 %v677
  %1304 = vmatpush.bf16.msra.mxu0 %v669
  %1305 = vmatpush.bf16.msra.mxu0 %v661
  %1306 = vmatmul.bf16.gmra.mxu0 %v230
  %v1307 = vpop.f32.mrf.mxu0
  %v1308 = vadd.f32 0.0, %v1307
  %v1309 = vpop.f32.mrf.mxu0
  %v1310 = vadd.f32 0.0, %v1309
  %1311 = vmatmul.bf16.gmra.mxu0 %v232
  %v1312 = vpop.f32.mrf.mxu0
  %v1313 = vadd.f32 0.0, %v1312
  %v1314 = vpop.f32.mrf.mxu0
  %v1315 = vadd.f32 0.0, %v1314
  %1316 = vmatmul.bf16.gmra.mxu0 %v234
  %v1317 = vpop.f32.mrf.mxu0
  %v1318 = vadd.f32 0.0, %v1317
  %v1319 = vpop.f32.mrf.mxu0
  %v1320 = vadd.f32 0.0, %v1319
  %1321 = vmatmul.bf16.gmra.mxu0 %v236
  %v1322 = vpop.f32.mrf.mxu0
  %v1323 = vadd.f32 0.0, %v1322
  %v1324 = vpop.f32.mrf.mxu0
  %v1325 = vadd.f32 0.0, %v1324
  %1326 = vmatmul.bf16.gmra.mxu0 %v238
  %v1327 = vpop.f32.mrf.mxu0
  %v1328 = vadd.f32 0.0, %v1327
  %v1329 = vpop.f32.mrf.mxu0
  %v1330 = vadd.f32 0.0, %v1329
  %1331 = vmatmul.bf16.gmra.mxu0 %v240
  %v1332 = vpop.f32.mrf.mxu0
  %v1333 = vadd.f32 0.0, %v1332
  %v1334 = vpop.f32.mrf.mxu0
  %v1335 = vadd.f32 0.0, %v1334
  %1336 = vmatmul.bf16.gmra.mxu0 %v242
  %v1337 = vpop.f32.mrf.mxu0
  %v1338 = vadd.f32 0.0, %v1337
  %v1339 = vpop.f32.mrf.mxu0
  %v1340 = vadd.f32 0.0, %v1339
  %1341 = vmatmul.bf16.gmra.mxu0 %v244
  %v1342 = vpop.f32.mrf.mxu0
  %v1343 = vadd.f32 0.0, %v1342
  %v1344 = vpop.f32.mrf.mxu0
  %v1345 = vadd.f32 0.0, %v1344
  %1346 = vmatmul.bf16.gmra.mxu0 %v246
  %v1347 = vpop.f32.mrf.mxu0
  %v1348 = vadd.f32 0.0, %v1347
  %v1349 = vpop.f32.mrf.mxu0
  %v1350 = vadd.f32 0.0, %v1349
  %1351 = vmatmul.bf16.gmra.mxu0 %v248
  %v1352 = vpop.f32.mrf.mxu0
  %v1353 = vadd.f32 0.0, %v1352
  %v1354 = vpop.f32.mrf.mxu0
  %v1355 = vadd.f32 0.0, %v1354
  %1356 = vmatmul.bf16.gmra.mxu0 %v250
  %v1357 = vpop.f32.mrf.mxu0
  %v1358 = vadd.f32 0.0, %v1357
  %v1359 = vpop.f32.mrf.mxu0
  %v1360 = vadd.f32 0.0, %v1359
  %1361 = vdwg.mxu0
  %1362 = vmatpush.bf16.msra.mxu0 %v781
  %1363 = vmatpush.bf16.msra.mxu0 %v773
  %1364 = vmatpush.bf16.msra.mxu0 %v765
  %1365 = vmatpush.bf16.msra.mxu0 %v757
  %1366 = vmatpush.bf16.msra.mxu0 %v749
  %1367 = vmatpush.bf16.msra.mxu0 %v741
  %1368 = vmatpush.bf16.msra.mxu0 %v733
  %1369 = vmatpush.bf16.msra.mxu0 %v725
  %1370 = vmatmul.bf16.gmra.mxu0 %v231
  %v1371 = vpop.f32.mrf.mxu0
  %v1372 = vadd.f32 %v1308, %v1371
  %v1373 = vpop.f32.mrf.mxu0
  %v1374 = vadd.f32 %v1310, %v1373
  %1375 = vmatmul.bf16.gmra.mxu0 %v233
  %v1376 = vpop.f32.mrf.mxu0
  %v1377 = vadd.f32 %v1313, %v1376
  %v1378 = vpop.f32.mrf.mxu0
  %v1379 = vadd.f32 %v1315, %v1378
  %1380 = vmatmul.bf16.gmra.mxu0 %v235
  %v1381 = vpop.f32.mrf.mxu0
  %v1382 = vadd.f32 %v1318, %v1381
  %v1383 = vpop.f32.mrf.mxu0
  %v1384 = vadd.f32 %v1320, %v1383
  %1385 = vmatmul.bf16.gmra.mxu0 %v237
  %v1386 = vpop.f32.mrf.mxu0
  %v1387 = vadd.f32 %v1323, %v1386
  %v1388 = vpop.f32.mrf.mxu0
  %v1389 = vadd.f32 %v1325, %v1388
  %1390 = vmatmul.bf16.gmra.mxu0 %v239
  %v1391 = vpop.f32.mrf.mxu0
  %v1392 = vadd.f32 %v1328, %v1391
  %v1393 = vpop.f32.mrf.mxu0
  %v1394 = vadd.f32 %v1330, %v1393
  %1395 = vmatmul.bf16.gmra.mxu0 %v241
  %v1396 = vpop.f32.mrf.mxu0
  %v1397 = vadd.f32 %v1333, %v1396
  %v1398 = vpop.f32.mrf.mxu0
  %v1399 = vadd.f32 %v1335, %v1398
  %1400 = vmatmul.bf16.gmra.mxu0 %v243
  %v1401 = vpop.f32.mrf.mxu0
  %v1402 = vadd.f32 %v1338, %v1401
  %v1403 = vpop.f32.mrf.mxu0
  %v1404 = vadd.f32 %v1340, %v1403
  %1405 = vmatmul.bf16.gmra.mxu0 %v245
  %v1406 = vpop.f32.mrf.mxu0
  %v1407 = vadd.f32 %v1343, %v1406
  %v1408 = vpop.f32.mrf.mxu0
  %v1409 = vadd.f32 %v1345, %v1408
  %1410 = vmatmul.bf16.gmra.mxu0 %v247
  %v1411 = vpop.f32.mrf.mxu0
  %v1412 = vadd.f32 %v1348, %v1411
  %v1413 = vpop.f32.mrf.mxu0
  %v1414 = vadd.f32 %v1350, %v1413
  %1415 = vmatmul.bf16.gmra.mxu0 %v249
  %v1416 = vpop.f32.mrf.mxu0
  %v1417 = vadd.f32 %v1353, %v1416
  %v1418 = vpop.f32.mrf.mxu0
  %v1419 = vadd.f32 %v1355, %v1418
  %1420 = vmatmul.bf16.gmra.mxu0 %v251
  %v1421 = vpop.f32.mrf.mxu0
  %v1422 = vadd.f32 %v1358, %v1421
  %v1423 = vpop.f32.mrf.mxu0
  %v1424 = vadd.f32 %v1360, %v1423
  %1425 = vdwg.mxu0
  %1426 = vmatpush.bf16.msra.mxu0 %v718
  %1427 = vmatpush.bf16.msra.mxu0 %v710
  %1428 = vmatpush.bf16.msra.mxu0 %v702
  %1429 = vmatpush.bf16.msra.mxu0 %v694
  %1430 = vmatpush.bf16.msra.mxu0 %v686
  %1431 = vmatpush.bf16.msra.mxu0 %v678
  %1432 = vmatpush.bf16.msra.mxu0 %v670
  %1433 = vmatpush.bf16.msra.mxu0 %v662
  %1434 = vmatmul.bf16.gmra.mxu0 %v230
  %v1435 = vpop.f32.mrf.mxu0
  %v1436 = vadd.f32 0.0, %v1435
  %v1437 = vpop.f32.mrf.mxu0
  %v1438 = vadd.f32 0.0, %v1437
  %1439 = vmatmul.bf16.gmra.mxu0 %v232
  %v1440 = vpop.f32.mrf.mxu0
  %v1441 = vadd.f32 0.0, %v1440
  %v1442 = vpop.f32.mrf.mxu0
  %v1443 = vadd.f32 0.0, %v1442
  %1444 = vmatmul.bf16.gmra.mxu0 %v234
  %v1445 = vpop.f32.mrf.mxu0
  %v1446 = vadd.f32 0.0, %v1445
  %v1447 = vpop.f32.mrf.mxu0
  %v1448 = vadd.f32 0.0, %v1447
  %1449 = vmatmul.bf16.gmra.mxu0 %v236
  %v1450 = vpop.f32.mrf.mxu0
  %v1451 = vadd.f32 0.0, %v1450
  %v1452 = vpop.f32.mrf.mxu0
  %v1453 = vadd.f32 0.0, %v1452
  %1454 = vmatmul.bf16.gmra.mxu0 %v238
  %v1455 = vpop.f32.mrf.mxu0
  %v1456 = vadd.f32 0.0, %v1455
  %v1457 = vpop.f32.mrf.mxu0
  %v1458 = vadd.f32 0.0, %v1457
  %1459 = vmatmul.bf16.gmra.mxu0 %v240
  %v1460 = vpop.f32.mrf.mxu0
  %v1461 = vadd.f32 0.0, %v1460
  %v1462 = vpop.f32.mrf.mxu0
  %v1463 = vadd.f32 0.0, %v1462
  %1464 = vmatmul.bf16.gmra.mxu0 %v242
  %v1465 = vpop.f32.mrf.mxu0
  %v1466 = vadd.f32 0.0, %v1465
  %v1467 = vpop.f32.mrf.mxu0
  %v1468 = vadd.f32 0.0, %v1467
  %1469 = vmatmul.bf16.gmra.mxu0 %v244
  %v1470 = vpop.f32.mrf.mxu0
  %v1471 = vadd.f32 0.0, %v1470
  %v1472 = vpop.f32.mrf.mxu0
  %v1473 = vadd.f32 0.0, %v1472
  %1474 = vmatmul.bf16.gmra.mxu0 %v246
  %v1475 = vpop.f32.mrf.mxu0
  %v1476 = vadd.f32 0.0, %v1475
  %v1477 = vpop.f32.mrf.mxu0
  %v1478 = vadd.f32 0.0, %v1477
  %1479 = vmatmul.bf16.gmra.mxu0 %v248
  %v1480 = vpop.f32.mrf.mxu0
  %v1481 = vadd.f32 0.0, %v1480
  %v1482 = vpop.f32.mrf.mxu0
  %v1483 = vadd.f32 0.0, %v1482
  %1484 = vmatmul.bf16.gmra.mxu0 %v250
  %v1485 = vpop.f32.mrf.mxu0
  %v1486 = vadd.f32 0.0, %v1485
  %v1487 = vpop.f32.mrf.mxu0
  %v1488 = vadd.f32 0.0, %v1487
  %1489 = vdwg.mxu0
  %1490 = vmatpush.bf16.msra.mxu0 %v782
  %1491 = vmatpush.bf16.msra.mxu0 %v774
  %1492 = vmatpush.bf16.msra.mxu0 %v766
  %1493 = vmatpush.bf16.msra.mxu0 %v758
  %1494 = vmatpush.bf16.msra.mxu0 %v750
  %1495 = vmatpush.bf16.msra.mxu0 %v742
  %1496 = vmatpush.bf16.msra.mxu0 %v734
  %1497 = vmatpush.bf16.msra.mxu0 %v726
  %1498 = vmatmul.bf16.gmra.mxu0 %v231
  %v1499 = vpop.f32.mrf.mxu0
  %v1500 = vadd.f32 %v1436, %v1499
  %v1501 = vpop.f32.mrf.mxu0
  %v1502 = vadd.f32 %v1438, %v1501
  %1503 = vmatmul.bf16.gmra.mxu0 %v233
  %v1504 = vpop.f32.mrf.mxu0
  %v1505 = vadd.f32 %v1441, %v1504
  %v1506 = vpop.f32.mrf.mxu0
  %v1507 = vadd.f32 %v1443, %v1506
  %1508 = vmatmul.bf16.gmra.mxu0 %v235
  %v1509 = vpop.f32.mrf.mxu0
  %v1510 = vadd.f32 %v1446, %v1509
  %v1511 = vpop.f32.mrf.mxu0
  %v1512 = vadd.f32 %v1448, %v1511
  %1513 = vmatmul.bf16.gmra.mxu0 %v237
  %v1514 = vpop.f32.mrf.mxu0
  %v1515 = vadd.f32 %v1451, %v1514
  %v1516 = vpop.f32.mrf.mxu0
  %v1517 = vadd.f32 %v1453, %v1516
  %1518 = vmatmul.bf16.gmra.mxu0 %v239
  %v1519 = vpop.f32.mrf.mxu0
  %v1520 = vadd.f32 %v1456, %v1519
  %v1521 = vpop.f32.mrf.mxu0
  %v1522 = vadd.f32 %v1458, %v1521
  %1523 = vmatmul.bf16.gmra.mxu0 %v241
  %v1524 = vpop.f32.mrf.mxu0
  %v1525 = vadd.f32 %v1461, %v1524
  %v1526 = vpop.f32.mrf.mxu0
  %v1527 = vadd.f32 %v1463, %v1526
  %1528 = vmatmul.bf16.gmra.mxu0 %v243
  %v1529 = vpop.f32.mrf.mxu0
  %v1530 = vadd.f32 %v1466, %v1529
  %v1531 = vpop.f32.mrf.mxu0
  %v1532 = vadd.f32 %v1468, %v1531
  %1533 = vmatmul.bf16.gmra.mxu0 %v245
  %v1534 = vpop.f32.mrf.mxu0
  %v1535 = vadd.f32 %v1471, %v1534
  %v1536 = vpop.f32.mrf.mxu0
  %v1537 = vadd.f32 %v1473, %v1536
  %1538 = vmatmul.bf16.gmra.mxu0 %v247
  %v1539 = vpop.f32.mrf.mxu0
  %v1540 = vadd.f32 %v1476, %v1539
  %v1541 = vpop.f32.mrf.mxu0
  %v1542 = vadd.f32 %v1478, %v1541
  %1543 = vmatmul.bf16.gmra.mxu0 %v249
  %v1544 = vpop.f32.mrf.mxu0
  %v1545 = vadd.f32 %v1481, %v1544
  %v1546 = vpop.f32.mrf.mxu0
  %v1547 = vadd.f32 %v1483, %v1546
  %1548 = vmatmul.bf16.gmra.mxu0 %v251
  %v1549 = vpop.f32.mrf.mxu0
  %v1550 = vadd.f32 %v1486, %v1549
  %v1551 = vpop.f32.mrf.mxu0
  %v1552 = vadd.f32 %v1488, %v1551
  %1553 = vdwg.mxu0
  %1554 = vmatpush.bf16.msra.mxu0 %v719
  %1555 = vmatpush.bf16.msra.mxu0 %v711
  %1556 = vmatpush.bf16.msra.mxu0 %v703
  %1557 = vmatpush.bf16.msra.mxu0 %v695
  %1558 = vmatpush.bf16.msra.mxu0 %v687
  %1559 = vmatpush.bf16.msra.mxu0 %v679
  %1560 = vmatpush.bf16.msra.mxu0 %v671
  %1561 = vmatpush.bf16.msra.mxu0 %v663
  %1562 = vmatmul.bf16.gmra.mxu0 %v230
  %v1563 = vpop.f32.mrf.mxu0
  %v1564 = vadd.f32 0.0, %v1563
  %v1565 = vpop.f32.mrf.mxu0
  %v1566 = vadd.f32 0.0, %v1565
  %1567 = vmatmul.bf16.gmra.mxu0 %v232
  %v1568 = vpop.f32.mrf.mxu0
  %v1569 = vadd.f32 0.0, %v1568
  %v1570 = vpop.f32.mrf.mxu0
  %v1571 = vadd.f32 0.0, %v1570
  %1572 = vmatmul.bf16.gmra.mxu0 %v234
  %v1573 = vpop.f32.mrf.mxu0
  %v1574 = vadd.f32 0.0, %v1573
  %v1575 = vpop.f32.mrf.mxu0
  %v1576 = vadd.f32 0.0, %v1575
  %1577 = vmatmul.bf16.gmra.mxu0 %v236
  %v1578 = vpop.f32.mrf.mxu0
  %v1579 = vadd.f32 0.0, %v1578
  %v1580 = vpop.f32.mrf.mxu0
  %v1581 = vadd.f32 0.0, %v1580
  %1582 = vmatmul.bf16.gmra.mxu0 %v238
  %v1583 = vpop.f32.mrf.mxu0
  %v1584 = vadd.f32 0.0, %v1583
  %v1585 = vpop.f32.mrf.mxu0
  %v1586 = vadd.f32 0.0, %v1585
  %1587 = vmatmul.bf16.gmra.mxu0 %v240
  %v1588 = vpop.f32.mrf.mxu0
  %v1589 = vadd.f32 0.0, %v1588
  %v1590 = vpop.f32.mrf.mxu0
  %v1591 = vadd.f32 0.0, %v1590
  %1592 = vmatmul.bf16.gmra.mxu0 %v242
  %v1593 = vpop.f32.mrf.mxu0
  %v1594 = vadd.f32 0.0, %v1593
  %v1595 = vpop.f32.mrf.mxu0
  %v1596 = vadd.f32 0.0, %v1595
  %1597 = vmatmul.bf16.gmra.mxu0 %v244
  %v1598 = vpop.f32.mrf.mxu0
  %v1599 = vadd.f32 0.0, %v1598
  %v1600 = vpop.f32.mrf.mxu0
  %v1601 = vadd.f32 0.0, %v1600
  %1602 = vmatmul.bf16.gmra.mxu0 %v246
  %v1603 = vpop.f32.mrf.mxu0
  %v1604 = vadd.f32 0.0, %v1603
  %v1605 = vpop.f32.mrf.mxu0
  %v1606 = vadd.f32 0.0, %v1605
  %1607 = vmatmul.bf16.gmra.mxu0 %v248
  %v1608 = vpop.f32.mrf.mxu0
  %v1609 = vadd.f32 0.0, %v1608
  %v1610 = vpop.f32.mrf.mxu0
  %v1611 = vadd.f32 0.0, %v1610
  %1612 = vmatmul.bf16.gmra.mxu0 %v250
  %v1613 = vpop.f32.mrf.mxu0
  %v1614 = vadd.f32 0.0, %v1613
  %v1615 = vpop.f32.mrf.mxu0
  %v1616 = vadd.f32 0.0, %v1615
  %1617 = vdwg.mxu0
  %1618 = vmatpush.bf16.msra.mxu0 %v783
  %1619 = vmatpush.bf16.msra.mxu0 %v775
  %1620 = vmatpush.bf16.msra.mxu0 %v767
  %1621 = vmatpush.bf16.msra.mxu0 %v759
  %1622 = vmatpush.bf16.msra.mxu0 %v751
  %1623 = vmatpush.bf16.msra.mxu0 %v743
  %1624 = vmatpush.bf16.msra.mxu0 %v735
  %1625 = vmatpush.bf16.msra.mxu0 %v727
  %1626 = vmatmul.bf16.gmra.mxu0 %v231
  %v1627 = vpop.f32.mrf.mxu0
  %v1628 = vadd.f32 %v1564, %v1627
  %v1629 = vpop.f32.mrf.mxu0
  %v1630 = vadd.f32 %v1566, %v1629
  %1631 = vmatmul.bf16.gmra.mxu0 %v233
  %v1632 = vpop.f32.mrf.mxu0
  %v1633 = vadd.f32 %v1569, %v1632
  %v1634 = vpop.f32.mrf.mxu0
  %v1635 = vadd.f32 %v1571, %v1634
  %1636 = vmatmul.bf16.gmra.mxu0 %v235
  %v1637 = vpop.f32.mrf.mxu0
  %v1638 = vadd.f32 %v1574, %v1637
  %v1639 = vpop.f32.mrf.mxu0
  %v1640 = vadd.f32 %v1576, %v1639
  %1641 = vmatmul.bf16.gmra.mxu0 %v237
  %v1642 = vpop.f32.mrf.mxu0
  %v1643 = vadd.f32 %v1579, %v1642
  %v1644 = vpop.f32.mrf.mxu0
  %v1645 = vadd.f32 %v1581, %v1644
  %1646 = vmatmul.bf16.gmra.mxu0 %v239
  %v1647 = vpop.f32.mrf.mxu0
  %v1648 = vadd.f32 %v1584, %v1647
  %v1649 = vpop.f32.mrf.mxu0
  %v1650 = vadd.f32 %v1586, %v1649
  %1651 = vmatmul.bf16.gmra.mxu0 %v241
  %v1652 = vpop.f32.mrf.mxu0
  %v1653 = vadd.f32 %v1589, %v1652
  %v1654 = vpop.f32.mrf.mxu0
  %v1655 = vadd.f32 %v1591, %v1654
  %1656 = vmatmul.bf16.gmra.mxu0 %v243
  %v1657 = vpop.f32.mrf.mxu0
  %v1658 = vadd.f32 %v1594, %v1657
  %v1659 = vpop.f32.mrf.mxu0
  %v1660 = vadd.f32 %v1596, %v1659
  %1661 = vmatmul.bf16.gmra.mxu0 %v245
  %v1662 = vpop.f32.mrf.mxu0
  %v1663 = vadd.f32 %v1599, %v1662
  %v1664 = vpop.f32.mrf.mxu0
  %v1665 = vadd.f32 %v1601, %v1664
  %1666 = vmatmul.bf16.gmra.mxu0 %v247
  %v1667 = vpop.f32.mrf.mxu0
  %v1668 = vadd.f32 %v1604, %v1667
  %v1669 = vpop.f32.mrf.mxu0
  %v1670 = vadd.f32 %v1606, %v1669
  %1671 = vmatmul.bf16.gmra.mxu0 %v249
  %v1672 = vpop.f32.mrf.mxu0
  %v1673 = vadd.f32 %v1609, %v1672
  %v1674 = vpop.f32.mrf.mxu0
  %v1675 = vadd.f32 %v1611, %v1674
  %1676 = vmatmul.bf16.gmra.mxu0 %v251
  %v1677 = vpop.f32.mrf.mxu0
  %v1678 = vadd.f32 %v1614, %v1677
  %v1679 = vpop.f32.mrf.mxu0
  %v1680 = vadd.f32 %v1616, %v1679
  %1681 = vdwg.mxu0
  %1682 = vmatpush.bf16.msra.mxu0 %v720
  %1683 = vmatpush.bf16.msra.mxu0 %v712
  %1684 = vmatpush.bf16.msra.mxu0 %v704
  %1685 = vmatpush.bf16.msra.mxu0 %v696
  %1686 = vmatpush.bf16.msra.mxu0 %v688
  %1687 = vmatpush.bf16.msra.mxu0 %v680
  %1688 = vmatpush.bf16.msra.mxu0 %v672
  %1689 = vmatpush.bf16.msra.mxu0 %v664
  %1690 = vmatmul.bf16.gmra.mxu0 %v230
  %v1691 = vpop.f32.mrf.mxu0
  %v1692 = vadd.f32 0.0, %v1691
  %v1693 = vpop.f32.mrf.mxu0
  %v1694 = vadd.f32 0.0, %v1693
  %1695 = vmatmul.bf16.gmra.mxu0 %v232
  %v1696 = vpop.f32.mrf.mxu0
  %v1697 = vadd.f32 0.0, %v1696
  %v1698 = vpop.f32.mrf.mxu0
  %v1699 = vadd.f32 0.0, %v1698
  %1700 = vmatmul.bf16.gmra.mxu0 %v234
  %v1701 = vpop.f32.mrf.mxu0
  %v1702 = vadd.f32 0.0, %v1701
  %v1703 = vpop.f32.mrf.mxu0
  %v1704 = vadd.f32 0.0, %v1703
  %1705 = vmatmul.bf16.gmra.mxu0 %v236
  %v1706 = vpop.f32.mrf.mxu0
  %v1707 = vadd.f32 0.0, %v1706
  %v1708 = vpop.f32.mrf.mxu0
  %v1709 = vadd.f32 0.0, %v1708
  %1710 = vmatmul.bf16.gmra.mxu0 %v238
  %v1711 = vpop.f32.mrf.mxu0
  %v1712 = vadd.f32 0.0, %v1711
  %v1713 = vpop.f32.mrf.mxu0
  %v1714 = vadd.f32 0.0, %v1713
  %1715 = vmatmul.bf16.gmra.mxu0 %v240
  %v1716 = vpop.f32.mrf.mxu0
  %v1717 = vadd.f32 0.0, %v1716
  %v1718 = vpop.f32.mrf.mxu0
  %v1719 = vadd.f32 0.0, %v1718
  %1720 = vmatmul.bf16.gmra.mxu0 %v242
  %v1721 = vpop.f32.mrf.mxu0
  %v1722 = vadd.f32 0.0, %v1721
  %v1723 = vpop.f32.mrf.mxu0
  %v1724 = vadd.f32 0.0, %v1723
  %1725 = vmatmul.bf16.gmra.mxu0 %v244
  %v1726 = vpop.f32.mrf.mxu0
  %v1727 = vadd.f32 0.0, %v1726
  %v1728 = vpop.f32.mrf.mxu0
  %v1729 = vadd.f32 0.0, %v1728
  %1730 = vmatmul.bf16.gmra.mxu0 %v246
  %v1731 = vpop.f32.mrf.mxu0
  %v1732 = vadd.f32 0.0, %v1731
  %v1733 = vpop.f32.mrf.mxu0
  %v1734 = vadd.f32 0.0, %v1733
  %1735 = vmatmul.bf16.gmra.mxu0 %v248
  %v1736 = vpop.f32.mrf.mxu0
  %v1737 = vadd.f32 0.0, %v1736
  %v1738 = vpop.f32.mrf.mxu0
  %v1739 = vadd.f32 0.0, %v1738
  %1740 = vmatmul.bf16.gmra.mxu0 %v250
  %v1741 = vpop.f32.mrf.mxu0
  %v1742 = vadd.f32 0.0, %v1741
  %v1743 = vpop.f32.mrf.mxu0
  %v1744 = vadd.f32 0.0, %v1743
  %1745 = vdwg.mxu0
  %1746 = vmatpush.bf16.msra.mxu0 %v784
  %1747 = vmatpush.bf16.msra.mxu0 %v776
  %1748 = vmatpush.bf16.msra.mxu0 %v768
  %1749 = vmatpush.bf16.msra.mxu0 %v760
  %1750 = vmatpush.bf16.msra.mxu0 %v752
  %1751 = vmatpush.bf16.msra.mxu0 %v744
  %1752 = vmatpush.bf16.msra.mxu0 %v736
  %1753 = vmatpush.bf16.msra.mxu0 %v728
  %1754 = vmatmul.bf16.gmra.mxu0 %v231
  %v1755 = vpop.f32.mrf.mxu0
  %v1756 = vadd.f32 %v1692, %v1755
  %v1757 = vpop.f32.mrf.mxu0
  %v1758 = vadd.f32 %v1694, %v1757
  %1759 = vmatmul.bf16.gmra.mxu0 %v233
  %v1760 = vpop.f32.mrf.mxu0
  %v1761 = vadd.f32 %v1697, %v1760
  %v1762 = vpop.f32.mrf.mxu0
  %v1763 = vadd.f32 %v1699, %v1762
  %1764 = vmatmul.bf16.gmra.mxu0 %v235
  %v1765 = vpop.f32.mrf.mxu0
  %v1766 = vadd.f32 %v1702, %v1765
  %v1767 = vpop.f32.mrf.mxu0
  %v1768 = vadd.f32 %v1704, %v1767
  %1769 = vmatmul.bf16.gmra.mxu0 %v237
  %v1770 = vpop.f32.mrf.mxu0
  %v1771 = vadd.f32 %v1707, %v1770
  %v1772 = vpop.f32.mrf.mxu0
  %v1773 = vadd.f32 %v1709, %v1772
  %1774 = vmatmul.bf16.gmra.mxu0 %v239
  %v1775 = vpop.f32.mrf.mxu0
  %v1776 = vadd.f32 %v1712, %v1775
  %v1777 = vpop.f32.mrf.mxu0
  %v1778 = vadd.f32 %v1714, %v1777
  %1779 = vmatmul.bf16.gmra.mxu0 %v241
  %v1780 = vpop.f32.mrf.mxu0
  %v1781 = vadd.f32 %v1717, %v1780
  %v1782 = vpop.f32.mrf.mxu0
  %v1783 = vadd.f32 %v1719, %v1782
  %1784 = vmatmul.bf16.gmra.mxu0 %v243
  %v1785 = vpop.f32.mrf.mxu0
  %v1786 = vadd.f32 %v1722, %v1785
  %v1787 = vpop.f32.mrf.mxu0
  %v1788 = vadd.f32 %v1724, %v1787
  %1789 = vmatmul.bf16.gmra.mxu0 %v245
  %v1790 = vpop.f32.mrf.mxu0
  %v1791 = vadd.f32 %v1727, %v1790
  %v1792 = vpop.f32.mrf.mxu0
  %v1793 = vadd.f32 %v1729, %v1792
  %1794 = vmatmul.bf16.gmra.mxu0 %v247
  %v1795 = vpop.f32.mrf.mxu0
  %v1796 = vadd.f32 %v1732, %v1795
  %v1797 = vpop.f32.mrf.mxu0
  %v1798 = vadd.f32 %v1734, %v1797
  %1799 = vmatmul.bf16.gmra.mxu0 %v249
  %v1800 = vpop.f32.mrf.mxu0
  %v1801 = vadd.f32 %v1737, %v1800
  %v1802 = vpop.f32.mrf.mxu0
  %v1803 = vadd.f32 %v1739, %v1802
  %1804 = vmatmul.bf16.gmra.mxu0 %v251
  %v1805 = vpop.f32.mrf.mxu0
  %v1806 = vadd.f32 %v1742, %v1805
  %v1807 = vpop.f32.mrf.mxu0
  %v1808 = vadd.f32 %v1744, %v1807
  %1809 = vdwg.mxu0
  %1810 = vmatpush.bf16.msra.mxu0 %v721
  %1811 = vmatpush.bf16.msra.mxu0 %v713
  %1812 = vmatpush.bf16.msra.mxu0 %v705
  %1813 = vmatpush.bf16.msra.mxu0 %v697
  %1814 = vmatpush.bf16.msra.mxu0 %v689
  %1815 = vmatpush.bf16.msra.mxu0 %v681
  %1816 = vmatpush.bf16.msra.mxu0 %v673
  %1817 = vmatpush.bf16.msra.mxu0 %v665
  %1818 = vmatmul.bf16.gmra.mxu0 %v230
  %v1819 = vpop.f32.mrf.mxu0
  %v1820 = vadd.f32 0.0, %v1819
  %v1821 = vpop.f32.mrf.mxu0
  %v1822 = vadd.f32 0.0, %v1821
  %1823 = vmatmul.bf16.gmra.mxu0 %v232
  %v1824 = vpop.f32.mrf.mxu0
  %v1825 = vadd.f32 0.0, %v1824
  %v1826 = vpop.f32.mrf.mxu0
  %v1827 = vadd.f32 0.0, %v1826
  %1828 = vmatmul.bf16.gmra.mxu0 %v234
  %v1829 = vpop.f32.mrf.mxu0
  %v1830 = vadd.f32 0.0, %v1829
  %v1831 = vpop.f32.mrf.mxu0
  %v1832 = vadd.f32 0.0, %v1831
  %1833 = vmatmul.bf16.gmra.mxu0 %v236
  %v1834 = vpop.f32.mrf.mxu0
  %v1835 = vadd.f32 0.0, %v1834
  %v1836 = vpop.f32.mrf.mxu0
  %v1837 = vadd.f32 0.0, %v1836
  %1838 = vmatmul.bf16.gmra.mxu0 %v238
  %v1839 = vpop.f32.mrf.mxu0
  %v1840 = vadd.f32 0.0, %v1839
  %v1841 = vpop.f32.mrf.mxu0
  %v1842 = vadd.f32 0.0, %v1841
  %1843 = vmatmul.bf16.gmra.mxu0 %v240
  %v1844 = vpop.f32.mrf.mxu0
  %v1845 = vadd.f32 0.0, %v1844
  %v1846 = vpop.f32.mrf.mxu0
  %v1847 = vadd.f32 0.0, %v1846
  %1848 = vmatmul.bf16.gmra.mxu0 %v242
  %v1849 = vpop.f32.mrf.mxu0
  %v1850 = vadd.f32 0.0, %v1849
  %v1851 = vpop.f32.mrf.mxu0
  %v1852 = vadd.f32 0.0, %v1851
  %1853 = vmatmul.bf16.gmra.mxu0 %v244
  %v1854 = vpop.f32.mrf.mxu0
  %v1855 = vadd.f32 0.0, %v1854
  %v1856 = vpop.f32.mrf.mxu0
  %v1857 = vadd.f32 0.0, %v1856
  %1858 = vmatmul.bf16.gmra.mxu0 %v246
  %v1859 = vpop.f32.mrf.mxu0
  %v1860 = vadd.f32 0.0, %v1859
  %v1861 = vpop.f32.mrf.mxu0
  %v1862 = vadd.f32 0.0, %v1861
  %1863 = vmatmul.bf16.gmra.mxu0 %v248
  %v1864 = vpop.f32.mrf.mxu0
  %v1865 = vadd.f32 0.0, %v1864
  %v1866 = vpop.f32.mrf.mxu0
  %v1867 = vadd.f32 0.0, %v1866
  %1868 = vmatmul.bf16.gmra.mxu0 %v250
  %v1869 = vpop.f32.mrf.mxu0
  %v1870 = vadd.f32 0.0, %v1869
  %v1871 = vpop.f32.mrf.mxu0
  %v1872 = vadd.f32 0.0, %v1871
  %1873 = vdwg.mxu0
  %1874 = vmatpush.bf16.msra.mxu0 %v785
  %1875 = vmatpush.bf16.msra.mxu0 %v777
  %1876 = vmatpush.bf16.msra.mxu0 %v769
  %1877 = vmatpush.bf16.msra.mxu0 %v761
  %1878 = vmatpush.bf16.msra.mxu0 %v753
  %1879 = vmatpush.bf16.msra.mxu0 %v745
  %1880 = vmatpush.bf16.msra.mxu0 %v737
  %1881 = vmatpush.bf16.msra.mxu0 %v729
  %1882 = vmatmul.bf16.gmra.mxu0 %v231
  %v1883 = vpop.f32.mrf.mxu0
  %v1884 = vadd.f32 %v1820, %v1883
  %v1885 = vpop.f32.mrf.mxu0
  %v1886 = vadd.f32 %v1822, %v1885
  %1887 = vmatmul.bf16.gmra.mxu0 %v233
  %v1888 = vpop.f32.mrf.mxu0
  %v1889 = vadd.f32 %v1825, %v1888
  %v1890 = vpop.f32.mrf.mxu0
  %v1891 = vadd.f32 %v1827, %v1890
  %1892 = vmatmul.bf16.gmra.mxu0 %v235
  %v1893 = vpop.f32.mrf.mxu0
  %v1894 = vadd.f32 %v1830, %v1893
  %v1895 = vpop.f32.mrf.mxu0
  %v1896 = vadd.f32 %v1832, %v1895
  %1897 = vmatmul.bf16.gmra.mxu0 %v237
  %v1898 = vpop.f32.mrf.mxu0
  %v1899 = vadd.f32 %v1835, %v1898
  %v1900 = vpop.f32.mrf.mxu0
  %v1901 = vadd.f32 %v1837, %v1900
  %1902 = vmatmul.bf16.gmra.mxu0 %v239
  %v1903 = vpop.f32.mrf.mxu0
  %v1904 = vadd.f32 %v1840, %v1903
  %v1905 = vpop.f32.mrf.mxu0
  %v1906 = vadd.f32 %v1842, %v1905
  %1907 = vmatmul.bf16.gmra.mxu0 %v241
  %v1908 = vpop.f32.mrf.mxu0
  %v1909 = vadd.f32 %v1845, %v1908
  %v1910 = vpop.f32.mrf.mxu0
  %v1911 = vadd.f32 %v1847, %v1910
  %1912 = vmatmul.bf16.gmra.mxu0 %v243
  %v1913 = vpop.f32.mrf.mxu0
  %v1914 = vadd.f32 %v1850, %v1913
  %v1915 = vpop.f32.mrf.mxu0
  %v1916 = vadd.f32 %v1852, %v1915
  %1917 = vmatmul.bf16.gmra.mxu0 %v245
  %v1918 = vpop.f32.mrf.mxu0
  %v1919 = vadd.f32 %v1855, %v1918
  %v1920 = vpop.f32.mrf.mxu0
  %v1921 = vadd.f32 %v1857, %v1920
  %1922 = vmatmul.bf16.gmra.mxu0 %v247
  %v1923 = vpop.f32.mrf.mxu0
  %v1924 = vadd.f32 %v1860, %v1923
  %v1925 = vpop.f32.mrf.mxu0
  %v1926 = vadd.f32 %v1862, %v1925
  %1927 = vmatmul.bf16.gmra.mxu0 %v249
  %v1928 = vpop.f32.mrf.mxu0
  %v1929 = vadd.f32 %v1865, %v1928
  %v1930 = vpop.f32.mrf.mxu0
  %v1931 = vadd.f32 %v1867, %v1930
  %1932 = vmatmul.bf16.gmra.mxu0 %v251
  %v1933 = vpop.f32.mrf.mxu0
  %v1934 = vadd.f32 %v1870, %v1933
  %v1935 = vpop.f32.mrf.mxu0
  %v1936 = vadd.f32 %v1872, %v1935
  %1937 = vdwg.mxu0
  %v1938 = vmax.f32 %v988, %v1244
  %v1939 = vmax.f32 %v1116, %v1372
  %v1940 = vmax.f32 %v990, %v1246
  %v1941 = vmax.f32 %v1118, %v1374
  %v1942 = vmax.f32 %v993, %v1249
  %v1943 = vmax.f32 %v1121, %v1377
  %v1944 = vmax.f32 %v995, %v1251
  %v1945 = vmax.f32 %v1123, %v1379
  %v1946 = vmax.f32 %v998, %v1254
  %v1947 = vmax.f32 %v1126, %v1382
  %v1948 = vmax.f32 %v1000, %v1256
  %v1949 = vmax.f32 %v1128, %v1384
  %v1950 = vmax.f32 %v1003, %v1259
  %v1951 = vmax.f32 %v1131, %v1387
  %v1952 = vmax.f32 %v1005, %v1261
  %v1953 = vmax.f32 %v1133, %v1389
  %v1954 = vmax.f32 %v1008, %v1264
  %v1955 = vmax.f32 %v1136, %v1392
  %v1956 = vmax.f32 %v1010, %v1266
  %v1957 = vmax.f32 %v1138, %v1394
  %v1958 = vmax.f32 %v1013, %v1269
  %v1959 = vmax.f32 %v1141, %v1397
  %v1960 = vmax.f32 %v1015, %v1271
  %v1961 = vmax.f32 %v1143, %v1399
  %v1962 = vmax.f32 %v1018, %v1274
  %v1963 = vmax.f32 %v1146, %v1402
  %v1964 = vmax.f32 %v1020, %v1276
  %v1965 = vmax.f32 %v1148, %v1404
  %v1966 = vmax.f32 %v1023, %v1279
  %v1967 = vmax.f32 %v1151, %v1407
  %v1968 = vmax.f32 %v1025, %v1281
  %v1969 = vmax.f32 %v1153, %v1409
  %v1970 = vmax.f32 %v1028, %v1284
  %v1971 = vmax.f32 %v1156, %v1412
  %v1972 = vmax.f32 %v1030, %v1286
  %v1973 = vmax.f32 %v1158, %v1414
  %v1974 = vmax.f32 %v1033, %v1289
  %v1975 = vmax.f32 %v1161, %v1417
  %v1976 = vmax.f32 %v1035, %v1291
  %v1977 = vmax.f32 %v1163, %v1419
  %v1978 = vmax.f32 %v1038, %v1294
  %v1979 = vmax.f32 %v1166, %v1422
  %v1980 = vmax.f32 %v1040, %v1296
  %v1981 = vmax.f32 %v1168, %v1424
  %v1982 = vmax.f32 %v1500, %v1756
  %v1983 = vmax.f32 %v1628, %v1884
  %v1984 = vmax.f32 %v1502, %v1758
  %v1985 = vmax.f32 %v1630, %v1886
  %v1986 = vmax.f32 %v1505, %v1761
  %v1987 = vmax.f32 %v1633, %v1889
  %v1988 = vmax.f32 %v1507, %v1763
  %v1989 = vmax.f32 %v1635, %v1891
  %v1990 = vmax.f32 %v1510, %v1766
  %v1991 = vmax.f32 %v1638, %v1894
  %v1992 = vmax.f32 %v1512, %v1768
  %v1993 = vmax.f32 %v1640, %v1896
  %v1994 = vmax.f32 %v1515, %v1771
  %v1995 = vmax.f32 %v1643, %v1899
  %v1996 = vmax.f32 %v1517, %v1773
  %v1997 = vmax.f32 %v1645, %v1901
  %v1998 = vmax.f32 %v1520, %v1776
  %v1999 = vmax.f32 %v1648, %v1904
  %v2000 = vmax.f32 %v1522, %v1778
  %v2001 = vmax.f32 %v1650, %v1906
  %v2002 = vmax.f32 %v1525, %v1781
  %v2003 = vmax.f32 %v1653, %v1909
  %v2004 = vmax.f32 %v1527, %v1783
  %v2005 = vmax.f32 %v1655, %v1911
  %v2006 = vmax.f32 %v1530, %v1786
  %v2007 = vmax.f32 %v1658, %v1914
  %v2008 = vmax.f32 %v1532, %v1788
  %v2009 = vmax.f32 %v1660, %v1916
  %v2010 = vmax.f32 %v1535, %v1791
  %v2011 = vmax.f32 %v1663, %v1919
  %v2012 = vmax.f32 %v1537, %v1793
  %v2013 = vmax.f32 %v1665, %v1921
  %v2014 = vmax.f32 %v1540, %v1796
  %v2015 = vmax.f32 %v1668, %v1924
  %v2016 = vmax.f32 %v1542, %v1798
  %v2017 = vmax.f32 %v1670, %v1926
  %v2018 = vmax.f32 %v1545, %v1801
  %v2019 = vmax.f32 %v1673, %v1929
  %v2020 = vmax.f32 %v1547, %v1803
  %v2021 = vmax.f32 %v1675, %v1931
  %v2022 = vmax.f32 %v1550, %v1806
  %v2023 = vmax.f32 %v1678, %v1934
  %v2024 = vmax.f32 %v1552, %v1808
  %v2025 = vmax.f32 %v1680, %v1936
  %v2026 = vmax.f32 %v1938, %v1982
  %v2027 = vmax.f32 %v1939, %v1983
  %v2028 = vmax.f32 %v1940, %v1984
  %v2029 = vmax.f32 %v1941, %v1985
  %v2030 = vmax.f32 %v1942, %v1986
  %v2031 = vmax.f32 %v1943, %v1987
  %v2032 = vmax.f32 %v1944, %v1988
  %v2033 = vmax.f32 %v1945, %v1989
  %v2034 = vmax.f32 %v1946, %v1990
  %v2035 = vmax.f32 %v1947, %v1991
  %v2036 = vmax.f32 %v1948, %v1992
  %v2037 = vmax.f32 %v1949, %v1993
  %v2038 = vmax.f32 %v1950, %v1994
  %v2039 = vmax.f32 %v1951, %v1995
  %v2040 = vmax.f32 %v1952, %v1996
  %v2041 = vmax.f32 %v1953, %v1997
  %v2042 = vmax.f32 %v1954, %v1998
  %v2043 = vmax.f32 %v1955, %v1999
  %v2044 = vmax.f32 %v1956, %v2000
  %v2045 = vmax.f32 %v1957, %v2001
  %v2046 = vmax.f32 %v1958, %v2002
  %v2047 = vmax.f32 %v1959, %v2003
  %v2048 = vmax.f32 %v1960, %v2004
  %v2049 = vmax.f32 %v1961, %v2005
  %v2050 = vmax.f32 %v1962, %v2006
  %v2051 = vmax.f32 %v1963, %v2007
  %v2052 = vmax.f32 %v1964, %v2008
  %v2053 = vmax.f32 %v1965, %v2009
  %v2054 = vmax.f32 %v1966, %v2010
  %v2055 = vmax.f32 %v1967, %v2011
  %v2056 = vmax.f32 %v1968, %v2012
  %v2057 = vmax.f32 %v1969, %v2013
  %v2058 = vmax.f32 %v1970, %v2014
  %v2059 = vmax.f32 %v1971, %v2015
  %v2060 = vmax.f32 %v1972, %v2016
  %v2061 = vmax.f32 %v1973, %v2017
  %v2062 = vmax.f32 %v1974, %v2018
  %v2063 = vmax.f32 %v1975, %v2019
  %v2064 = vmax.f32 %v1976, %v2020
  %v2065 = vmax.f32 %v1977, %v2021
  %v2066 = vmax.f32 %v1978, %v2022
  %v2067 = vmax.f32 %v1979, %v2023
  %v2068 = vmax.f32 %v1980, %v2024
  %v2069 = vmax.f32 %v1981, %v2025
  %v2070 = vld [vmem:[%s1] sm:$0xff]
  %v2071 = vld [vmem:[%s1 + $0x8] sm:$0xff]
  %v2072 = vld [vmem:[%s1 + $0x10] sm:$0xff]
  %v2073 = vld [vmem:[%s1 + $0x18] sm:$0xff]
  %v2074 = vld [vmem:[%s1 + $0x20] sm:$0xff]
  %v2075 = vld [vmem:[%s1 + $0x28] sm:$0xff]
  %v2076 = vld [vmem:[%s1 + $0x30] sm:$0xff]
  %v2077 = vld [vmem:[%s1 + $0x38] sm:$0xff]
  %v2078 = vld [vmem:[%s1 + $0x40] sm:$0xff]
  %v2079 = vld [vmem:[%s1 + $0x48] sm:$0xff]
  %v2080 = vld [vmem:[%s1 + $0x50] sm:$0xff]
  %v2081 = vld [vmem:[%s1 + $0x58] sm:$0xff]
  %v2082 = vld [vmem:[%s1 + $0x60] sm:$0xff]
  %v2083 = vld [vmem:[%s1 + $0x68] sm:$0xff]
  %v2084 = vld [vmem:[%s1 + $0x70] sm:$0xff]
  %v2085 = vld [vmem:[%s1 + $0x78] sm:$0xff]
  %v2086 = vld [vmem:[%s1 + $0x80] sm:$0xff]
  %v2087 = vld [vmem:[%s1 + $0x88] sm:$0xff]
  %v2088 = vld [vmem:[%s1 + $0x90] sm:$0xff]
  %v2089 = vld [vmem:[%s1 + $0x98] sm:$0xff]
  %v2090 = vld [vmem:[%s1 + $0xa0] sm:$0xff]
  %v2091 = vld [vmem:[%s1 + $0xa8] sm:$0xff]
  %2093 = vset.pattern.permute.xlu0 0
  %2094 = vperm.xlu0 %2093, %v2070
  %v2095 = vpop.permute.xlu0 %2094
  %2098 = vset.pattern.permute.xlu0 0
  %2099 = vperm.xlu0 %2098, %v2071
  %v2100 = vpop.permute.xlu0 %2099
  %2103 = vset.pattern.permute.xlu0 0
  %2104 = vperm.xlu0 %2103, %v2072
  %v2105 = vpop.permute.xlu0 %2104
  %2108 = vset.pattern.permute.xlu0 0
  %2109 = vperm.xlu0 %2108, %v2073
  %v2110 = vpop.permute.xlu0 %2109
  %2113 = vset.pattern.permute.xlu0 0
  %2114 = vperm.xlu0 %2113, %v2074
  %v2115 = vpop.permute.xlu0 %2114
  %2118 = vset.pattern.permute.xlu0 0
  %2119 = vperm.xlu0 %2118, %v2075
  %v2120 = vpop.permute.xlu0 %2119
  %2123 = vset.pattern.permute.xlu0 0
  %2124 = vperm.xlu0 %2123, %v2076
  %v2125 = vpop.permute.xlu0 %2124
  %2128 = vset.pattern.permute.xlu0 0
  %2129 = vperm.xlu0 %2128, %v2077
  %v2130 = vpop.permute.xlu0 %2129
  %2133 = vset.pattern.permute.xlu0 0
  %2134 = vperm.xlu0 %2133, %v2078
  %v2135 = vpop.permute.xlu0 %2134
  %2138 = vset.pattern.permute.xlu0 0
  %2139 = vperm.xlu0 %2138, %v2079
  %v2140 = vpop.permute.xlu0 %2139
  %2143 = vset.pattern.permute.xlu0 0
  %2144 = vperm.xlu0 %2143, %v2080
  %v2145 = vpop.permute.xlu0 %2144
  %2148 = vset.pattern.permute.xlu0 0
  %2149 = vperm.xlu0 %2148, %v2081
  %v2150 = vpop.permute.xlu0 %2149
  %2153 = vset.pattern.permute.xlu0 0
  %2154 = vperm.xlu0 %2153, %v2082
  %v2155 = vpop.permute.xlu0 %2154
  %2158 = vset.pattern.permute.xlu0 0
  %2159 = vperm.xlu0 %2158, %v2083
  %v2160 = vpop.permute.xlu0 %2159
  %2163 = vset.pattern.permute.xlu0 0
  %2164 = vperm.xlu0 %2163, %v2084
  %v2165 = vpop.permute.xlu0 %2164
  %2168 = vset.pattern.permute.xlu0 0
  %2169 = vperm.xlu0 %2168, %v2085
  %v2170 = vpop.permute.xlu0 %2169
  %2173 = vset.pattern.permute.xlu0 0
  %2174 = vperm.xlu0 %2173, %v2086
  %v2175 = vpop.permute.xlu0 %2174
  %2178 = vset.pattern.permute.xlu0 0
  %2179 = vperm.xlu0 %2178, %v2087
  %v2180 = vpop.permute.xlu0 %2179
  %2183 = vset.pattern.permute.xlu0 0
  %2184 = vperm.xlu0 %2183, %v2088
  %v2185 = vpop.permute.xlu0 %2184
  %2188 = vset.pattern.permute.xlu0 0
  %2189 = vperm.xlu0 %2188, %v2089
  %v2190 = vpop.permute.xlu0 %2189
  %2193 = vset.pattern.permute.xlu0 0
  %2194 = vperm.xlu0 %2193, %v2090
  %v2195 = vpop.permute.xlu0 %2194
  %2198 = vset.pattern.permute.xlu0 0
  %2199 = vperm.xlu0 %2198, %v2091
  %v2200 = vpop.permute.xlu0 %2199
  %v2202 = vadd.f32 %v2026, %v2095
  %v2203 = vadd.f32 %v2027, %v2095
  %v2204 = vadd.f32 %v2028, %v2100
  %v2205 = vadd.f32 %v2029, %v2100
  %v2206 = vadd.f32 %v2030, %v2105
  %v2207 = vadd.f32 %v2031, %v2105
  %v2208 = vadd.f32 %v2032, %v2110
  %v2209 = vadd.f32 %v2033, %v2110
  %v2210 = vadd.f32 %v2034, %v2115
  %v2211 = vadd.f32 %v2035, %v2115
  %v2212 = vadd.f32 %v2036, %v2120
  %v2213 = vadd.f32 %v2037, %v2120
  %v2214 = vadd.f32 %v2038, %v2125
  %v2215 = vadd.f32 %v2039, %v2125
  %v2216 = vadd.f32 %v2040, %v2130
  %v2217 = vadd.f32 %v2041, %v2130
  %v2218 = vadd.f32 %v2042, %v2135
  %v2219 = vadd.f32 %v2043, %v2135
  %v2220 = vadd.f32 %v2044, %v2140
  %v2221 = vadd.f32 %v2045, %v2140
  %v2222 = vadd.f32 %v2046, %v2145
  %v2223 = vadd.f32 %v2047, %v2145
  %v2224 = vadd.f32 %v2048, %v2150
  %v2225 = vadd.f32 %v2049, %v2150
  %v2226 = vadd.f32 %v2050, %v2155
  %v2227 = vadd.f32 %v2051, %v2155
  %v2228 = vadd.f32 %v2052, %v2160
  %v2229 = vadd.f32 %v2053, %v2160
  %v2230 = vadd.f32 %v2054, %v2165
  %v2231 = vadd.f32 %v2055, %v2165
  %v2232 = vadd.f32 %v2056, %v2170
  %v2233 = vadd.f32 %v2057, %v2170
  %v2234 = vadd.f32 %v2058, %v2175
  %v2235 = vadd.f32 %v2059, %v2175
  %v2236 = vadd.f32 %v2060, %v2180
  %v2237 = vadd.f32 %v2061, %v2180
  %v2238 = vadd.f32 %v2062, %v2185
  %v2239 = vadd.f32 %v2063, %v2185
  %v2240 = vadd.f32 %v2064, %v2190
  %v2241 = vadd.f32 %v2065, %v2190
  %v2242 = vadd.f32 %v2066, %v2195
  %v2243 = vadd.f32 %v2067, %v2195
  %v2244 = vadd.f32 %v2068, %v2200
  %v2245 = vadd.f32 %v2069, %v2200
  %v2246 = vmax.f32 %v2202, 0.0
  %v2247 = vmax.f32 %v2203, 0.0
  %v2248 = vmax.f32 %v2204, 0.0
  %v2249 = vmax.f32 %v2205, 0.0
  %v2250 = vmax.f32 %v2206, 0.0
  %v2251 = vmax.f32 %v2207, 0.0
  %v2252 = vmax.f32 %v2208, 0.0
  %v2253 = vmax.f32 %v2209, 0.0
  %v2254 = vmax.f32 %v2210, 0.0
  %v2255 = vmax.f32 %v2211, 0.0
  %v2256 = vmax.f32 %v2212, 0.0
  %v2257 = vmax.f32 %v2213, 0.0
  %v2258 = vmax.f32 %v2214, 0.0
  %v2259 = vmax.f32 %v2215, 0.0
  %v2260 = vmax.f32 %v2216, 0.0
  %v2261 = vmax.f32 %v2217, 0.0
  %v2262 = vmax.f32 %v2218, 0.0
  %v2263 = vmax.f32 %v2219, 0.0
  %v2264 = vmax.f32 %v2220, 0.0
  %v2265 = vmax.f32 %v2221, 0.0
  %v2266 = vmax.f32 %v2222, 0.0
  %v2267 = vmax.f32 %v2223, 0.0
  %v2268 = vmax.f32 %v2224, 0.0
  %v2269 = vmax.f32 %v2225, 0.0
  %v2270 = vmax.f32 %v2226, 0.0
  %v2271 = vmax.f32 %v2227, 0.0
  %v2272 = vmax.f32 %v2228, 0.0
  %v2273 = vmax.f32 %v2229, 0.0
  %v2274 = vmax.f32 %v2230, 0.0
  %v2275 = vmax.f32 %v2231, 0.0
  %v2276 = vmax.f32 %v2232, 0.0
  %v2277 = vmax.f32 %v2233, 0.0
  %v2278 = vmax.f32 %v2234, 0.0
  %v2279 = vmax.f32 %v2235, 0.0
  %v2280 = vmax.f32 %v2236, 0.0
  %v2281 = vmax.f32 %v2237, 0.0
  %v2282 = vmax.f32 %v2238, 0.0
  %v2283 = vmax.f32 %v2239, 0.0
  %v2284 = vmax.f32 %v2240, 0.0
  %v2285 = vmax.f32 %v2241, 0.0
  %v2286 = vmax.f32 %v2242, 0.0
  %v2287 = vmax.f32 %v2243, 0.0
  %v2288 = vmax.f32 %v2244, 0.0
  %v2289 = vmax.f32 %v2245, 0.0
  %v2290 = vpack.c.bf16 %v2247, %v2246
  %v2291 = vpack.c.bf16 %v2249, %v2248
  %v2292 = vpack.c.bf16 %v2251, %v2250
  %v2293 = vpack.c.bf16 %v2253, %v2252
  %v2294 = vpack.c.bf16 %v2255, %v2254
  %v2295 = vpack.c.bf16 %v2257, %v2256
  %v2296 = vpack.c.bf16 %v2259, %v2258
  %v2297 = vpack.c.bf16 %v2261, %v2260
  %v2298 = vpack.c.bf16 %v2263, %v2262
  %v2299 = vpack.c.bf16 %v2265, %v2264
  %v2300 = vpack.c.bf16 %v2267, %v2266
  %v2301 = vpack.c.bf16 %v2269, %v2268
  %v2302 = vpack.c.bf16 %v2271, %v2270
  %v2303 = vpack.c.bf16 %v2273, %v2272
  %v2304 = vpack.c.bf16 %v2275, %v2274
  %v2305 = vpack.c.bf16 %v2277, %v2276
  %v2306 = vpack.c.bf16 %v2279, %v2278
  %v2307 = vpack.c.bf16 %v2281, %v2280
  %v2308 = vpack.c.bf16 %v2283, %v2282
  %v2309 = vpack.c.bf16 %v2285, %v2284
  %v2310 = vpack.c.bf16 %v2287, %v2286
  %v2311 = vpack.c.bf16 %v2289, %v2288
  %2312 = vst [vmem:[%s3] sm:$0xff] %v2290
  %2313 = vst [vmem:[%s3 + $0x8] sm:$0xff] %v2291
  %2314 = vst [vmem:[%s3 + $0x10] sm:$0xff] %v2292
  %2315 = vst [vmem:[%s3 + $0x18] sm:$0xff] %v2293
  %2316 = vst [vmem:[%s3 + $0x20] sm:$0xff] %v2294
  %2317 = vst [vmem:[%s3 + $0x28] sm:$0xff] %v2295
  %2318 = vst [vmem:[%s3 + $0x30] sm:$0xff] %v2296
  %2319 = vst [vmem:[%s3 + $0x38] sm:$0xff] %v2297
  %2320 = vst [vmem:[%s3 + $0x40] sm:$0xff] %v2298
  %2321 = vst [vmem:[%s3 + $0x48] sm:$0xff] %v2299
  %2322 = vst [vmem:[%s3 + $0x50] sm:$0xff] %v2300
  %2323 = vst [vmem:[%s3 + $0x58] sm:$0xff] %v2301
  %2324 = vst [vmem:[%s3 + $0x60] sm:$0xff] %v2302
  %2325 = vst [vmem:[%s3 + $0x68] sm:$0xff] %v2303
  %2326 = vst [vmem:[%s3 + $0x70] sm:$0xff] %v2304
  %2327 = vst [vmem:[%s3 + $0x78] sm:$0xff] %v2305
  %2328 = vst [vmem:[%s3 + $0x80] sm:$0xff] %v2306
  %2329 = vst [vmem:[%s3 + $0x88] sm:$0xff] %v2307
  %2330 = vst [vmem:[%s3 + $0x90] sm:$0xff] %v2308
  %2331 = vst [vmem:[%s3 + $0x98] sm:$0xff] %v2309
  %2332 = vst [vmem:[%s3 + $0xa0] sm:$0xff] %v2310
  %2333 = vst [vmem:[%s3 + $0xa8] sm:$0xff] %v2311
  // Predicated region
  $region14: #{forward.4} parent=0 // pred_check
    _
  $region15: #{forward.4} parent=0 // pred_check_branch
    %2335 = sbr.rel (0) target = $region17
  $region16: #{forward.4} parent=0 // pred_region
    _
  $region17: #{forward.4} parent=0 // pred_fallthru
    _
  // Predicated region
  $region18: #{forward.4} parent=0 // pred_check
    _
  $region19: #{forward.4} parent=0 // pred_check_branch
    %2337 = sbr.rel (0) target = $region21
  $region20: #{forward.4} parent=0 // pred_region
    _
  $region21: #{forward.4} parent=0 // pred_fallthru
    _

// kernel: forward.5
$region0: #{forward.5}
  #allocation0 [shape = 'u32[]', space=smem, size = 0x4, offset = 0x4, fixed_abs, tag = 'smem constant byte address 0x4 - core index']
  #allocation1 [shape = 'u32[72,128]{1,0:T(1,128)}', space=vmem, size = 0x9000, scoped, tag = 'internal scratch']
  %s0 = inlined_call_operand.vmem [shape: bf16[96,512], index: 0, kind: input, shape index: {}]
  %s1 = inlined_call_operand.vmem [shape: bf16[512,128], index: 1, kind: input, shape index: {}]
  %s2 = inlined_call_operand.vmem [shape: f32[1,128], index: 2, kind: input, shape index: {}]
  %s3 = inlined_call_operand.vmem [shape: bf16[128,128], index: 3, kind: input, shape index: {}]
  %s4 = inlined_call_operand.vmem [shape: f32[1,128], index: 4, kind: input, shape index: {}]
  %s5 = inlined_call_operand.vmem [shape: bf16[128,128], index: 5, kind: input, shape index: {}]
  %s6 = inlined_call_operand.vmem [shape: f32[1,128], index: 6, kind: input, shape index: {}]
  %s7 = inlined_call_operand.vmem [shape: f32[96,128], index: 7, kind: output, shape index: {}]
  %s8 = sld [smem:[#allocation0]]
  $region38: #{forward.5} parent=0
    _
  %s10 = ssub.s32 1, %s8
  %s11 = scalar_select 0, %s10, %s8
  // Predicated region
  $region2: #{forward.5} parent=0 // pred_check
    _
  $region3: #{forward.5} parent=0 // pred_check_branch
    %13 = sbr.rel (0) target = $region5
  $region4: #{forward.5} parent=0 // pred_region
    _
  $region5: #{forward.5} parent=0 // pred_fallthru
    _
  // Predicated region
  $region6: #{forward.5} parent=0 // pred_check
    _
  $region7: #{forward.5} parent=0 // pred_check_branch
    %15 = sbr.rel (0) target = $region9
  $region8: #{forward.5} parent=0 // pred_region
    _
  $region9: #{forward.5} parent=0 // pred_fallthru
    _
  // Predicated region
  $region10: #{forward.5} parent=0 // pred_check
    _
  $region11: #{forward.5} parent=0 // pred_check_branch
    %17 = sbr.rel (0) target = $region13
  $region12: #{forward.5} parent=0 // pred_region
    _
  $region13: #{forward.5} parent=0 // pred_fallthru
    _
  // Predicated region
  $region14: #{forward.5} parent=0 // pred_check
    _
  $region15: #{forward.5} parent=0 // pred_check_branch
    %19 = sbr.rel (0) target = $region17
  $region16: #{forward.5} parent=0 // pred_region
    _
  $region17: #{forward.5} parent=0 // pred_fallthru
    _
  // Predicated region
  $region18: #{forward.5} parent=0 // pred_check
    _
  $region19: #{forward.5} parent=0 // pred_check_branch
    %21 = sbr.rel (0) target = $region21
  $region20: #{forward.5} parent=0 // pred_region
    _
  $region21: #{forward.5} parent=0 // pred_fallthru
    _
  // Predicated region
  $region22: #{forward.5} parent=0 // pred_check
    _
  $region23: #{forward.5} parent=0 // pred_check_branch
    %23 = sbr.rel (0) target = $region25
  $region24: #{forward.5} parent=0 // pred_region
    _
  $region25: #{forward.5} parent=0 // pred_fallthru
    _
  // Predicated region
  $region26: #{forward.5} parent=0 // pred_check
    _
  $region27: #{forward.5} parent=0 // pred_check_branch
    %25 = sbr.rel (0) target = $region29
  $region28: #{forward.5} parent=0 // pred_region
    _
  $region29: #{forward.5} parent=0 // pred_fallthru
    _
  %v26 = vld [vmem:[%s0] sm:$0xff]
  %v27 = vld [vmem:[%s0 + $0x8] sm:$0xff]
  %v28 = vld [vmem:[%s0 + $0x10] sm:$0xff]
  %v29 = vld [vmem:[%s0 + $0x18] sm:$0xff]
  %v30 = vld [vmem:[%s0 + $0x20] sm:$0xff]
  %v31 = vld [vmem:[%s0 + $0x28] sm:$0xff]
  %v32 = vld [vmem:[%s0 + $0x30] sm:$0xff]
  %v33 = vld [vmem:[%s0 + $0x38] sm:$0xff]
  %v34 = vld [vmem:[%s0 + $0x40] sm:$0xff]
  %v35 = vld [vmem:[%s0 + $0x48] sm:$0xff]
  %v36 = vld [vmem:[%s0 + $0x50] sm:$0xff]
  %v37 = vld [vmem:[%s0 + $0x58] sm:$0xff]
  %v38 = vld [vmem:[%s0 + $0x60] sm:$0xff]
  %v39 = vld [vmem:[%s0 + $0x68] sm:$0xff]
  %v40 = vld [vmem:[%s0 + $0x70] sm:$0xff]
  %v41 = vld [vmem:[%s0 + $0x78] sm:$0xff]
  %v42 = vld [vmem:[%s0 + $0x80] sm:$0xff]
  %v43 = vld [vmem:[%s0 + $0x88] sm:$0xff]
  %v44 = vld [vmem:[%s0 + $0x90] sm:$0xff]
  %v45 = vld [vmem:[%s0 + $0x98] sm:$0xff]
  %v46 = vld [vmem:[%s0 + $0xa0] sm:$0xff]
  %v47 = vld [vmem:[%s0 + $0xa8] sm:$0xff]
  %v48 = vld [vmem:[%s0 + $0xb0] sm:$0xff]
  %v49 = vld [vmem:[%s0 + $0xb8] sm:$0xff]
  %v50 = vld [vmem:[%s1] sm:$0xf]
  %v51 = vld [vmem:[%s1 + $0x4] sm:$0xf]
  %v52 = vld [vmem:[%s1 + $0x8] sm:$0xf]
  %v53 = vld [vmem:[%s1 + $0xc] sm:$0xf]
  %v54 = vld [vmem:[%s1 + $0x10] sm:$0xf]
  %v55 = vld [vmem:[%s1 + $0x14] sm:$0xf]
  %v56 = vld [vmem:[%s1 + $0x18] sm:$0xf]
  %v57 = vld [vmem:[%s1 + $0x1c] sm:$0xf]
  %v58 = vld [vmem:[%s1 + $0x20] sm:$0xf]
  %v59 = vld [vmem:[%s1 + $0x24] sm:$0xf]
  %v60 = vld [vmem:[%s1 + $0x28] sm:$0xf]
  %v61 = vld [vmem:[%s1 + $0x2c] sm:$0xf]
  %v62 = vld [vmem:[%s1 + $0x30] sm:$0xf]
  %v63 = vld [vmem:[%s1 + $0x34] sm:$0xf]
  %v64 = vld [vmem:[%s1 + $0x38] sm:$0xf]
  %v65 = vld [vmem:[%s1 + $0x3c] sm:$0xf]
  %v66 = vld [vmem:[%s1 + $0x40] sm:$0xf]
  %v67 = vld [vmem:[%s1 + $0x44] sm:$0xf]
  %v68 = vld [vmem:[%s1 + $0x48] sm:$0xf]
  %v69 = vld [vmem:[%s1 + $0x4c] sm:$0xf]
  %v70 = vld [vmem:[%s1 + $0x50] sm:$0xf]
  %v71 = vld [vmem:[%s1 + $0x54] sm:$0xf]
  %v72 = vld [vmem:[%s1 + $0x58] sm:$0xf]
  %v73 = vld [vmem:[%s1 + $0x5c] sm:$0xf]
  %v74 = vld [vmem:[%s1 + $0x60] sm:$0xf]
  %v75 = vld [vmem:[%s1 + $0x64] sm:$0xf]
  %v76 = vld [vmem:[%s1 + $0x68] sm:$0xf]
  %v77 = vld [vmem:[%s1 + $0x6c] sm:$0xf]
  %v78 = vld [vmem:[%s1 + $0x70] sm:$0xf]
  %v79 = vld [vmem:[%s1 + $0x74] sm:$0xf]
  %v80 = vld [vmem:[%s1 + $0x78] sm:$0xf]
  %v81 = vld [vmem:[%s1 + $0x7c] sm:$0xf]
  %v82 = vld [vmem:[%s1 + $0x80] sm:$0xf]
  %v83 = vld [vmem:[%s1 + $0x84] sm:$0xf]
  %v84 = vld [vmem:[%s1 + $0x88] sm:$0xf]
  %v85 = vld [vmem:[%s1 + $0x8c] sm:$0xf]
  %v86 = vld [vmem:[%s1 + $0x90] sm:$0xf]
  %v87 = vld [vmem:[%s1 + $0x94] sm:$0xf]
  %v88 = vld [vmem:[%s1 + $0x98] sm:$0xf]
  %v89 = vld [vmem:[%s1 + $0x9c] sm:$0xf]
  %v90 = vld [vmem:[%s1 + $0xa0] sm:$0xf]
  %v91 = vld [vmem:[%s1 + $0xa4] sm:$0xf]
  %v92 = vld [vmem:[%s1 + $0xa8] sm:$0xf]
  %v93 = vld [vmem:[%s1 + $0xac] sm:$0xf]
  %v94 = vld [vmem:[%s1 + $0xb0] sm:$0xf]
  %v95 = vld [vmem:[%s1 + $0xb4] sm:$0xf]
  %v96 = vld [vmem:[%s1 + $0xb8] sm:$0xf]
  %v97 = vld [vmem:[%s1 + $0xbc] sm:$0xf]
  %v98 = vld [vmem:[%s1 + $0xc0] sm:$0xf]
  %v99 = vld [vmem:[%s1 + $0xc4] sm:$0xf]
  %v100 = vld [vmem:[%s1 + $0xc8] sm:$0xf]
  %v101 = vld [vmem:[%s1 + $0xcc] sm:$0xf]
  %v102 = vld [vmem:[%s1 + $0xd0] sm:$0xf]
  %v103 = vld [vmem:[%s1 + $0xd4] sm:$0xf]
  %v104 = vld [vmem:[%s1 + $0xd8] sm:$0xf]
  %v105 = vld [vmem:[%s1 + $0xdc] sm:$0xf]
  %v106 = vld [vmem:[%s1 + $0xe0] sm:$0xf]
  %v107 = vld [vmem:[%s1 + $0xe4] sm:$0xf]
  %v108 = vld [vmem:[%s1 + $0xe8] sm:$0xf]
  %v109 = vld [vmem:[%s1 + $0xec] sm:$0xf]
  %v110 = vld [vmem:[%s1 + $0xf0] sm:$0xf]
  %v111 = vld [vmem:[%s1 + $0xf4] sm:$0xf]
  %v112 = vld [vmem:[%s1 + $0xf8] sm:$0xf]
  %v113 = vld [vmem:[%s1 + $0xfc] sm:$0xf]
  %v114 = vld [vmem:[%s2] sm:$0x1]
  %v116 = vperm.slane %v114, 0
  %v142 = vunpack.c.l.b16 %v26
  %v143 = vunpack.c.h.b16 %v26
  %v144 = vunpack.c.l.b16 %v27
  %v145 = vunpack.c.h.b16 %v27
  %v146 = vunpack.c.l.b16 %v28
  %v147 = vunpack.c.h.b16 %v28
  %v148 = vunpack.c.l.b16 %v29
  %v149 = vunpack.c.h.b16 %v29
  %v150 = vunpack.c.l.b16 %v30
  %v151 = vunpack.c.h.b16 %v30
  %v152 = vunpack.c.l.b16 %v31
  %v153 = vunpack.c.h.b16 %v31
  %v154 = vunpack.c.l.b16 %v32
  %v155 = vunpack.c.h.b16 %v32
  %v156 = vunpack.c.l.b16 %v33
  %v157 = vunpack.c.h.b16 %v33
  %v158 = vunpack.c.l.b16 %v34
  %v159 = vunpack.c.h.b16 %v34
  %v160 = vunpack.c.l.b16 %v35
  %v161 = vunpack.c.h.b16 %v35
  %v162 = vunpack.c.l.b16 %v36
  %v163 = vunpack.c.h.b16 %v36
  %v164 = vunpack.c.l.b16 %v37
  %v165 = vunpack.c.h.b16 %v37
  %v166 = vunpack.c.l.b16 %v38
  %v167 = vunpack.c.h.b16 %v38
  %v168 = vunpack.c.l.b16 %v39
  %v169 = vunpack.c.h.b16 %v39
  %v170 = vunpack.c.l.b16 %v40
  %v171 = vunpack.c.h.b16 %v40
  %v172 = vunpack.c.l.b16 %v41
  %v173 = vunpack.c.h.b16 %v41
  %v174 = vunpack.c.l.b16 %v42
  %v175 = vunpack.c.h.b16 %v42
  %v176 = vunpack.c.l.b16 %v43
  %v177 = vunpack.c.h.b16 %v43
  %v178 = vunpack.c.l.b16 %v44
  %v179 = vunpack.c.h.b16 %v44
  %v180 = vunpack.c.l.b16 %v45
  %v181 = vunpack.c.h.b16 %v45
  %v182 = vunpack.c.l.b16 %v46
  %v183 = vunpack.c.h.b16 %v46
  %v184 = vunpack.c.l.b16 %v47
  %v185 = vunpack.c.h.b16 %v47
  %v186 = vunpack.c.l.b16 %v48
  %v187 = vunpack.c.h.b16 %v48
  %v188 = vunpack.c.l.b16 %v49
  %v189 = vunpack.c.h.b16 %v49
  %v190 = vpack.c.b16 %v146, %v142
  %v191 = vpack.c.b16 %v147, %v143
  %v192 = vpack.c.b16 %v148, %v144
  %v193 = vpack.c.b16 %v149, %v145
  %v194 = vpack.c.b16 %v154, %v150
  %v195 = vpack.c.b16 %v155, %v151
  %v196 = vpack.c.b16 %v156, %v152
  %v197 = vpack.c.b16 %v157, %v153
  %v198 = vpack.c.b16 %v162, %v158
  %v199 = vpack.c.b16 %v163, %v159
  %v200 = vpack.c.b16 %v164, %v160
  %v201 = vpack.c.b16 %v165, %v161
  %v202 = vpack.c.b16 %v170, %v166
  %v203 = vpack.c.b16 %v171, %v167
  %v204 = vpack.c.b16 %v172, %v168
  %v205 = vpack.c.b16 %v173, %v169
  %v206 = vpack.c.b16 %v178, %v174
  %v207 = vpack.c.b16 %v179, %v175
  %v208 = vpack.c.b16 %v180, %v176
  %v209 = vpack.c.b16 %v181, %v177
  %v210 = vpack.c.b16 %v186, %v182
  %v211 = vpack.c.b16 %v187, %v183
  %v212 = vpack.c.b16 %v188, %v184
  %v213 = vpack.c.b16 %v189, %v185
  %v302 = vunpack.c.l.b16 %v50
  %v303 = vunpack.c.l.b16 %v51
  %v304 = vunpack.c.l.b16 %v52
  %v305 = vunpack.c.l.b16 %v53
  %v306 = vunpack.c.l.b16 %v54
  %v307 = vunpack.c.l.b16 %v55
  %v308 = vunpack.c.l.b16 %v56
  %v309 = vunpack.c.l.b16 %v57
  %v310 = vunpack.c.l.b16 %v58
  %v311 = vunpack.c.l.b16 %v59
  %v312 = vunpack.c.l.b16 %v60
  %v313 = vunpack.c.l.b16 %v61
  %v314 = vunpack.c.l.b16 %v62
  %v315 = vunpack.c.l.b16 %v63
  %v316 = vunpack.c.l.b16 %v64
  %v317 = vunpack.c.l.b16 %v65
  %v318 = vunpack.c.l.b16 %v66
  %v319 = vunpack.c.l.b16 %v67
  %v320 = vunpack.c.l.b16 %v68
  %v321 = vunpack.c.l.b16 %v69
  %v322 = vunpack.c.l.b16 %v70
  %v323 = vunpack.c.l.b16 %v71
  %v324 = vunpack.c.l.b16 %v72
  %v325 = vunpack.c.l.b16 %v73
  %v326 = vunpack.c.l.b16 %v74
  %v327 = vunpack.c.l.b16 %v75
  %v328 = vunpack.c.l.b16 %v76
  %v329 = vunpack.c.l.b16 %v77
  %v330 = vunpack.c.l.b16 %v78
  %v331 = vunpack.c.l.b16 %v79
  %v332 = vunpack.c.l.b16 %v80
  %v333 = vunpack.c.l.b16 %v81
  %v334 = vunpack.c.l.b16 %v82
  %v335 = vunpack.c.l.b16 %v83
  %v336 = vunpack.c.l.b16 %v84
  %v337 = vunpack.c.l.b16 %v85
  %v338 = vunpack.c.l.b16 %v86
  %v339 = vunpack.c.l.b16 %v87
  %v340 = vunpack.c.l.b16 %v88
  %v341 = vunpack.c.l.b16 %v89
  %v342 = vunpack.c.l.b16 %v90
  %v343 = vunpack.c.l.b16 %v91
  %v344 = vunpack.c.l.b16 %v92
  %v345 = vunpack.c.l.b16 %v93
  %v346 = vunpack.c.l.b16 %v94
  %v347 = vunpack.c.l.b16 %v95
  %v348 = vunpack.c.l.b16 %v96
  %v349 = vunpack.c.l.b16 %v97
  %v350 = vunpack.c.l.b16 %v98
  %v351 = vunpack.c.l.b16 %v99
  %v352 = vunpack.c.l.b16 %v100
  %v353 = vunpack.c.l.b16 %v101
  %v354 = vunpack.c.l.b16 %v102
  %v355 = vunpack.c.l.b16 %v103
  %v356 = vunpack.c.l.b16 %v104
  %v357 = vunpack.c.l.b16 %v105
  %v358 = vunpack.c.l.b16 %v106
  %v359 = vunpack.c.l.b16 %v107
  %v360 = vunpack.c.l.b16 %v108
  %v361 = vunpack.c.l.b16 %v109
  %v362 = vunpack.c.l.b16 %v110
  %v363 = vunpack.c.l.b16 %v111
  %v364 = vunpack.c.l.b16 %v112
  %v365 = vunpack.c.l.b16 %v113
  %v366 = vpack.c.b16 %v303, %v302
  %v367 = vpack.c.b16 %v305, %v304
  %v368 = vpack.c.b16 %v307, %v306
  %v369 = vpack.c.b16 %v309, %v308
  %v370 = vpack.c.b16 %v311, %v310
  %v371 = vpack.c.b16 %v313, %v312
  %v372 = vpack.c.b16 %v315, %v314
  %v373 = vpack.c.b16 %v317, %v316
  %v374 = vpack.c.b16 %v319, %v318
  %v375 = vpack.c.b16 %v321, %v320
  %v376 = vpack.c.b16 %v323, %v322
  %v377 = vpack.c.b16 %v325, %v324
  %v378 = vpack.c.b16 %v327, %v326
  %v379 = vpack.c.b16 %v329, %v328
  %v380 = vpack.c.b16 %v331, %v330
  %v381 = vpack.c.b16 %v333, %v332
  %v382 = vpack.c.b16 %v335, %v334
  %v383 = vpack.c.b16 %v337, %v336
  %v384 = vpack.c.b16 %v339, %v338
  %v385 = vpack.c.b16 %v341, %v340
  %v386 = vpack.c.b16 %v343, %v342
  %v387 = vpack.c.b16 %v345, %v344
  %v388 = vpack.c.b16 %v347, %v346
  %v389 = vpack.c.b16 %v349, %v348
  %v390 = vpack.c.b16 %v351, %v350
  %v391 = vpack.c.b16 %v353, %v352
  %v392 = vpack.c.b16 %v355, %v354
  %v393 = vpack.c.b16 %v357, %v356
  %v394 = vpack.c.b16 %v359, %v358
  %v395 = vpack.c.b16 %v361, %v360
  %v396 = vpack.c.b16 %v363, %v362
  %v397 = vpack.c.b16 %v365, %v364
  %430 = vmatpush.bf16.msra.mxu0 %v373
  %431 = vmatpush.bf16.msra.mxu0 %v372
  %432 = vmatpush.bf16.msra.mxu0 %v371
  %433 = vmatpush.bf16.msra.mxu0 %v370
  %434 = vmatpush.bf16.msra.mxu0 %v369
  %435 = vmatpush.bf16.msra.mxu0 %v368
  %436 = vmatpush.bf16.msra.mxu0 %v367
  %437 = vmatpush.bf16.msra.mxu0 %v366
  %438 = vmatmul.bf16.gmra.mxu0 %v190
  %v439 = vpop.f32.mrf.mxu0
  %v440 = vadd.f32 %v116, %v439
  %v441 = vpop.f32.mrf.mxu0
  %v442 = vadd.f32 %v116, %v441
  %443 = vmatmul.bf16.gmra.mxu0 %v194
  %v444 = vpop.f32.mrf.mxu0
  %v445 = vadd.f32 %v116, %v444
  %v446 = vpop.f32.mrf.mxu0
  %v447 = vadd.f32 %v116, %v446
  %448 = vmatmul.bf16.gmra.mxu0 %v198
  %v449 = vpop.f32.mrf.mxu0
  %v450 = vadd.f32 %v116, %v449
  %v451 = vpop.f32.mrf.mxu0
  %v452 = vadd.f32 %v116, %v451
  %453 = vmatmul.bf16.gmra.mxu0 %v202
  %v454 = vpop.f32.mrf.mxu0
  %v455 = vadd.f32 %v116, %v454
  %v456 = vpop.f32.mrf.mxu0
  %v457 = vadd.f32 %v116, %v456
  %458 = vmatmul.bf16.gmra.mxu0 %v206
  %v459 = vpop.f32.mrf.mxu0
  %v460 = vadd.f32 %v116, %v459
  %v461 = vpop.f32.mrf.mxu0
  %v462 = vadd.f32 %v116, %v461
  %463 = vmatmul.bf16.gmra.mxu0 %v210
  %v464 = vpop.f32.mrf.mxu0
  %v465 = vadd.f32 %v116, %v464
  %v466 = vpop.f32.mrf.mxu0
  %v467 = vadd.f32 %v116, %v466
  %468 = vdwg.mxu0
  %469 = vmatpush.bf16.msra.mxu0 %v381
  %470 = vmatpush.bf16.msra.mxu0 %v380
  %471 = vmatpush.bf16.msra.mxu0 %v379
  %472 = vmatpush.bf16.msra.mxu0 %v378
  %473 = vmatpush.bf16.msra.mxu0 %v377
  %474 = vmatpush.bf16.msra.mxu0 %v376
  %475 = vmatpush.bf16.msra.mxu0 %v375
  %476 = vmatpush.bf16.msra.mxu0 %v374
  %477 = vmatmul.bf16.gmra.mxu0 %v191
  %v478 = vpop.f32.mrf.mxu0
  %v479 = vadd.f32 %v440, %v478
  %v480 = vpop.f32.mrf.mxu0
  %v481 = vadd.f32 %v442, %v480
  %482 = vmatmul.bf16.gmra.mxu0 %v195
  %v483 = vpop.f32.mrf.mxu0
  %v484 = vadd.f32 %v445, %v483
  %v485 = vpop.f32.mrf.mxu0
  %v486 = vadd.f32 %v447, %v485
  %487 = vmatmul.bf16.gmra.mxu0 %v199
  %v488 = vpop.f32.mrf.mxu0
  %v489 = vadd.f32 %v450, %v488
  %v490 = vpop.f32.mrf.mxu0
  %v491 = vadd.f32 %v452, %v490
  %492 = vmatmul.bf16.gmra.mxu0 %v203
  %v493 = vpop.f32.mrf.mxu0
  %v494 = vadd.f32 %v455, %v493
  %v495 = vpop.f32.mrf.mxu0
  %v496 = vadd.f32 %v457, %v495
  %497 = vmatmul.bf16.gmra.mxu0 %v207
  %v498 = vpop.f32.mrf.mxu0
  %v499 = vadd.f32 %v460, %v498
  %v500 = vpop.f32.mrf.mxu0
  %v501 = vadd.f32 %v462, %v500
  %502 = vmatmul.bf16.gmra.mxu0 %v211
  %v503 = vpop.f32.mrf.mxu0
  %v504 = vadd.f32 %v465, %v503
  %v505 = vpop.f32.mrf.mxu0
  %v506 = vadd.f32 %v467, %v505
  %507 = vdwg.mxu0
  %508 = vmatpush.bf16.msra.mxu0 %v389
  %509 = vmatpush.bf16.msra.mxu0 %v388
  %510 = vmatpush.bf16.msra.mxu0 %v387
  %511 = vmatpush.bf16.msra.mxu0 %v386
  %512 = vmatpush.bf16.msra.mxu0 %v385
  %513 = vmatpush.bf16.msra.mxu0 %v384
  %514 = vmatpush.bf16.msra.mxu0 %v383
  %515 = vmatpush.bf16.msra.mxu0 %v382
  %516 = vmatmul.bf16.gmra.mxu0 %v192
  %v517 = vpop.f32.mrf.mxu0
  %v518 = vadd.f32 %v479, %v517
  %v519 = vpop.f32.mrf.mxu0
  %v520 = vadd.f32 %v481, %v519
  %521 = vmatmul.bf16.gmra.mxu0 %v196
  %v522 = vpop.f32.mrf.mxu0
  %v523 = vadd.f32 %v484, %v522
  %v524 = vpop.f32.mrf.mxu0
  %v525 = vadd.f32 %v486, %v524
  %526 = vmatmul.bf16.gmra.mxu0 %v200
  %v527 = vpop.f32.mrf.mxu0
  %v528 = vadd.f32 %v489, %v527
  %v529 = vpop.f32.mrf.mxu0
  %v530 = vadd.f32 %v491, %v529
  %531 = vmatmul.bf16.gmra.mxu0 %v204
  %v532 = vpop.f32.mrf.mxu0
  %v533 = vadd.f32 %v494, %v532
  %v534 = vpop.f32.mrf.mxu0
  %v535 = vadd.f32 %v496, %v534
  %536 = vmatmul.bf16.gmra.mxu0 %v208
  %v537 = vpop.f32.mrf.mxu0
  %v538 = vadd.f32 %v499, %v537
  %v539 = vpop.f32.mrf.mxu0
  %v540 = vadd.f32 %v501, %v539
  %541 = vmatmul.bf16.gmra.mxu0 %v212
  %v542 = vpop.f32.mrf.mxu0
  %v543 = vadd.f32 %v504, %v542
  %v544 = vpop.f32.mrf.mxu0
  %v545 = vadd.f32 %v506, %v544
  %546 = vdwg.mxu0
  %547 = vmatpush.bf16.msra.mxu0 %v397
  %548 = vmatpush.bf16.msra.mxu0 %v396
  %549 = vmatpush.bf16.msra.mxu0 %v395
  %550 = vmatpush.bf16.msra.mxu0 %v394
  %551 = vmatpush.bf16.msra.mxu0 %v393
  %552 = vmatpush.bf16.msra.mxu0 %v392
  %553 = vmatpush.bf16.msra.mxu0 %v391
  %554 = vmatpush.bf16.msra.mxu0 %v390
  %555 = vmatmul.bf16.gmra.mxu0 %v193
  %v556 = vpop.f32.mrf.mxu0
  %v557 = vadd.f32 %v518, %v556
  %v558 = vpop.f32.mrf.mxu0
  %v559 = vadd.f32 %v520, %v558
  %560 = vmatmul.bf16.gmra.mxu0 %v197
  %v561 = vpop.f32.mrf.mxu0
  %v562 = vadd.f32 %v523, %v561
  %v563 = vpop.f32.mrf.mxu0
  %v564 = vadd.f32 %v525, %v563
  %565 = vmatmul.bf16.gmra.mxu0 %v201
  %v566 = vpop.f32.mrf.mxu0
  %v567 = vadd.f32 %v528, %v566
  %v568 = vpop.f32.mrf.mxu0
  %v569 = vadd.f32 %v530, %v568
  %570 = vmatmul.bf16.gmra.mxu0 %v205
  %v571 = vpop.f32.mrf.mxu0
  %v572 = vadd.f32 %v533, %v571
  %v573 = vpop.f32.mrf.mxu0
  %v574 = vadd.f32 %v535, %v573
  %575 = vmatmul.bf16.gmra.mxu0 %v209
  %v576 = vpop.f32.mrf.mxu0
  %v577 = vadd.f32 %v538, %v576
  %v578 = vpop.f32.mrf.mxu0
  %v579 = vadd.f32 %v540, %v578
  %580 = vmatmul.bf16.gmra.mxu0 %v213
  %v581 = vpop.f32.mrf.mxu0
  %v582 = vadd.f32 %v543, %v581
  %v583 = vpop.f32.mrf.mxu0
  %v584 = vadd.f32 %v545, %v583
  %585 = vdwg.mxu0
  %v586 = vmax.f32 %v557, 0.0
  %v587 = vmax.f32 %v559, 0.0
  %v588 = vmax.f32 %v562, 0.0
  %v589 = vmax.f32 %v564, 0.0
  %v590 = vmax.f32 %v567, 0.0
  %v591 = vmax.f32 %v569, 0.0
  %v592 = vmax.f32 %v572, 0.0
  %v593 = vmax.f32 %v574, 0.0
  %v594 = vmax.f32 %v577, 0.0
  %v595 = vmax.f32 %v579, 0.0
  %v596 = vmax.f32 %v582, 0.0
  %v597 = vmax.f32 %v584, 0.0
  %v598 = vpack.c.bf16 %v587, %v586
  %v599 = vpack.c.bf16 %v589, %v588
  %v600 = vpack.c.bf16 %v591, %v590
  %v601 = vpack.c.bf16 %v593, %v592
  %v602 = vpack.c.bf16 %v595, %v594
  %v603 = vpack.c.bf16 %v597, %v596
  %v604 = vld [vmem:[%s3] sm:$0xf]
  %v605 = vld [vmem:[%s3 + $0x4] sm:$0xf]
  %v606 = vld [vmem:[%s3 + $0x8] sm:$0xf]
  %v607 = vld [vmem:[%s3 + $0xc] sm:$0xf]
  %v608 = vld [vmem:[%s3 + $0x10] sm:$0xf]
  %v609 = vld [vmem:[%s3 + $0x14] sm:$0xf]
  %v610 = vld [vmem:[%s3 + $0x18] sm:$0xf]
  %v611 = vld [vmem:[%s3 + $0x1c] sm:$0xf]
  %v612 = vld [vmem:[%s3 + $0x20] sm:$0xf]
  %v613 = vld [vmem:[%s3 + $0x24] sm:$0xf]
  %v614 = vld [vmem:[%s3 + $0x28] sm:$0xf]
  %v615 = vld [vmem:[%s3 + $0x2c] sm:$0xf]
  %v616 = vld [vmem:[%s3 + $0x30] sm:$0xf]
  %v617 = vld [vmem:[%s3 + $0x34] sm:$0xf]
  %v618 = vld [vmem:[%s3 + $0x38] sm:$0xf]
  %v619 = vld [vmem:[%s3 + $0x3c] sm:$0xf]
  %v620 = vld [vmem:[%s4] sm:$0x1]
  %v622 = vperm.slane %v620, 0
  %v640 = vunpack.c.l.b16 %v604
  %v641 = vunpack.c.l.b16 %v605
  %v642 = vunpack.c.l.b16 %v606
  %v643 = vunpack.c.l.b16 %v607
  %v644 = vunpack.c.l.b16 %v608
  %v645 = vunpack.c.l.b16 %v609
  %v646 = vunpack.c.l.b16 %v610
  %v647 = vunpack.c.l.b16 %v611
  %v648 = vunpack.c.l.b16 %v612
  %v649 = vunpack.c.l.b16 %v613
  %v650 = vunpack.c.l.b16 %v614
  %v651 = vunpack.c.l.b16 %v615
  %v652 = vunpack.c.l.b16 %v616
  %v653 = vunpack.c.l.b16 %v617
  %v654 = vunpack.c.l.b16 %v618
  %v655 = vunpack.c.l.b16 %v619
  %v656 = vpack.c.b16 %v641, %v640
  %v657 = vpack.c.b16 %v643, %v642
  %v658 = vpack.c.b16 %v645, %v644
  %v659 = vpack.c.b16 %v647, %v646
  %v660 = vpack.c.b16 %v649, %v648
  %v661 = vpack.c.b16 %v651, %v650
  %v662 = vpack.c.b16 %v653, %v652
  %v663 = vpack.c.b16 %v655, %v654
  %672 = vmatpush.bf16.msra.mxu0 %v663
  %673 = vmatpush.bf16.msra.mxu0 %v662
  %674 = vmatpush.bf16.msra.mxu0 %v661
  %675 = vmatpush.bf16.msra.mxu0 %v660
  %676 = vmatpush.bf16.msra.mxu0 %v659
  %677 = vmatpush.bf16.msra.mxu0 %v658
  %678 = vmatpush.bf16.msra.mxu0 %v657
  %679 = vmatpush.bf16.msra.mxu0 %v656
  %680 = vmatmul.bf16.gmra.mxu0 %v598
  %v681 = vpop.f32.mrf.mxu0
  %v682 = vadd.f32 %v622, %v681
  %v683 = vpop.f32.mrf.mxu0
  %v684 = vadd.f32 %v622, %v683
  %685 = vmatmul.bf16.gmra.mxu0 %v599
  %v686 = vpop.f32.mrf.mxu0
  %v687 = vadd.f32 %v622, %v686
  %v688 = vpop.f32.mrf.mxu0
  %v689 = vadd.f32 %v622, %v688
  %690 = vmatmul.bf16.gmra.mxu0 %v600
  %v691 = vpop.f32.mrf.mxu0
  %v692 = vadd.f32 %v622, %v691
  %v693 = vpop.f32.mrf.mxu0
  %v694 = vadd.f32 %v622, %v693
  %695 = vmatmul.bf16.gmra.mxu0 %v601
  %v696 = vpop.f32.mrf.mxu0
  %v697 = vadd.f32 %v622, %v696
  %v698 = vpop.f32.mrf.mxu0
  %v699 = vadd.f32 %v622, %v698
  %700 = vmatmul.bf16.gmra.mxu0 %v602
  %v701 = vpop.f32.mrf.mxu0
  %v702 = vadd.f32 %v622, %v701
  %v703 = vpop.f32.mrf.mxu0
  %v704 = vadd.f32 %v622, %v703
  %705 = vmatmul.bf16.gmra.mxu0 %v603
  %v706 = vpop.f32.mrf.mxu0
  %v707 = vadd.f32 %v622, %v706
  %v708 = vpop.f32.mrf.mxu0
  %v709 = vadd.f32 %v622, %v708
  %710 = vdwg.mxu0
  %v711 = vmax.f32 %v682, 0.0
  %v712 = vmax.f32 %v684, 0.0
  %v713 = vmax.f32 %v687, 0.0
  %v714 = vmax.f32 %v689, 0.0
  %v715 = vmax.f32 %v692, 0.0
  %v716 = vmax.f32 %v694, 0.0
  %v717 = vmax.f32 %v697, 0.0
  %v718 = vmax.f32 %v699, 0.0
  %v719 = vmax.f32 %v702, 0.0
  %v720 = vmax.f32 %v704, 0.0
  %v721 = vmax.f32 %v707, 0.0
  %v722 = vmax.f32 %v709, 0.0
  %v723 = vpack.c.bf16 %v712, %v711
  %v724 = vpack.c.bf16 %v714, %v713
  %v725 = vpack.c.bf16 %v716, %v715
  %v726 = vpack.c.bf16 %v718, %v717
  %v727 = vpack.c.bf16 %v720, %v719
  %v728 = vpack.c.bf16 %v722, %v721
  %v729 = vld [vmem:[%s5] sm:$0xf]
  %v730 = vld [vmem:[%s5 + $0x4] sm:$0xf]
  %v731 = vld [vmem:[%s5 + $0x8] sm:$0xf]
  %v732 = vld [vmem:[%s5 + $0xc] sm:$0xf]
  %v733 = vld [vmem:[%s5 + $0x10] sm:$0xf]
  %v734 = vld [vmem:[%s5 + $0x14] sm:$0xf]
  %v735 = vld [vmem:[%s5 + $0x18] sm:$0xf]
  %v736 = vld [vmem:[%s5 + $0x1c] sm:$0xf]
  %v737 = vld [vmem:[%s5 + $0x20] sm:$0xf]
  %v738 = vld [vmem:[%s5 + $0x24] sm:$0xf]
  %v739 = vld [vmem:[%s5 + $0x28] sm:$0xf]
  %v740 = vld [vmem:[%s5 + $0x2c] sm:$0xf]
  %v741 = vld [vmem:[%s5 + $0x30] sm:$0xf]
  %v742 = vld [vmem:[%s5 + $0x34] sm:$0xf]
  %v743 = vld [vmem:[%s5 + $0x38] sm:$0xf]
  %v744 = vld [vmem:[%s5 + $0x3c] sm:$0xf]
  %v745 = vld [vmem:[%s6] sm:$0x1]
  %v747 = vperm.slane %v745, 0
  %v765 = vunpack.c.l.b16 %v729
  %v766 = vunpack.c.l.b16 %v730
  %v767 = vunpack.c.l.b16 %v731
  %v768 = vunpack.c.l.b16 %v732
  %v769 = vunpack.c.l.b16 %v733
  %v770 = vunpack.c.l.b16 %v734
  %v771 = vunpack.c.l.b16 %v735
  %v772 = vunpack.c.l.b16 %v736
  %v773 = vunpack.c.l.b16 %v737
  %v774 = vunpack.c.l.b16 %v738
  %v775 = vunpack.c.l.b16 %v739
  %v776 = vunpack.c.l.b16 %v740
  %v777 = vunpack.c.l.b16 %v741
  %v778 = vunpack.c.l.b16 %v742
  %v779 = vunpack.c.l.b16 %v743
  %v780 = vunpack.c.l.b16 %v744
  %v781 = vpack.c.b16 %v766, %v765
  %v782 = vpack.c.b16 %v768, %v767
  %v783 = vpack.c.b16 %v770, %v769
  %v784 = vpack.c.b16 %v772, %v771
  %v785 = vpack.c.b16 %v774, %v773
  %v786 = vpack.c.b16 %v776, %v775
  %v787 = vpack.c.b16 %v778, %v777
  %v788 = vpack.c.b16 %v780, %v779
  %797 = vmatpush.bf16.msra.mxu0 %v788
  %798 = vmatpush.bf16.msra.mxu0 %v787
  %799 = vmatpush.bf16.msra.mxu0 %v786
  %800 = vmatpush.bf16.msra.mxu0 %v785
  %801 = vmatpush.bf16.msra.mxu0 %v784
  %802 = vmatpush.bf16.msra.mxu0 %v783
  %803 = vmatpush.bf16.msra.mxu0 %v782
  %804 = vmatpush.bf16.msra.mxu0 %v781
  %805 = vmatmul.bf16.gmra.mxu0 %v723
  %v806 = vpop.f32.mrf.mxu0
  %v807 = vadd.f32 %v747, %v806
  %v808 = vpop.f32.mrf.mxu0
  %v809 = vadd.f32 %v747, %v808
  %810 = vmatmul.bf16.gmra.mxu0 %v724
  %v811 = vpop.f32.mrf.mxu0
  %v812 = vadd.f32 %v747, %v811
  %v813 = vpop.f32.mrf.mxu0
  %v814 = vadd.f32 %v747, %v813
  %815 = vmatmul.bf16.gmra.mxu0 %v725
  %v816 = vpop.f32.mrf.mxu0
  %v817 = vadd.f32 %v747, %v816
  %v818 = vpop.f32.mrf.mxu0
  %v819 = vadd.f32 %v747, %v818
  %820 = vmatmul.bf16.gmra.mxu0 %v726
  %v821 = vpop.f32.mrf.mxu0
  %v822 = vadd.f32 %v747, %v821
  %v823 = vpop.f32.mrf.mxu0
  %v824 = vadd.f32 %v747, %v823
  %825 = vmatmul.bf16.gmra.mxu0 %v727
  %v826 = vpop.f32.mrf.mxu0
  %v827 = vadd.f32 %v747, %v826
  %v828 = vpop.f32.mrf.mxu0
  %v829 = vadd.f32 %v747, %v828
  %830 = vmatmul.bf16.gmra.mxu0 %v728
  %v831 = vpop.f32.mrf.mxu0
  %v832 = vadd.f32 %v747, %v831
  %v833 = vpop.f32.mrf.mxu0
  %v834 = vadd.f32 %v747, %v833
  %835 = vdwg.mxu0
  %836 = vst [vmem:[%s7] sm:$0xff] %v807
  %837 = vst [vmem:[%s7 + $0x8] sm:$0xff] %v809
  %838 = vst [vmem:[%s7 + $0x10] sm:$0xff] %v812
  %839 = vst [vmem:[%s7 + $0x18] sm:$0xff] %v814
  %840 = vst [vmem:[%s7 + $0x20] sm:$0xff] %v817
  %841 = vst [vmem:[%s7 + $0x28] sm:$0xff] %v819
  %842 = vst [vmem:[%s7 + $0x30] sm:$0xff] %v822
  %843 = vst [vmem:[%s7 + $0x38] sm:$0xff] %v824
  %844 = vst [vmem:[%s7 + $0x40] sm:$0xff] %v827
  %845 = vst [vmem:[%s7 + $0x48] sm:$0xff] %v829
  %846 = vst [vmem:[%s7 + $0x50] sm:$0xff] %v832
  %847 = vst [vmem:[%s7 + $0x58] sm:$0xff] %v834
  // Predicated region
  $region30: #{forward.5} parent=0 // pred_check
    _
  $region31: #{forward.5} parent=0 // pred_check_branch
    %849 = sbr.rel (0) target = $region33
  $region32: #{forward.5} parent=0 // pred_region
    _
  $region33: #{forward.5} parent=0 // pred_fallthru
    _
  // Predicated region
  $region34: #{forward.5} parent=0 // pred_check
    _
  $region35: #{forward.5} parent=0 // pred_check_branch
    %851 = sbr.rel (0) target = $region37
  $region36: #{forward.5} parent=0 // pred_region
    _
  $region37: #{forward.5} parent=0 // pred_fallthru
    _

</llo_original>
